<compile_context>
chip_gen: v6e
topology: v6e:2x2x1
jax: 0.10.0
libtpu: 0.0.40
codegen_flags: <defaults>
</compile_context>

<pallas_src>
import numpy as np
import jax
import jax.numpy as jnp
from jax.experimental import pallas as pl
from jax.experimental.pallas import tpu as pltpu


# --------------------------- kernel 1: conv stack + max-pool ---------------------------

def conv_pool_kernel(x_ref, w1_ref, b1_ref, w2_ref, b2_ref, w3_ref, b3_ref, g_ref):
    # x_ref block: (Bt, k, N) in PyTorch NCW layout (one batch tile per grid step).
    blk_b, k_dim, n_pts = x_ref.shape

    # Relayout in VMEM: (Bt, k, N) -> (Bt, N, k) -> (Bt*N, k) so all conv matmuls
    # run with M = Bt*N rows (fills MXU rows, amortizes weight reads).
    x = jnp.swapaxes(x_ref[...], 1, 2).reshape(blk_b * n_pts, k_dim)      # f32

    # conv1 + bn1 + relu   (k -> 64); bf16 matmul inputs, f32 accumulation.
    h = jnp.dot(x.astype(jnp.bfloat16), w1_ref[...],
                preferred_element_type=jnp.float32)
    h = jnp.maximum(h + b1_ref[...], 0.0)                                 # f32 epilogue
    # conv2 + bn2 + relu   (64 -> 128)
    h = jnp.dot(h.astype(jnp.bfloat16), w2_ref[...],
                preferred_element_type=jnp.float32)
    h = jnp.maximum(h + b2_ref[...], 0.0)
    # conv3 + bn3 + relu   (128 -> 1024)
    h = jnp.dot(h.astype(jnp.bfloat16), w3_ref[...],
                preferred_element_type=jnp.float32)
    h = jnp.maximum(h + b3_ref[...], 0.0)                                 # (Bt*N, 1024)

    # torch.max(x, 2): per-batch max over the point dimension.
    g_ref[...] = jnp.max(h.reshape(blk_b, n_pts, -1), axis=1)             # (Bt, 1024)


# --------------------------- kernel 2: FC head (whole batch) ---------------------------

def fc_kernel(g_ref, w4_ref, b4_ref, w5_ref, b5_ref, w6_ref, b6_ref, o_ref):
    # g_ref: (B, 1024) -- all batch elements in one matmul M dimension.
    f = jnp.dot(g_ref[...].astype(jnp.bfloat16), w4_ref[...],
                preferred_element_type=jnp.float32)
    f = jnp.maximum(f + b4_ref[...], 0.0)                                 # fc1 + bn4 + relu
    f = jnp.dot(f.astype(jnp.bfloat16), w5_ref[...],
                preferred_element_type=jnp.float32)
    f = jnp.maximum(f + b5_ref[...], 0.0)                                 # fc2 + bn5 + relu
    o = jnp.dot(f.astype(jnp.bfloat16), w6_ref[...],
                preferred_element_type=jnp.float32)
    o_ref[...] = o + b6_ref[...]                                          # fc3 (no act.)


# ------------------------------------ wrapper ------------------------------------------

def _pick_batch_tile(B, cap=8):
    """Batch tile that satisfies the (8,128) block rule: Bt == B or Bt % 8 == 0."""
    if B <= cap:
        return B
    best = 0
    for c in range(8, cap + 1, 8):
        if B % c == 0:
            best = c
    return best if best else B


def stnkd_forward(x_bcn, params, *, batch_tile=None):
    """x_bcn: (B, k, N) float32, PyTorch NCW layout. Returns (B, k, k) float32."""
    B, K, N = x_bcn.shape
    w1, b1, w2, b2, w3, b3, w4, b4, w5, b5, w6, b6 = params

    bt = batch_tile or _pick_batch_tile(B)
    assert B % bt == 0

    def const_spec(p):
        nd = p.ndim
        return pl.BlockSpec(p.shape, lambda i, _nd=nd: (0,) * _nd)

    conv_params = [w1, b1, w2, b2, w3, b3]
    g = pl.pallas_call(
        conv_pool_kernel,
        out_shape=jax.ShapeDtypeStruct((B, 1024), jnp.float32),
        grid_spec=pltpu.PrefetchScalarGridSpec(
            num_scalar_prefetch=0,
            grid=(B // bt,),
            in_specs=[pl.BlockSpec((bt, K, N), lambda i: (i, 0, 0))]
                     + [const_spec(p) for p in conv_params],
            out_specs=pl.BlockSpec((bt, 1024), lambda i: (i, 0)),
        ),
        compiler_params=pltpu.CompilerParams(
            dimension_semantics=("parallel",),
        ),
    )(x_bcn, *conv_params)

    fc_params = [w4, b4, w5, b5, w6, b6]
    out = pl.pallas_call(
        fc_kernel,
        out_shape=jax.ShapeDtypeStruct((B, K * K), jnp.float32),
        grid_spec=pltpu.PrefetchScalarGridSpec(
            num_scalar_prefetch=0,
            grid=(1,),
            in_specs=[pl.BlockSpec((B, 1024), lambda i: (0, 0))]
                     + [const_spec(p) for p in fc_params],
            out_specs=pl.BlockSpec((B, K * K), lambda i: (0, 0)),
        ),
        compiler_params=pltpu.CompilerParams(
            dimension_semantics=("arbitrary",),
        ),
    )(g, *fc_params)

    return out.reshape(B, K, K)


# ---------------- parameter construction (deterministic, synthetic) ----------------

def _uniform(key, shape, fan_in):
    bound = 1.0 / np.sqrt(fan_in)
    return jax.random.uniform(key, shape, jnp.float32, -bound, bound)


def make_params(key, k):
    """Conv/fc weights stored as (Cin, Cout) bf16 with eval-mode BN folded in; f32 biases."""
    dims = [(k, 64), (64, 128), (128, 1024), (1024, 512), (512, 256), (256, k * k)]
    keys = jax.random.split(key, 6 * 2 + 5 * 4)
    ki = iter(range(len(keys)))

    raw = []
    for cin, cout in dims:
        w = _uniform(keys[next(ki)], (cin, cout), cin)        # == torch W.T (kernel_size 1)
        b = _uniform(keys[next(ki)], (cout,), cin)
        raw.append((w, b))

    # BN params for layers 1..5 (eval mode running stats); mildly randomized so the
    # fold is non-trivial.
    eps = 1e-5
    bns = []
    for cout in [64, 128, 1024, 512, 256]:
        gamma = 1.0 + 0.1 * jax.random.normal(keys[next(ki)], (cout,), jnp.float32)
        beta = 0.1 * jax.random.normal(keys[next(ki)], (cout,), jnp.float32)
        mean = 0.1 * jax.random.normal(keys[next(ki)], (cout,), jnp.float32)
        var = 1.0 + 0.1 * jax.random.uniform(keys[next(ki)], (cout,), jnp.float32)
        bns.append((gamma, beta, mean, var))

    folded = []
    for i, (w, b) in enumerate(raw):
        if i < 5:
            gamma, beta, mean, var = bns[i]
            scale = gamma / jnp.sqrt(var + eps)
            w = w * scale[None, :]
            b = (b - mean) * scale + beta
        folded.append(w.astype(jnp.bfloat16))                   # bf16 weights (MXU-native)
        folded.append(b.reshape(1, -1).astype(jnp.float32))     # f32 biases
    return folded


def stnkd_reference(x_bcn, params):
    """Plain-JAX reference with the same mixed-precision semantics (bf16 dot inputs,
    f32 accumulation, f32 bias/ReLU) and folded eval-mode BN."""
    w1, b1, w2, b2, w3, b3, w4, b4, w5, b5, w6, b6 = params

    def mm(a, w):
        return jax.lax.dot_general(
            a.astype(jnp.bfloat16), w,
            dimension_numbers=(((a.ndim - 1,), (0,)), ((), ())),
            preferred_element_type=jnp.float32)

    x = jnp.swapaxes(x_bcn, 1, 2)                               # (B, N, k)
    h = jnp.maximum(mm(x, w1) + b1, 0.0)
    h = jnp.maximum(mm(h, w2) + b2, 0.0)
    h = jnp.maximum(mm(h, w3) + b3, 0.0)
    g = jnp.max(h, axis=1)                                      # (B, 1024)
    f = jnp.maximum(mm(g, w4) + b4, 0.0)
    f = jnp.maximum(mm(f, w5) + b5, 0.0)
    o = mm(f, w6) + b6                                          # (B, k*k)
    K = w1.shape[0]
    return o.reshape(-1, K, K)


if __name__ == "__main__":
    B, K, N = 2, 16, 32                      # batch, feature-dim k, number of points
    key = jax.random.PRNGKey(0)
    kx, kp = jax.random.split(key)

    x = jax.random.normal(kx, (B, K, N), jnp.float32)   # PyTorch NCW input layout
    params = make_params(kp, K)

    fwd = jax.jit(stnkd_forward)
    out = jax.block_until_ready(fwd(x, params))

    ref = stnkd_reference(x, params)
    assert out.shape == (B, K, K), out.shape
    # bf16 matmul inputs on both paths -> compare with mixed-precision-appropriate tolerance
    np.testing.assert_allclose(np.asarray(out), np.asarray(ref), rtol=1e-2, atol=1e-2)

    print("KERNEL_OK")
</pallas_src>

<mosaic_0001>
module attributes {stable_mosaic.version = 11 : i64} {
  func.func @fc_kernel(%arg0: i32, %arg1: memref<2x1024xf32, #tpu.memory_space<vmem>>, %arg2: memref<1024x512xbf16, #tpu.memory_space<vmem>>, %arg3: memref<1x512xf32, #tpu.memory_space<vmem>>, %arg4: memref<512x256xbf16, #tpu.memory_space<vmem>>, %arg5: memref<1x256xf32, #tpu.memory_space<vmem>>, %arg6: memref<256x256xbf16, #tpu.memory_space<vmem>>, %arg7: memref<1x256xf32, #tpu.memory_space<vmem>>, %arg8: memref<2x256xf32, #tpu.memory_space<vmem>>) attributes {dimension_semantics = [#tpu.dimension_semantics<arbitrary>], iteration_bounds = array<i64: 1>, scalar_prefetch = 0 : i64, scratch_operands = 0 : i64, tpu.core_type = #tpu.core_type<tc>, window_params = [{pipeline_mode = #tpu.pipeline_mode<synchronous>, transform_indices = @transform_0, window_bounds = array<i64: 2, 1024>}, {pipeline_mode = #tpu.pipeline_mode<synchronous>, transform_indices = @transform_1, window_bounds = array<i64: 1024, 512>}, {pipeline_mode = #tpu.pipeline_mode<synchronous>, transform_indices = @transform_2, window_bounds = array<i64: 1, 512>}, {pipeline_mode = #tpu.pipeline_mode<synchronous>, transform_indices = @transform_3, window_bounds = array<i64: 512, 256>}, {pipeline_mode = #tpu.pipeline_mode<synchronous>, transform_indices = @transform_4, window_bounds = array<i64: 1, 256>}, {pipeline_mode = #tpu.pipeline_mode<synchronous>, transform_indices = @transform_5, window_bounds = array<i64: 256, 256>}, {pipeline_mode = #tpu.pipeline_mode<synchronous>, transform_indices = @transform_6, window_bounds = array<i64: 1, 256>}, {pipeline_mode = #tpu.pipeline_mode<synchronous>, transform_indices = @transform_7, window_bounds = array<i64: 2, 256>}]} {
    %c0 = arith.constant 0 : index
    %c0_0 = arith.constant 0 : index
    %0 = vector.load %arg1[%c0, %c0_0] : memref<2x1024xf32, #tpu.memory_space<vmem>>, vector<2x1024xf32>
    %1 = arith.truncf %0 : vector<2x1024xf32> to vector<2x1024xbf16>
    %c0_1 = arith.constant 0 : index
    %c0_2 = arith.constant 0 : index
    %2 = vector.load %arg2[%c0_1, %c0_2] : memref<1024x512xbf16, #tpu.memory_space<vmem>>, vector<1024x512xbf16>
    %cst = arith.constant dense<0.000000e+00> : vector<2x512xf32>
    %3 = tpu.matmul %1, %2, %cst {dimension_numbers = #tpu.dot_dimension_numbers<[1], [0], [0], [1], [0, 0, 1, 1], [], []>} : vector<2x1024xbf16>, vector<1024x512xbf16>, vector<2x512xf32> -> vector<2x512xf32>
    %c0_3 = arith.constant 0 : index
    %c0_4 = arith.constant 0 : index
    %4 = vector.load %arg3[%c0_3, %c0_4] : memref<1x512xf32, #tpu.memory_space<vmem>>, vector<1x512xf32>
    %5 = vector.broadcast %4 : vector<1x512xf32> to vector<2x512xf32>
    %6 = arith.addf %3, %5 : vector<2x512xf32>
    %cst_5 = arith.constant 0.000000e+00 : f32
    %7 = vector.broadcast %cst_5 : f32 to vector<2x512xf32>
    %8 = arith.maximumf %6, %7 : vector<2x512xf32>
    %9 = arith.truncf %8 : vector<2x512xf32> to vector<2x512xbf16>
    %c0_6 = arith.constant 0 : index
    %c0_7 = arith.constant 0 : index
    %10 = vector.load %arg4[%c0_6, %c0_7] : memref<512x256xbf16, #tpu.memory_space<vmem>>, vector<512x256xbf16>
    %cst_8 = arith.constant dense<0.000000e+00> : vector<2x256xf32>
    %11 = tpu.matmul %9, %10, %cst_8 {dimension_numbers = #tpu.dot_dimension_numbers<[1], [0], [0], [1], [0, 0, 1, 1], [], []>} : vector<2x512xbf16>, vector<512x256xbf16>, vector<2x256xf32> -> vector<2x256xf32>
    %c0_9 = arith.constant 0 : index
    %c0_10 = arith.constant 0 : index
    %12 = vector.load %arg5[%c0_9, %c0_10] : memref<1x256xf32, #tpu.memory_space<vmem>>, vector<1x256xf32>
    %13 = vector.broadcast %12 : vector<1x256xf32> to vector<2x256xf32>
    %14 = arith.addf %11, %13 : vector<2x256xf32>
    %cst_11 = arith.constant 0.000000e+00 : f32
    %15 = vector.broadcast %cst_11 : f32 to vector<2x256xf32>
    %16 = arith.maximumf %14, %15 : vector<2x256xf32>
    %17 = arith.truncf %16 : vector<2x256xf32> to vector<2x256xbf16>
    %c0_12 = arith.constant 0 : index
    %c0_13 = arith.constant 0 : index
    %18 = vector.load %arg6[%c0_12, %c0_13] : memref<256x256xbf16, #tpu.memory_space<vmem>>, vector<256x256xbf16>
    %cst_14 = arith.constant dense<0.000000e+00> : vector<2x256xf32>
    %19 = tpu.matmul %17, %18, %cst_14 {dimension_numbers = #tpu.dot_dimension_numbers<[1], [0], [0], [1], [0, 0, 1, 1], [], []>} : vector<2x256xbf16>, vector<256x256xbf16>, vector<2x256xf32> -> vector<2x256xf32>
    %c0_15 = arith.constant 0 : index
    %c0_16 = arith.constant 0 : index
    %20 = vector.load %arg7[%c0_15, %c0_16] : memref<1x256xf32, #tpu.memory_space<vmem>>, vector<1x256xf32>
    %21 = vector.broadcast %20 : vector<1x256xf32> to vector<2x256xf32>
    %22 = arith.addf %19, %21 : vector<2x256xf32>
    %c0_17 = arith.constant 0 : index
    %c0_18 = arith.constant 0 : index
    %23 = vector.load %arg8[%c0_17, %c0_18] : memref<2x256xf32, #tpu.memory_space<vmem>>, vector<2x256xf32>
    tpu.vector_store %arg8[%c0_17, %c0_18], %22 {strides = array<i32>} : memref<2x256xf32, #tpu.memory_space<vmem>>, vector<2x256xf32>,
    return
  }
  func.func @transform_0(%arg0: i32) -> (i32, i32) {
    %c0_i32 = arith.constant 0 : i32
    %c0_i32_0 = arith.constant 0 : i32
    %c0_i32_1 = arith.constant 0 : i32
    return %c0_i32, %c0_i32_0 : i32, i32
  }
  func.func @transform_1(%arg0: i32) -> (i32, i32) {
    %c0_i32 = arith.constant 0 : i32
    %c0_i32_0 = arith.constant 0 : i32
    %c0_i32_1 = arith.constant 0 : i32
    return %c0_i32, %c0_i32_0 : i32, i32
  }
  func.func @transform_2(%arg0: i32) -> (i32, i32) {
    %c0_i32 = arith.constant 0 : i32
    %c0_i32_0 = arith.constant 0 : i32
    %c0_i32_1 = arith.constant 0 : i32
    return %c0_i32, %c0_i32_0 : i32, i32
  }
  func.func @transform_3(%arg0: i32) -> (i32, i32) {
    %c0_i32 = arith.constant 0 : i32
    %c0_i32_0 = arith.constant 0 : i32
    %c0_i32_1 = arith.constant 0 : i32
    return %c0_i32, %c0_i32_0 : i32, i32
  }
  func.func @transform_4(%arg0: i32) -> (i32, i32) {
    %c0_i32 = arith.constant 0 : i32
    %c0_i32_0 = arith.constant 0 : i32
    %c0_i32_1 = arith.constant 0 : i32
    return %c0_i32, %c0_i32_0 : i32, i32
  }
  func.func @transform_5(%arg0: i32) -> (i32, i32) {
    %c0_i32 = arith.constant 0 : i32
    %c0_i32_0 = arith.constant 0 : i32
    %c0_i32_1 = arith.constant 0 : i32
    return %c0_i32, %c0_i32_0 : i32, i32
  }
  func.func @transform_6(%arg0: i32) -> (i32, i32) {
    %c0_i32 = arith.constant 0 : i32
    %c0_i32_0 = arith.constant 0 : i32
    %c0_i32_1 = arith.constant 0 : i32
    return %c0_i32, %c0_i32_0 : i32, i32
  }
  func.func @transform_7(%arg0: i32) -> (i32, i32) {
    %c0_i32 = arith.constant 0 : i32
    %c0_i32_0 = arith.constant 0 : i32
    %c0_i32_1 = arith.constant 0 : i32
    return %c0_i32, %c0_i32_0 : i32, i32
  }
}

module attributes {stable_mosaic.version = 11 : i64} {
  func.func @conv_pool_kernel(%arg0: i32, %arg1: memref<2x16x32xf32, #tpu.memory_space<vmem>>, %arg2: memref<16x64xbf16, #tpu.memory_space<vmem>>, %arg3: memref<1x64xf32, #tpu.memory_space<vmem>>, %arg4: memref<64x128xbf16, #tpu.memory_space<vmem>>, %arg5: memref<1x128xf32, #tpu.memory_space<vmem>>, %arg6: memref<128x1024xbf16, #tpu.memory_space<vmem>>, %arg7: memref<1x1024xf32, #tpu.memory_space<vmem>>, %arg8: memref<2x1024xf32, #tpu.memory_space<vmem>>) attributes {dimension_semantics = [#tpu.dimension_semantics<parallel>], iteration_bounds = array<i64: 1>, scalar_prefetch = 0 : i64, scratch_operands = 0 : i64, tpu.core_type = #tpu.core_type<tc>, window_params = [{transform_indices = @transform_0, window_bounds = array<i64: 2, 16, 32>}, {pipeline_mode = #tpu.pipeline_mode<synchronous>, transform_indices = @transform_1, window_bounds = array<i64: 16, 64>}, {pipeline_mode = #tpu.pipeline_mode<synchronous>, transform_indices = @transform_2, window_bounds = array<i64: 1, 64>}, {pipeline_mode = #tpu.pipeline_mode<synchronous>, transform_indices = @transform_3, window_bounds = array<i64: 64, 128>}, {pipeline_mode = #tpu.pipeline_mode<synchronous>, transform_indices = @transform_4, window_bounds = array<i64: 1, 128>}, {pipeline_mode = #tpu.pipeline_mode<synchronous>, transform_indices = @transform_5, window_bounds = array<i64: 128, 1024>}, {pipeline_mode = #tpu.pipeline_mode<synchronous>, transform_indices = @transform_6, window_bounds = array<i64: 1, 1024>}, {transform_indices = @transform_7, window_bounds = array<i64: 2, 1024>}]} {
    %c0 = arith.constant 0 : index
    %c0_0 = arith.constant 0 : index
    %c0_1 = arith.constant 0 : index
    %0 = vector.load %arg1[%c0, %c0_0, %c0_1] : memref<2x16x32xf32, #tpu.memory_space<vmem>>, vector<2x16x32xf32>
    %1 = tpu.transpose %0, [0, 2, 1] : vector<2x16x32xf32> -> vector<2x32x16xf32>
    %2 = vector.shape_cast %1 : vector<2x32x16xf32> to vector<64x16xf32>
    %3 = arith.truncf %2 : vector<64x16xf32> to vector<64x16xbf16>
    %c0_2 = arith.constant 0 : index
    %c0_3 = arith.constant 0 : index
    %4 = vector.load %arg2[%c0_2, %c0_3] : memref<16x64xbf16, #tpu.memory_space<vmem>>, vector<16x64xbf16>
    %cst = arith.constant dense<0.000000e+00> : vector<64x64xf32>
    %5 = tpu.matmul %3, %4, %cst {dimension_numbers = #tpu.dot_dimension_numbers<[1], [0], [0], [1], [0, 0, 1, 1], [], []>} : vector<64x16xbf16>, vector<16x64xbf16>, vector<64x64xf32> -> vector<64x64xf32>
    %c0_4 = arith.constant 0 : index
    %c0_5 = arith.constant 0 : index
    %6 = vector.load %arg3[%c0_4, %c0_5] : memref<1x64xf32, #tpu.memory_space<vmem>>, vector<1x64xf32>
    %7 = vector.broadcast %6 : vector<1x64xf32> to vector<64x64xf32>
    %8 = arith.addf %5, %7 : vector<64x64xf32>
    %cst_6 = arith.constant 0.000000e+00 : f32
    %9 = vector.broadcast %cst_6 : f32 to vector<64x64xf32>
    %10 = arith.maximumf %8, %9 : vector<64x64xf32>
    %11 = arith.truncf %10 : vector<64x64xf32> to vector<64x64xbf16>
    %c0_7 = arith.constant 0 : index
    %c0_8 = arith.constant 0 : index
    %12 = vector.load %arg4[%c0_7, %c0_8] : memref<64x128xbf16, #tpu.memory_space<vmem>>, vector<64x128xbf16>
    %cst_9 = arith.constant dense<0.000000e+00> : vector<64x128xf32>
    %13 = tpu.matmul %11, %12, %cst_9 {dimension_numbers = #tpu.dot_dimension_numbers<[1], [0], [0], [1], [0, 0, 1, 1], [], []>} : vector<64x64xbf16>, vector<64x128xbf16>, vector<64x128xf32> -> vector<64x128xf32>
    %c0_10 = arith.constant 0 : index
    %c0_11 = arith.constant 0 : index
    %14 = vector.load %arg5[%c0_10, %c0_11] : memref<1x128xf32, #tpu.memory_space<vmem>>, vector<1x128xf32>
    %15 = vector.broadcast %14 : vector<1x128xf32> to vector<64x128xf32>
    %16 = arith.addf %13, %15 : vector<64x128xf32>
    %cst_12 = arith.constant 0.000000e+00 : f32
    %17 = vector.broadcast %cst_12 : f32 to vector<64x128xf32>
    %18 = arith.maximumf %16, %17 : vector<64x128xf32>
    %19 = arith.truncf %18 : vector<64x128xf32> to vector<64x128xbf16>
    %c0_13 = arith.constant 0 : index
    %c0_14 = arith.constant 0 : index
    %20 = vector.load %arg6[%c0_13, %c0_14] : memref<128x1024xbf16, #tpu.memory_space<vmem>>, vector<128x1024xbf16>
    %cst_15 = arith.constant dense<0.000000e+00> : vector<64x1024xf32>
    %21 = tpu.matmul %19, %20, %cst_15 {dimension_numbers = #tpu.dot_dimension_numbers<[1], [0], [0], [1], [0, 0, 1, 1], [], []>} : vector<64x128xbf16>, vector<128x1024xbf16>, vector<64x1024xf32> -> vector<64x1024xf32>
    %c0_16 = arith.constant 0 : index
    %c0_17 = arith.constant 0 : index
    %22 = vector.load %arg7[%c0_16, %c0_17] : memref<1x1024xf32, #tpu.memory_space<vmem>>, vector<1x1024xf32>
    %23 = vector.broadcast %22 : vector<1x1024xf32> to vector<64x1024xf32>
    %24 = arith.addf %21, %23 : vector<64x1024xf32>
    %cst_18 = arith.constant 0.000000e+00 : f32
    %25 = vector.broadcast %cst_18 : f32 to vector<64x1024xf32>
    %26 = arith.maximumf %24, %25 : vector<64x1024xf32>
    %27 = vector.shape_cast %26 : vector<64x1024xf32> to vector<2x32x1024xf32>
    %cst_19 = arith.constant dense<0xFF800000> : vector<2x1024xf32>
    %28 = vector.multi_reduction <maximumf>, %27, %cst_19 [1] : vector<2x32x1024xf32> to vector<2x1024xf32>
    %c0_20 = arith.constant 0 : index
    %c0_21 = arith.constant 0 : index
    %29 = vector.load %arg8[%c0_20, %c0_21] : memref<2x1024xf32, #tpu.memory_space<vmem>>, vector<2x1024xf32>
    tpu.vector_store %arg8[%c0_20, %c0_21], %28 {strides = array<i32>} : memref<2x1024xf32, #tpu.memory_space<vmem>>, vector<2x1024xf32>,
    return
  }
  func.func @transform_0(%arg0: i32) -> (i32, i32, i32) {
    %c0_i32 = arith.constant 0 : i32
    %c0_i32_0 = arith.constant 0 : i32
    %c0_i32_1 = arith.constant 0 : i32
    return %arg0, %c0_i32, %c0_i32_0 : i32, i32, i32
  }
  func.func @transform_1(%arg0: i32) -> (i32, i32) {
    %c0_i32 = arith.constant 0 : i32
    %c0_i32_0 = arith.constant 0 : i32
    %c0_i32_1 = arith.constant 0 : i32
    return %c0_i32, %c0_i32_0 : i32, i32
  }
  func.func @transform_2(%arg0: i32) -> (i32, i32) {
    %c0_i32 = arith.constant 0 : i32
    %c0_i32_0 = arith.constant 0 : i32
    %c0_i32_1 = arith.constant 0 : i32
    return %c0_i32, %c0_i32_0 : i32, i32
  }
  func.func @transform_3(%arg0: i32) -> (i32, i32) {
    %c0_i32 = arith.constant 0 : i32
    %c0_i32_0 = arith.constant 0 : i32
    %c0_i32_1 = arith.constant 0 : i32
    return %c0_i32, %c0_i32_0 : i32, i32
  }
  func.func @transform_4(%arg0: i32) -> (i32, i32) {
    %c0_i32 = arith.constant 0 : i32
    %c0_i32_0 = arith.constant 0 : i32
    %c0_i32_1 = arith.constant 0 : i32
    return %c0_i32, %c0_i32_0 : i32, i32
  }
  func.func @transform_5(%arg0: i32) -> (i32, i32) {
    %c0_i32 = arith.constant 0 : i32
    %c0_i32_0 = arith.constant 0 : i32
    %c0_i32_1 = arith.constant 0 : i32
    return %c0_i32, %c0_i32_0 : i32, i32
  }
  func.func @transform_6(%arg0: i32) -> (i32, i32) {
    %c0_i32 = arith.constant 0 : i32
    %c0_i32_0 = arith.constant 0 : i32
    %c0_i32_1 = arith.constant 0 : i32
    return %c0_i32, %c0_i32_0 : i32, i32
  }
  func.func @transform_7(%arg0: i32) -> (i32, i32) {
    %c0_i32 = arith.constant 0 : i32
    %c0_i32_0 = arith.constant 0 : i32
    return %arg0, %c0_i32 : i32, i32
  }
}

</mosaic_0001>

<llo_original>
// kernel: stnkd_forward.2
$region0: #{stnkd_forward.2}
  #allocation0 [shape = 'u32[]', space=smem, size = 0x4, offset = 0x4, fixed_abs, tag = 'smem constant byte address 0x4 - core index']
  #allocation1 [shape = 'u32[144,128]{1,0:T(1,128)}', space=vmem, size = 0x12000, scoped, tag = 'internal scratch']
  %s0 = inlined_call_operand.hbm [shape: f32[2,16,32], index: 0, kind: input, shape index: {}]
  %s1 = inlined_call_operand.hbm [shape: bf16[16,64], index: 1, kind: input, shape index: {}]
  %s2 = inlined_call_operand.hbm [shape: f32[1,64], index: 2, kind: input, shape index: {}]
  %s3 = inlined_call_operand.hbm [shape: bf16[64,128], index: 3, kind: input, shape index: {}]
  %s4 = inlined_call_operand.hbm [shape: f32[1,128], index: 4, kind: input, shape index: {}]
  %s5 = inlined_call_operand.hbm [shape: bf16[128,1024], index: 5, kind: input, shape index: {}]
  %s6 = inlined_call_operand.hbm [shape: f32[1,1024], index: 6, kind: input, shape index: {}]
  %s7 = inlined_call_operand.vmem [shape: f32[2,1024], index: 7, kind: output, shape index: {}]
  %s8 = sld [smem:[#allocation0]]
  $region66: #{stnkd_forward.2} parent=0
    _
  %s10 = ssub.s32 1, %s8
  %s11 = scalar_select 0, %s10, %s8
  $region1: #{stnkd_forward.2} parent=0
    #allocation2 [shape = 'u8[16384]{0}', space=vmem, size = 0x4000, scoped, tag = 'input window, operand 0, single buffered']
    #allocation3 [shape = 's32[1]{0}', space=sflag, size = 0x4, scoped, tag = 'scoped memory for stnkd_forward.2']
    #allocation4 [shape = 'u8[4096]{0}', space=vmem, size = 0x1000, scoped, tag = 'input window, operand 1, single buffered']
    #allocation5 [shape = 's32[1]{0}', space=sflag, size = 0x4, scoped, tag = 'scoped memory for stnkd_forward.2']
    #allocation6 [shape = 'u8[512]{0}', space=vmem, size = 0x400, scoped, tag = 'input window, operand 2, single buffered']
    #allocation7 [shape = 'u8[16384]{0}', space=vmem, size = 0x4000, scoped, tag = 'input window, operand 3, single buffered']
    #allocation8 [shape = 's32[1]{0}', space=sflag, size = 0x4, scoped, tag = 'scoped memory for stnkd_forward.2']
    #allocation9 [shape = 'u8[512]{0}', space=vmem, size = 0x400, scoped, tag = 'input window, operand 4, single buffered']
    #allocation10 [shape = 'u8[262144]{0}', space=vmem, size = 0x40000, scoped, tag = 'input window, operand 5, single buffered']
    #allocation11 [shape = 's32[1]{0}', space=sflag, size = 0x4, scoped, tag = 'scoped memory for stnkd_forward.2']
    #allocation12 [shape = 'u8[4096]{0}', space=vmem, size = 0x1000, scoped, tag = 'input window, operand 6, single buffered']
    %12 = vsyncpa [#allocation3], 0
    %13 = vsyncpa [#allocation5], 0
    %14 = vsyncpa [#allocation8], 0
    %15 = vsyncpa [#allocation11], 0
    // Predicated region
    $region2: #{stnkd_forward.2} parent=1 // pred_check
      _
    $region3: #{stnkd_forward.2} parent=1 // pred_check_branch
      %17 = sbr.rel (0) target = $region5
    $region4: #{stnkd_forward.2} parent=1 // pred_region
      %s19 = ssub.s32 512, 512
      %20 = vsyncadd [#allocation3], %s19
      %s21 = sshll.u32 [#allocation2], 4
      %s22 = int_to_ptr.vmem [resolvable:$true] %s21
      %27 = dma.hbm_to_vmem [thread:$0]  %s0, 512, %s22, [#allocation3], 128, 128, 8
    $region5: #{stnkd_forward.2} parent=1 // pred_fallthru
      _
    // Predicated region
    $region6: #{stnkd_forward.2} parent=1 // pred_check
      _
    $region7: #{stnkd_forward.2} parent=1 // pred_check_branch
      %29 = sbr.rel (0) target = $region9
    $region8: #{stnkd_forward.2} parent=1 // pred_region
      %s31 = ssub.s32 128, 128
      %32 = vsyncadd [#allocation5], %s31
      %s33 = sshll.u32 [#allocation4], 4
      %s34 = int_to_ptr.vmem [resolvable:$true] %s33
      %39 = dma.hbm_to_vmem [thread:$0]  %s1, 128, %s34, [#allocation5], 64, 64, 4
    $region9: #{stnkd_forward.2} parent=1 // pred_fallthru
      _
    // Predicated region
    $region10: #{stnkd_forward.2} parent=1 // pred_check
      _
    $region11: #{stnkd_forward.2} parent=1 // pred_check_branch
      %41 = sbr.rel (0) target = $region13
    $region12: #{stnkd_forward.2} parent=1 // pred_region
      %s43 = ssub.s32 16, 16
      %44 = vsyncadd [#allocation5], %s43
      %s46 = sshll.u32 [#allocation6], 4
      %s47 = int_to_ptr.vmem [resolvable:$true] %s46
      %49 = dma.hbm_to_vmem [thread:$0]  %s2, 16, %s47, [#allocation5]
    $region13: #{stnkd_forward.2} parent=1 // pred_fallthru
      _
    // Predicated region
    $region14: #{stnkd_forward.2} parent=1 // pred_check
      _
    $region15: #{stnkd_forward.2} parent=1 // pred_check_branch
      %51 = sbr.rel (0) target = $region17
    $region16: #{stnkd_forward.2} parent=1 // pred_region
      %s53 = ssub.s32 512, 512
      %54 = vsyncadd [#allocation8], %s53
      %s55 = sshll.u32 [#allocation7], 4
      %s56 = int_to_ptr.vmem [resolvable:$true] %s55
      %61 = dma.hbm_to_vmem [thread:$0]  %s3, 512, %s56, [#allocation8], 64, 64, 4
    $region17: #{stnkd_forward.2} parent=1 // pred_fallthru
      _
    // Predicated region
    $region18: #{stnkd_forward.2} parent=1 // pred_check
      _
    $region19: #{stnkd_forward.2} parent=1 // pred_check_branch
      %63 = sbr.rel (0) target = $region21
    $region20: #{stnkd_forward.2} parent=1 // pred_region
      %s65 = ssub.s32 16, 16
      %66 = vsyncadd [#allocation8], %s65
      %s68 = sshll.u32 [#allocation9], 4
      %s69 = int_to_ptr.vmem [resolvable:$true] %s68
      %71 = dma.hbm_to_vmem [thread:$0]  %s4, 16, %s69, [#allocation8]
    $region21: #{stnkd_forward.2} parent=1 // pred_fallthru
      _
    // Predicated region
    $region22: #{stnkd_forward.2} parent=1 // pred_check
      _
    $region23: #{stnkd_forward.2} parent=1 // pred_check_branch
      %73 = sbr.rel (0) target = $region25
    $region24: #{stnkd_forward.2} parent=1 // pred_region
      %s75 = ssub.s32 8192, 8192
      %76 = vsyncadd [#allocation11], %s75
      %s77 = sshll.u32 [#allocation10], 4
      %s78 = int_to_ptr.vmem [resolvable:$true] %s77
      %83 = dma.hbm_to_vmem [thread:$0]  %s5, 8192, %s78, [#allocation11], 512, 512, 32
    $region25: #{stnkd_forward.2} parent=1 // pred_fallthru
      _
    // Predicated region
    $region26: #{stnkd_forward.2} parent=1 // pred_check
      _
    $region27: #{stnkd_forward.2} parent=1 // pred_check_branch
      %85 = sbr.rel (0) target = $region29
    $region28: #{stnkd_forward.2} parent=1 // pred_region
      %s87 = ssub.s32 128, 128
      %88 = vsyncadd [#allocation11], %s87
      %s90 = sshll.u32 [#allocation12], 4
      %s91 = int_to_ptr.vmem [resolvable:$true] %s90
      %93 = dma.hbm_to_vmem [thread:$0]  %s6, 128, %s91, [#allocation11]
    $region29: #{stnkd_forward.2} parent=1 // pred_fallthru
      _
    // Predicated region
    $region30: #{stnkd_forward.2} parent=1 // pred_check
      _
    $region31: #{stnkd_forward.2} parent=1 // pred_check_branch
      %95 = sbr.rel (0) target = $region33
    $region32: #{stnkd_forward.2} parent=1 // pred_region
      %96 = dma.done [#allocation3], 512
    $region33: #{stnkd_forward.2} parent=1 // pred_fallthru
      _
    // Predicated region
    $region34: #{stnkd_forward.2} parent=1 // pred_check
      _
    $region35: #{stnkd_forward.2} parent=1 // pred_check_branch
      %98 = sbr.rel (0) target = $region37
    $region36: #{stnkd_forward.2} parent=1 // pred_region
      %99 = dma.done [#allocation5], 128
    $region37: #{stnkd_forward.2} parent=1 // pred_fallthru
      _
    // Predicated region
    $region38: #{stnkd_forward.2} parent=1 // pred_check
      _
    $region39: #{stnkd_forward.2} parent=1 // pred_check_branch
      %101 = sbr.rel (0) target = $region41
    $region40: #{stnkd_forward.2} parent=1 // pred_region
      %102 = dma.done [#allocation5], 16
    $region41: #{stnkd_forward.2} parent=1 // pred_fallthru
      _
    // Predicated region
    $region42: #{stnkd_forward.2} parent=1 // pred_check
      _
    $region43: #{stnkd_forward.2} parent=1 // pred_check_branch
      %104 = sbr.rel (0) target = $region45
    $region44: #{stnkd_forward.2} parent=1 // pred_region
      %105 = dma.done [#allocation8], 512
    $region45: #{stnkd_forward.2} parent=1 // pred_fallthru
      _
    // Predicated region
    $region46: #{stnkd_forward.2} parent=1 // pred_check
      _
    $region47: #{stnkd_forward.2} parent=1 // pred_check_branch
      %107 = sbr.rel (0) target = $region49
    $region48: #{stnkd_forward.2} parent=1 // pred_region
      %108 = dma.done [#allocation8], 16
    $region49: #{stnkd_forward.2} parent=1 // pred_fallthru
      _
    // Predicated region
    $region50: #{stnkd_forward.2} parent=1 // pred_check
      _
    $region51: #{stnkd_forward.2} parent=1 // pred_check_branch
      %110 = sbr.rel (0) target = $region53
    $region52: #{stnkd_forward.2} parent=1 // pred_region
      %111 = dma.done [#allocation11], 8192
    $region53: #{stnkd_forward.2} parent=1 // pred_fallthru
      _
    // Predicated region
    $region54: #{stnkd_forward.2} parent=1 // pred_check
      _
    $region55: #{stnkd_forward.2} parent=1 // pred_check_branch
      %113 = sbr.rel (0) target = $region57
    $region56: #{stnkd_forward.2} parent=1 // pred_region
      %114 = dma.done [#allocation11], 128
    $region57: #{stnkd_forward.2} parent=1 // pred_fallthru
      _
    %v116 = vld [vmem:[#allocation2] sm:$0xff]
    %v117 = vld [vmem:[#allocation2 + $0x8] sm:$0xff]
    %v118 = vld [vmem:[#allocation2 + $0x10] sm:$0xff]
    %v119 = vld [vmem:[#allocation2 + $0x18] sm:$0xff]
    %120 = vxpose.xlu0.b32.start [1/16] %v116, 128
    %121 = vxpose.xlu0.b32.cont [2/16] %v117, 128
    %122 = vxpose.xlu0.b32.cont [3/16] 0.0, 128
    %123 = vxpose.xlu0.b32.cont [4/16] 0.0, 128
    %124 = vxpose.xlu0.b32.cont [5/16] 0.0, 128
    %125 = vxpose.xlu0.b32.cont [6/16] 0.0, 128
    %126 = vxpose.xlu0.b32.cont [7/16] 0.0, 128
    %127 = vxpose.xlu0.b32.cont [8/16] 0.0, 128
    %128 = vxpose.xlu0.b32.cont [9/16] 0.0, 128
    %129 = vxpose.xlu0.b32.cont [10/16] 0.0, 128
    %130 = vxpose.xlu0.b32.cont [11/16] 0.0, 128
    %131 = vxpose.xlu0.b32.cont [12/16] 0.0, 128
    %132 = vxpose.xlu0.b32.cont [13/16] 0.0, 128
    %133 = vxpose.xlu0.b32.cont [14/16] 0.0, 128
    %134 = vxpose.xlu0.b32.cont [15/16] 0.0, 128
    %135 = vxpose.xlu0.b32.end [16/16] 0.0, 128
    %v136 = vpop.trf.xlu0
    %v137 = vpop.trf.xlu0
    %v138 = vpop.trf.xlu0
    %v139 = vpop.trf.xlu0
    %v140 = vpop.trf.xlu0
    %v141 = vpop.trf.xlu0
    %v142 = vpop.trf.xlu0
    %v143 = vpop.trf.xlu0
    %v144 = vpop.trf.xlu0
    %v145 = vpop.trf.xlu0
    %v146 = vpop.trf.xlu0
    %v147 = vpop.trf.xlu0
    %v148 = vpop.trf.xlu0
    %v149 = vpop.trf.xlu0
    %v150 = vpop.trf.xlu0
    %v151 = vpop.trf.xlu0
    %152 = vxpose.xlu0.b32.start [1/16] %v118, 128
    %153 = vxpose.xlu0.b32.cont [2/16] %v119, 128
    %154 = vxpose.xlu0.b32.cont [3/16] 0.0, 128
    %155 = vxpose.xlu0.b32.cont [4/16] 0.0, 128
    %156 = vxpose.xlu0.b32.cont [5/16] 0.0, 128
    %157 = vxpose.xlu0.b32.cont [6/16] 0.0, 128
    %158 = vxpose.xlu0.b32.cont [7/16] 0.0, 128
    %159 = vxpose.xlu0.b32.cont [8/16] 0.0, 128
    %160 = vxpose.xlu0.b32.cont [9/16] 0.0, 128
    %161 = vxpose.xlu0.b32.cont [10/16] 0.0, 128
    %162 = vxpose.xlu0.b32.cont [11/16] 0.0, 128
    %163 = vxpose.xlu0.b32.cont [12/16] 0.0, 128
    %164 = vxpose.xlu0.b32.cont [13/16] 0.0, 128
    %165 = vxpose.xlu0.b32.cont [14/16] 0.0, 128
    %166 = vxpose.xlu0.b32.cont [15/16] 0.0, 128
    %167 = vxpose.xlu0.b32.end [16/16] 0.0, 128
    %v168 = vpop.trf.xlu0
    %v169 = vpop.trf.xlu0
    %v170 = vpop.trf.xlu0
    %v171 = vpop.trf.xlu0
    %v172 = vpop.trf.xlu0
    %v173 = vpop.trf.xlu0
    %v174 = vpop.trf.xlu0
    %v175 = vpop.trf.xlu0
    %v176 = vpop.trf.xlu0
    %v177 = vpop.trf.xlu0
    %v178 = vpop.trf.xlu0
    %v179 = vpop.trf.xlu0
    %v180 = vpop.trf.xlu0
    %v181 = vpop.trf.xlu0
    %v182 = vpop.trf.xlu0
    %v183 = vpop.trf.xlu0
    %v184 = vpack.c.bf16 %v137, %v136
    %v185 = vpack.c.bf16 %v139, %v138
    %v186 = vpack.c.bf16 %v169, %v168
    %v187 = vpack.c.bf16 %v171, %v170
    %v188 = vld [vmem:[#allocation4] sm:$0xf]
    %v189 = vld [vmem:[#allocation4 + $0x4] sm:$0xf]
    %v190 = vld [vmem:[#allocation6] sm:$0x1]
    %v192 = vlaneseq
    %v193 = vshrl.u32 %v192, 7
    %v194 = vsub.s32 0, %v193
    %v195 = vrot.slane %v190, %v194
    %v199 = vunpack.c.l.b16 %v188
    %v200 = vunpack.c.l.b16 %v189
    %v201 = vpack.c.b16 %v200, %v199
    %vm203 = vcmask 130048
    %v205 = vsel %vm203, %v184, 0
    %v208 = vsel %vm203, %v185, 0
    %v211 = vsel %vm203, %v186, 0
    %v214 = vsel %vm203, %v187, 0
    %216 = vmatprep.subr.bf16.mxu0 0
    %217 = vmatpush1.bf16.msra.mxu0 0
    %218 = vmatprep.subr.bf16.mxu0 0
    %219 = vmatpush1.bf16.msra.mxu0 0
    %220 = vmatprep.subr.bf16.mxu0 0
    %221 = vmatpush1.bf16.msra.mxu0 0
    %222 = vmatprep.subr.bf16.mxu0 0
    %223 = vmatpush1.bf16.msra.mxu0 0
    %224 = vmatprep.subr.bf16.mxu0 0
    %225 = vmatpush1.bf16.msra.mxu0 0
    %226 = vmatprep.subr.bf16.mxu0 0
    %227 = vmatpush1.bf16.msra.mxu0 0
    %228 = vmatprep.subr.bf16.mxu0 0
    %229 = vmatpush1.bf16.msra.mxu0 0
    %230 = vmatprep.subr.bf16.mxu0 0
    %231 = vmatpush1.bf16.msra.mxu0 %v201
    %232 = vmatprep.subr.bf16.mxu0 0
    %233 = vmatpush2.bf16.msra.mxu0 0
    %234 = vmatprep.subr.bf16.mxu0 0
    %235 = vmatpush2.bf16.msra.mxu0 0
    %236 = vmatprep.subr.bf16.mxu0 0
    %237 = vmatpush2.bf16.msra.mxu0 0
    %238 = vmatprep.subr.bf16.mxu0 0
    %239 = vmatpush2.bf16.msra.mxu0 0
    %240 = vmatprep.subr.bf16.mxu0 0
    %241 = vmatpush2.bf16.msra.mxu0 0
    %242 = vmatprep.subr.bf16.mxu0 0
    %243 = vmatpush2.bf16.msra.mxu0 0
    %244 = vmatprep.subr.bf16.mxu0 0
    %245 = vmatpush2.bf16.msra.mxu0 0
    %246 = vmatprep.subr.bf16.mxu0 0
    %247 = vmatpush2.bf16.msra.mxu0 0
    %248 = vmatprep.mubr.bf16.mxu0 0
    %249 = vmatmul.mubr.bf16.gmra.mxu0 %v205
    %v250 = vpop.f32.mrf.mxu0
    %v251 = vadd.f32 %v195, %v250
    %v252 = vpop.f32.mrf.mxu0
    %v253 = vpop.f32.mrf.mxu0
    %v254 = vadd.f32 %v195, %v253
    %v255 = vpop.f32.mrf.mxu0
    %256 = vmatprep.mubr.bf16.mxu0 0
    %257 = vmatmul.mubr.bf16.gmra.mxu0 %v208
    %v258 = vpop.f32.mrf.mxu0
    %v259 = vadd.f32 %v195, %v258
    %v260 = vpop.f32.mrf.mxu0
    %v261 = vpop.f32.mrf.mxu0
    %v262 = vadd.f32 %v195, %v261
    %v263 = vpop.f32.mrf.mxu0
    %264 = vmatprep.mubr.bf16.mxu0 0
    %265 = vmatmul.mubr.bf16.gmra.mxu0 %v211
    %v266 = vpop.f32.mrf.mxu0
    %v267 = vadd.f32 %v195, %v266
    %v268 = vpop.f32.mrf.mxu0
    %v269 = vpop.f32.mrf.mxu0
    %v270 = vadd.f32 %v195, %v269
    %v271 = vpop.f32.mrf.mxu0
    %272 = vmatprep.mubr.bf16.mxu0 0
    %273 = vmatmul.mubr.bf16.gmra.mxu0 %v214
    %v274 = vpop.f32.mrf.mxu0
    %v275 = vadd.f32 %v195, %v274
    %v276 = vpop.f32.mrf.mxu0
    %v277 = vpop.f32.mrf.mxu0
    %v278 = vadd.f32 %v195, %v277
    %v279 = vpop.f32.mrf.mxu0
    %280 = vdwg.mxu0
    %v281 = vmax.f32 %v251, 0.0
    %v282 = vmax.f32 %v254, 0.0
    %v283 = vmax.f32 %v259, 0.0
    %v284 = vmax.f32 %v262, 0.0
    %v285 = vmax.f32 %v267, 0.0
    %v286 = vmax.f32 %v270, 0.0
    %v287 = vmax.f32 %v275, 0.0
    %v288 = vmax.f32 %v278, 0.0
    %v289 = vpack.c.bf16 %v282, %v281
    %v290 = vpack.c.bf16 %v284, %v283
    %v291 = vpack.c.bf16 %v286, %v285
    %v292 = vpack.c.bf16 %v288, %v287
    %v293 = vld [vmem:[#allocation7] sm:$0xf]
    %v294 = vld [vmem:[#allocation7 + $0x4] sm:$0xf]
    %v295 = vld [vmem:[#allocation7 + $0x8] sm:$0xf]
    %v296 = vld [vmem:[#allocation7 + $0xc] sm:$0xf]
    %v297 = vld [vmem:[#allocation7 + $0x10] sm:$0xf]
    %v298 = vld [vmem:[#allocation7 + $0x14] sm:$0xf]
    %v299 = vld [vmem:[#allocation7 + $0x18] sm:$0xf]
    %v300 = vld [vmem:[#allocation7 + $0x1c] sm:$0xf]
    %v301 = vld [vmem:[#allocation9] sm:$0x1]
    %v303 = vlaneseq
    %v304 = vshrl.u32 %v303, 7
    %v305 = vsub.s32 0, %v304
    %v306 = vrot.slane %v301, %v305
    %v316 = vunpack.c.l.b16 %v293
    %v317 = vunpack.c.l.b16 %v294
    %v318 = vunpack.c.l.b16 %v295
    %v319 = vunpack.c.l.b16 %v296
    %v320 = vunpack.c.l.b16 %v297
    %v321 = vunpack.c.l.b16 %v298
    %v322 = vunpack.c.l.b16 %v299
    %v323 = vunpack.c.l.b16 %v300
    %v324 = vpack.c.b16 %v317, %v316
    %v325 = vpack.c.b16 %v319, %v318
    %v326 = vpack.c.b16 %v321, %v320
    %v327 = vpack.c.b16 %v323, %v322
    %vm332 = vcmask 523264
    %v334 = vsel %vm332, %v289, 0
    %v337 = vsel %vm332, %v290, 0
    %v340 = vsel %vm332, %v291, 0
    %v343 = vsel %vm332, %v292, 0
    %345 = vmatprep.subr.bf16.mxu0 0
    %346 = vmatpush1.bf16.msra.mxu0 0
    %347 = vmatprep.subr.bf16.mxu0 0
    %348 = vmatpush1.bf16.msra.mxu0 0
    %349 = vmatprep.subr.bf16.mxu0 0
    %350 = vmatpush1.bf16.msra.mxu0 0
    %351 = vmatprep.subr.bf16.mxu0 0
    %352 = vmatpush1.bf16.msra.mxu0 0
    %353 = vmatprep.subr.bf16.mxu0 0
    %354 = vmatpush1.bf16.msra.mxu0 %v327
    %355 = vmatprep.subr.bf16.mxu0 0
    %356 = vmatpush1.bf16.msra.mxu0 %v326
    %357 = vmatprep.subr.bf16.mxu0 0
    %358 = vmatpush1.bf16.msra.mxu0 %v325
    %359 = vmatprep.subr.bf16.mxu0 0
    %360 = vmatpush1.bf16.msra.mxu0 %v324
    %361 = vmatprep.subr.bf16.mxu0 0
    %362 = vmatpush2.bf16.msra.mxu0 0
    %363 = vmatprep.subr.bf16.mxu0 0
    %364 = vmatpush2.bf16.msra.mxu0 0
    %365 = vmatprep.subr.bf16.mxu0 0
    %366 = vmatpush2.bf16.msra.mxu0 0
    %367 = vmatprep.subr.bf16.mxu0 0
    %368 = vmatpush2.bf16.msra.mxu0 0
    %369 = vmatprep.subr.bf16.mxu0 0
    %370 = vmatpush2.bf16.msra.mxu0 0
    %371 = vmatprep.subr.bf16.mxu0 0
    %372 = vmatpush2.bf16.msra.mxu0 0
    %373 = vmatprep.subr.bf16.mxu0 0
    %374 = vmatpush2.bf16.msra.mxu0 0
    %375 = vmatprep.subr.bf16.mxu0 0
    %376 = vmatpush2.bf16.msra.mxu0 0
    %377 = vmatprep.mubr.bf16.mxu0 0
    %378 = vmatmul.mubr.bf16.gmra.mxu0 %v334
    %v379 = vpop.f32.mrf.mxu0
    %v380 = vadd.f32 %v306, %v379
    %v381 = vpop.f32.mrf.mxu0
    %v382 = vpop.f32.mrf.mxu0
    %v383 = vadd.f32 %v306, %v382
    %v384 = vpop.f32.mrf.mxu0
    %385 = vmatprep.mubr.bf16.mxu0 0
    %386 = vmatmul.mubr.bf16.gmra.mxu0 %v337
    %v387 = vpop.f32.mrf.mxu0
    %v388 = vadd.f32 %v306, %v387
    %v389 = vpop.f32.mrf.mxu0
    %v390 = vpop.f32.mrf.mxu0
    %v391 = vadd.f32 %v306, %v390
    %v392 = vpop.f32.mrf.mxu0
    %393 = vmatprep.mubr.bf16.mxu0 0
    %394 = vmatmul.mubr.bf16.gmra.mxu0 %v340
    %v395 = vpop.f32.mrf.mxu0
    %v396 = vadd.f32 %v306, %v395
    %v397 = vpop.f32.mrf.mxu0
    %v398 = vpop.f32.mrf.mxu0
    %v399 = vadd.f32 %v306, %v398
    %v400 = vpop.f32.mrf.mxu0
    %401 = vmatprep.mubr.bf16.mxu0 0
    %402 = vmatmul.mubr.bf16.gmra.mxu0 %v343
    %v403 = vpop.f32.mrf.mxu0
    %v404 = vadd.f32 %v306, %v403
    %v405 = vpop.f32.mrf.mxu0
    %v406 = vpop.f32.mrf.mxu0
    %v407 = vadd.f32 %v306, %v406
    %v408 = vpop.f32.mrf.mxu0
    %409 = vdwg.mxu0
    %v410 = vmax.f32 %v380, 0.0
    %v411 = vmax.f32 %v383, 0.0
    %v412 = vmax.f32 %v388, 0.0
    %v413 = vmax.f32 %v391, 0.0
    %v414 = vmax.f32 %v396, 0.0
    %v415 = vmax.f32 %v399, 0.0
    %v416 = vmax.f32 %v404, 0.0
    %v417 = vmax.f32 %v407, 0.0
    %v418 = vpack.c.bf16 %v411, %v410
    %v419 = vpack.c.bf16 %v413, %v412
    %v420 = vpack.c.bf16 %v415, %v414
    %v421 = vpack.c.bf16 %v417, %v416
    %v422 = vld [vmem:[#allocation10] sm:$0xff]
    %v423 = vld [vmem:[#allocation10 + $0x8] sm:$0xff]
    %v424 = vld [vmem:[#allocation10 + $0x10] sm:$0xff]
    %v425 = vld [vmem:[#allocation10 + $0x18] sm:$0xff]
    %v426 = vld [vmem:[#allocation10 + $0x20] sm:$0xff]
    %v427 = vld [vmem:[#allocation10 + $0x28] sm:$0xff]
    %v428 = vld [vmem:[#allocation10 + $0x30] sm:$0xff]
    %v429 = vld [vmem:[#allocation10 + $0x38] sm:$0xff]
    %v430 = vld [vmem:[#allocation10 + $0x40] sm:$0xff]
    %v431 = vld [vmem:[#allocation10 + $0x48] sm:$0xff]
    %v432 = vld [vmem:[#allocation10 + $0x50] sm:$0xff]
    %v433 = vld [vmem:[#allocation10 + $0x58] sm:$0xff]
    %v434 = vld [vmem:[#allocation10 + $0x60] sm:$0xff]
    %v435 = vld [vmem:[#allocation10 + $0x68] sm:$0xff]
    %v436 = vld [vmem:[#allocation10 + $0x70] sm:$0xff]
    %v437 = vld [vmem:[#allocation10 + $0x78] sm:$0xff]
    %v438 = vld [vmem:[#allocation10 + $0x80] sm:$0xff]
    %v439 = vld [vmem:[#allocation10 + $0x88] sm:$0xff]
    %v440 = vld [vmem:[#allocation10 + $0x90] sm:$0xff]
    %v441 = vld [vmem:[#allocation10 + $0x98] sm:$0xff]
    %v442 = vld [vmem:[#allocation10 + $0xa0] sm:$0xff]
    %v443 = vld [vmem:[#allocation10 + $0xa8] sm:$0xff]
    %v444 = vld [vmem:[#allocation10 + $0xb0] sm:$0xff]
    %v445 = vld [vmem:[#allocation10 + $0xb8] sm:$0xff]
    %v446 = vld [vmem:[#allocation10 + $0xc0] sm:$0xff]
    %v447 = vld [vmem:[#allocation10 + $0xc8] sm:$0xff]
    %v448 = vld [vmem:[#allocation10 + $0xd0] sm:$0xff]
    %v449 = vld [vmem:[#allocation10 + $0xd8] sm:$0xff]
    %v450 = vld [vmem:[#allocation10 + $0xe0] sm:$0xff]
    %v451 = vld [vmem:[#allocation10 + $0xe8] sm:$0xff]
    %v452 = vld [vmem:[#allocation10 + $0xf0] sm:$0xff]
    %v453 = vld [vmem:[#allocation10 + $0xf8] sm:$0xff]
    %v454 = vld [vmem:[#allocation10 + $0x100] sm:$0xff]
    %v455 = vld [vmem:[#allocation10 + $0x108] sm:$0xff]
    %v456 = vld [vmem:[#allocation10 + $0x110] sm:$0xff]
    %v457 = vld [vmem:[#allocation10 + $0x118] sm:$0xff]
    %v458 = vld [vmem:[#allocation10 + $0x120] sm:$0xff]
    %v459 = vld [vmem:[#allocation10 + $0x128] sm:$0xff]
    %v460 = vld [vmem:[#allocation10 + $0x130] sm:$0xff]
    %v461 = vld [vmem:[#allocation10 + $0x138] sm:$0xff]
    %v462 = vld [vmem:[#allocation10 + $0x140] sm:$0xff]
    %v463 = vld [vmem:[#allocation10 + $0x148] sm:$0xff]
    %v464 = vld [vmem:[#allocation10 + $0x150] sm:$0xff]
    %v465 = vld [vmem:[#allocation10 + $0x158] sm:$0xff]
    %v466 = vld [vmem:[#allocation10 + $0x160] sm:$0xff]
    %v467 = vld [vmem:[#allocation10 + $0x168] sm:$0xff]
    %v468 = vld [vmem:[#allocation10 + $0x170] sm:$0xff]
    %v469 = vld [vmem:[#allocation10 + $0x178] sm:$0xff]
    %v470 = vld [vmem:[#allocation10 + $0x180] sm:$0xff]
    %v471 = vld [vmem:[#allocation10 + $0x188] sm:$0xff]
    %v472 = vld [vmem:[#allocation10 + $0x190] sm:$0xff]
    %v473 = vld [vmem:[#allocation10 + $0x198] sm:$0xff]
    %v474 = vld [vmem:[#allocation10 + $0x1a0] sm:$0xff]
    %v475 = vld [vmem:[#allocation10 + $0x1a8] sm:$0xff]
    %v476 = vld [vmem:[#allocation10 + $0x1b0] sm:$0xff]
    %v477 = vld [vmem:[#allocation10 + $0x1b8] sm:$0xff]
    %v478 = vld [vmem:[#allocation10 + $0x1c0] sm:$0xff]
    %v479 = vld [vmem:[#allocation10 + $0x1c8] sm:$0xff]
    %v480 = vld [vmem:[#allocation10 + $0x1d0] sm:$0xff]
    %v481 = vld [vmem:[#allocation10 + $0x1d8] sm:$0xff]
    %v482 = vld [vmem:[#allocation10 + $0x1e0] sm:$0xff]
    %v483 = vld [vmem:[#allocation10 + $0x1e8] sm:$0xff]
    %v484 = vld [vmem:[#allocation10 + $0x1f0] sm:$0xff]
    %v485 = vld [vmem:[#allocation10 + $0x1f8] sm:$0xff]
    %v486 = vld [vmem:[#allocation12] sm:$0xff]
    %v488 = vlaneseq
    %v489 = vshrl.u32 %v488, 7
    %v490 = vsub.s32 0, %v489
    %v491 = vrot.slane %v486, %v490
    %v492 = vlaneseq
    %v493 = vshrl.u32 %v492, 7
    %v494 = vsub.s32 1, %v493
    %v495 = vrot.slane %v486, %v494
    %v496 = vlaneseq
    %v497 = vshrl.u32 %v496, 7
    %v498 = vsub.s32 2, %v497
    %v499 = vrot.slane %v486, %v498
    %v500 = vlaneseq
    %v501 = vshrl.u32 %v500, 7
    %v502 = vsub.s32 3, %v501
    %v503 = vrot.slane %v486, %v502
    %v504 = vlaneseq
    %v505 = vshrl.u32 %v504, 7
    %v506 = vsub.s32 4, %v505
    %v507 = vrot.slane %v486, %v506
    %v508 = vlaneseq
    %v509 = vshrl.u32 %v508, 7
    %v510 = vsub.s32 5, %v509
    %v511 = vrot.slane %v486, %v510
    %v512 = vlaneseq
    %v513 = vshrl.u32 %v512, 7
    %v514 = vsub.s32 6, %v513
    %v515 = vrot.slane %v486, %v514
    %v516 = vlaneseq
    %v517 = vshrl.u32 %v516, 7
    %v518 = vsub.s32 7, %v517
    %v519 = vrot.slane %v486, %v518
    %v592 = vunpack.c.l.b16 %v422
    %v593 = vunpack.c.h.b16 %v422
    %v594 = vunpack.c.l.b16 %v423
    %v595 = vunpack.c.h.b16 %v423
    %v596 = vunpack.c.l.b16 %v424
    %v597 = vunpack.c.h.b16 %v424
    %v598 = vunpack.c.l.b16 %v425
    %v599 = vunpack.c.h.b16 %v425
    %v600 = vunpack.c.l.b16 %v426
    %v601 = vunpack.c.h.b16 %v426
    %v602 = vunpack.c.l.b16 %v427
    %v603 = vunpack.c.h.b16 %v427
    %v604 = vunpack.c.l.b16 %v428
    %v605 = vunpack.c.h.b16 %v428
    %v606 = vunpack.c.l.b16 %v429
    %v607 = vunpack.c.h.b16 %v429
    %v608 = vunpack.c.l.b16 %v430
    %v609 = vunpack.c.h.b16 %v430
    %v610 = vunpack.c.l.b16 %v431
    %v611 = vunpack.c.h.b16 %v431
    %v612 = vunpack.c.l.b16 %v432
    %v613 = vunpack.c.h.b16 %v432
    %v614 = vunpack.c.l.b16 %v433
    %v615 = vunpack.c.h.b16 %v433
    %v616 = vunpack.c.l.b16 %v434
    %v617 = vunpack.c.h.b16 %v434
    %v618 = vunpack.c.l.b16 %v435
    %v619 = vunpack.c.h.b16 %v435
    %v620 = vunpack.c.l.b16 %v436
    %v621 = vunpack.c.h.b16 %v436
    %v622 = vunpack.c.l.b16 %v437
    %v623 = vunpack.c.h.b16 %v437
    %v624 = vunpack.c.l.b16 %v438
    %v625 = vunpack.c.h.b16 %v438
    %v626 = vunpack.c.l.b16 %v439
    %v627 = vunpack.c.h.b16 %v439
    %v628 = vunpack.c.l.b16 %v440
    %v629 = vunpack.c.h.b16 %v440
    %v630 = vunpack.c.l.b16 %v441
    %v631 = vunpack.c.h.b16 %v441
    %v632 = vunpack.c.l.b16 %v442
    %v633 = vunpack.c.h.b16 %v442
    %v634 = vunpack.c.l.b16 %v443
    %v635 = vunpack.c.h.b16 %v443
    %v636 = vunpack.c.l.b16 %v444
    %v637 = vunpack.c.h.b16 %v444
    %v638 = vunpack.c.l.b16 %v445
    %v639 = vunpack.c.h.b16 %v445
    %v640 = vunpack.c.l.b16 %v446
    %v641 = vunpack.c.h.b16 %v446
    %v642 = vunpack.c.l.b16 %v447
    %v643 = vunpack.c.h.b16 %v447
    %v644 = vunpack.c.l.b16 %v448
    %v645 = vunpack.c.h.b16 %v448
    %v646 = vunpack.c.l.b16 %v449
    %v647 = vunpack.c.h.b16 %v449
    %v648 = vunpack.c.l.b16 %v450
    %v649 = vunpack.c.h.b16 %v450
    %v650 = vunpack.c.l.b16 %v451
    %v651 = vunpack.c.h.b16 %v451
    %v652 = vunpack.c.l.b16 %v452
    %v653 = vunpack.c.h.b16 %v452
    %v654 = vunpack.c.l.b16 %v453
    %v655 = vunpack.c.h.b16 %v453
    %v656 = vunpack.c.l.b16 %v454
    %v657 = vunpack.c.h.b16 %v454
    %v658 = vunpack.c.l.b16 %v455
    %v659 = vunpack.c.h.b16 %v455
    %v660 = vunpack.c.l.b16 %v456
    %v661 = vunpack.c.h.b16 %v456
    %v662 = vunpack.c.l.b16 %v457
    %v663 = vunpack.c.h.b16 %v457
    %v664 = vunpack.c.l.b16 %v458
    %v665 = vunpack.c.h.b16 %v458
    %v666 = vunpack.c.l.b16 %v459
    %v667 = vunpack.c.h.b16 %v459
    %v668 = vunpack.c.l.b16 %v460
    %v669 = vunpack.c.h.b16 %v460
    %v670 = vunpack.c.l.b16 %v461
    %v671 = vunpack.c.h.b16 %v461
    %v672 = vunpack.c.l.b16 %v462
    %v673 = vunpack.c.h.b16 %v462
    %v674 = vunpack.c.l.b16 %v463
    %v675 = vunpack.c.h.b16 %v463
    %v676 = vunpack.c.l.b16 %v464
    %v677 = vunpack.c.h.b16 %v464
    %v678 = vunpack.c.l.b16 %v465
    %v679 = vunpack.c.h.b16 %v465
    %v680 = vunpack.c.l.b16 %v466
    %v681 = vunpack.c.h.b16 %v466
    %v682 = vunpack.c.l.b16 %v467
    %v683 = vunpack.c.h.b16 %v467
    %v684 = vunpack.c.l.b16 %v468
    %v685 = vunpack.c.h.b16 %v468
    %v686 = vunpack.c.l.b16 %v469
    %v687 = vunpack.c.h.b16 %v469
    %v688 = vunpack.c.l.b16 %v470
    %v689 = vunpack.c.h.b16 %v470
    %v690 = vunpack.c.l.b16 %v471
    %v691 = vunpack.c.h.b16 %v471
    %v692 = vunpack.c.l.b16 %v472
    %v693 = vunpack.c.h.b16 %v472
    %v694 = vunpack.c.l.b16 %v473
    %v695 = vunpack.c.h.b16 %v473
    %v696 = vunpack.c.l.b16 %v474
    %v697 = vunpack.c.h.b16 %v474
    %v698 = vunpack.c.l.b16 %v475
    %v699 = vunpack.c.h.b16 %v475
    %v700 = vunpack.c.l.b16 %v476
    %v701 = vunpack.c.h.b16 %v476
    %v702 = vunpack.c.l.b16 %v477
    %v703 = vunpack.c.h.b16 %v477
    %v704 = vunpack.c.l.b16 %v478
    %v705 = vunpack.c.h.b16 %v478
    %v706 = vunpack.c.l.b16 %v479
    %v707 = vunpack.c.h.b16 %v479
    %v708 = vunpack.c.l.b16 %v480
    %v709 = vunpack.c.h.b16 %v480
    %v710 = vunpack.c.l.b16 %v481
    %v711 = vunpack.c.h.b16 %v481
    %v712 = vunpack.c.l.b16 %v482
    %v713 = vunpack.c.h.b16 %v482
    %v714 = vunpack.c.l.b16 %v483
    %v715 = vunpack.c.h.b16 %v483
    %v716 = vunpack.c.l.b16 %v484
    %v717 = vunpack.c.h.b16 %v484
    %v718 = vunpack.c.l.b16 %v485
    %v719 = vunpack.c.h.b16 %v485
    %v720 = vpack.c.b16 %v600, %v592
    %v721 = vpack.c.b16 %v601, %v593
    %v722 = vpack.c.b16 %v602, %v594
    %v723 = vpack.c.b16 %v603, %v595
    %v724 = vpack.c.b16 %v604, %v596
    %v725 = vpack.c.b16 %v605, %v597
    %v726 = vpack.c.b16 %v606, %v598
    %v727 = vpack.c.b16 %v607, %v599
    %v728 = vpack.c.b16 %v616, %v608
    %v729 = vpack.c.b16 %v617, %v609
    %v730 = vpack.c.b16 %v618, %v610
    %v731 = vpack.c.b16 %v619, %v611
    %v732 = vpack.c.b16 %v620, %v612
    %v733 = vpack.c.b16 %v621, %v613
    %v734 = vpack.c.b16 %v622, %v614
    %v735 = vpack.c.b16 %v623, %v615
    %v736 = vpack.c.b16 %v632, %v624
    %v737 = vpack.c.b16 %v633, %v625
    %v738 = vpack.c.b16 %v634, %v626
    %v739 = vpack.c.b16 %v635, %v627
    %v740 = vpack.c.b16 %v636, %v628
    %v741 = vpack.c.b16 %v637, %v629
    %v742 = vpack.c.b16 %v638, %v630
    %v743 = vpack.c.b16 %v639, %v631
    %v744 = vpack.c.b16 %v648, %v640
    %v745 = vpack.c.b16 %v649, %v641
    %v746 = vpack.c.b16 %v650, %v642
    %v747 = vpack.c.b16 %v651, %v643
    %v748 = vpack.c.b16 %v652, %v644
    %v749 = vpack.c.b16 %v653, %v645
    %v750 = vpack.c.b16 %v654, %v646
    %v751 = vpack.c.b16 %v655, %v647
    %v752 = vpack.c.b16 %v664, %v656
    %v753 = vpack.c.b16 %v665, %v657
    %v754 = vpack.c.b16 %v666, %v658
    %v755 = vpack.c.b16 %v667, %v659
    %v756 = vpack.c.b16 %v668, %v660
    %v757 = vpack.c.b16 %v669, %v661
    %v758 = vpack.c.b16 %v670, %v662
    %v759 = vpack.c.b16 %v671, %v663
    %v760 = vpack.c.b16 %v680, %v672
    %v761 = vpack.c.b16 %v681, %v673
    %v762 = vpack.c.b16 %v682, %v674
    %v763 = vpack.c.b16 %v683, %v675
    %v764 = vpack.c.b16 %v684, %v676
    %v765 = vpack.c.b16 %v685, %v677
    %v766 = vpack.c.b16 %v686, %v678
    %v767 = vpack.c.b16 %v687, %v679
    %v768 = vpack.c.b16 %v696, %v688
    %v769 = vpack.c.b16 %v697, %v689
    %v770 = vpack.c.b16 %v698, %v690
    %v771 = vpack.c.b16 %v699, %v691
    %v772 = vpack.c.b16 %v700, %v692
    %v773 = vpack.c.b16 %v701, %v693
    %v774 = vpack.c.b16 %v702, %v694
    %v775 = vpack.c.b16 %v703, %v695
    %v776 = vpack.c.b16 %v712, %v704
    %v777 = vpack.c.b16 %v713, %v705
    %v778 = vpack.c.b16 %v714, %v706
    %v779 = vpack.c.b16 %v715, %v707
    %v780 = vpack.c.b16 %v716, %v708
    %v781 = vpack.c.b16 %v717, %v709
    %v782 = vpack.c.b16 %v718, %v710
    %v783 = vpack.c.b16 %v719, %v711
    %848 = vmatprep.subr.bf16.mxu0 %v777
    %849 = vmatpush1.bf16.msra.mxu0 %v776
    %850 = vmatprep.subr.bf16.mxu0 %v769
    %851 = vmatpush1.bf16.msra.mxu0 %v768
    %852 = vmatprep.subr.bf16.mxu0 %v761
    %853 = vmatpush1.bf16.msra.mxu0 %v760
    %854 = vmatprep.subr.bf16.mxu0 %v753
    %855 = vmatpush1.bf16.msra.mxu0 %v752
    %856 = vmatprep.subr.bf16.mxu0 %v745
    %857 = vmatpush1.bf16.msra.mxu0 %v744
    %858 = vmatprep.subr.bf16.mxu0 %v737
    %859 = vmatpush1.bf16.msra.mxu0 %v736
    %860 = vmatprep.subr.bf16.mxu0 %v729
    %861 = vmatpush1.bf16.msra.mxu0 %v728
    %862 = vmatprep.subr.bf16.mxu0 %v721
    %863 = vmatpush1.bf16.msra.mxu0 %v720
    %864 = vmatprep.subr.bf16.mxu0 0
    %865 = vmatpush2.bf16.msra.mxu0 0
    %866 = vmatprep.subr.bf16.mxu0 0
    %867 = vmatpush2.bf16.msra.mxu0 0
    %868 = vmatprep.subr.bf16.mxu0 0
    %869 = vmatpush2.bf16.msra.mxu0 0
    %870 = vmatprep.subr.bf16.mxu0 0
    %871 = vmatpush2.bf16.msra.mxu0 0
    %872 = vmatprep.subr.bf16.mxu0 0
    %873 = vmatpush2.bf16.msra.mxu0 0
    %874 = vmatprep.subr.bf16.mxu0 0
    %875 = vmatpush2.bf16.msra.mxu0 0
    %876 = vmatprep.subr.bf16.mxu0 0
    %877 = vmatpush2.bf16.msra.mxu0 0
    %878 = vmatprep.subr.bf16.mxu0 0
    %879 = vmatpush2.bf16.msra.mxu0 0
    %880 = vmatprep.mubr.bf16.mxu0 0
    %881 = vmatmul.mubr.bf16.gmra.mxu0 %v418
    %v882 = vpop.f32.mrf.mxu0
    %v883 = vadd.f32 %v491, %v882
    %v884 = vpop.f32.mrf.mxu0
    %v885 = vadd.f32 %v495, %v884
    %v886 = vpop.f32.mrf.mxu0
    %v887 = vadd.f32 %v491, %v886
    %v888 = vpop.f32.mrf.mxu0
    %v889 = vadd.f32 %v495, %v888
    %890 = vmatprep.mubr.bf16.mxu0 0
    %891 = vmatmul.mubr.bf16.gmra.mxu0 %v419
    %v892 = vpop.f32.mrf.mxu0
    %v893 = vadd.f32 %v491, %v892
    %v894 = vpop.f32.mrf.mxu0
    %v895 = vadd.f32 %v495, %v894
    %v896 = vpop.f32.mrf.mxu0
    %v897 = vadd.f32 %v491, %v896
    %v898 = vpop.f32.mrf.mxu0
    %v899 = vadd.f32 %v495, %v898
    %900 = vmatprep.mubr.bf16.mxu0 0
    %901 = vmatmul.mubr.bf16.gmra.mxu0 %v420
    %v902 = vpop.f32.mrf.mxu0
    %v903 = vadd.f32 %v491, %v902
    %v904 = vpop.f32.mrf.mxu0
    %v905 = vadd.f32 %v495, %v904
    %v906 = vpop.f32.mrf.mxu0
    %v907 = vadd.f32 %v491, %v906
    %v908 = vpop.f32.mrf.mxu0
    %v909 = vadd.f32 %v495, %v908
    %910 = vmatprep.mubr.bf16.mxu0 0
    %911 = vmatmul.mubr.bf16.gmra.mxu0 %v421
    %v912 = vpop.f32.mrf.mxu0
    %v913 = vadd.f32 %v491, %v912
    %v914 = vpop.f32.mrf.mxu0
    %v915 = vadd.f32 %v495, %v914
    %v916 = vpop.f32.mrf.mxu0
    %v917 = vadd.f32 %v491, %v916
    %v918 = vpop.f32.mrf.mxu0
    %v919 = vadd.f32 %v495, %v918
    %920 = vdwg.mxu0
    %921 = vmatprep.subr.bf16.mxu0 %v779
    %922 = vmatpush1.bf16.msra.mxu0 %v778
    %923 = vmatprep.subr.bf16.mxu0 %v771
    %924 = vmatpush1.bf16.msra.mxu0 %v770
    %925 = vmatprep.subr.bf16.mxu0 %v763
    %926 = vmatpush1.bf16.msra.mxu0 %v762
    %927 = vmatprep.subr.bf16.mxu0 %v755
    %928 = vmatpush1.bf16.msra.mxu0 %v754
    %929 = vmatprep.subr.bf16.mxu0 %v747
    %930 = vmatpush1.bf16.msra.mxu0 %v746
    %931 = vmatprep.subr.bf16.mxu0 %v739
    %932 = vmatpush1.bf16.msra.mxu0 %v738
    %933 = vmatprep.subr.bf16.mxu0 %v731
    %934 = vmatpush1.bf16.msra.mxu0 %v730
    %935 = vmatprep.subr.bf16.mxu0 %v723
    %936 = vmatpush1.bf16.msra.mxu0 %v722
    %937 = vmatprep.subr.bf16.mxu0 0
    %938 = vmatpush2.bf16.msra.mxu0 0
    %939 = vmatprep.subr.bf16.mxu0 0
    %940 = vmatpush2.bf16.msra.mxu0 0
    %941 = vmatprep.subr.bf16.mxu0 0
    %942 = vmatpush2.bf16.msra.mxu0 0
    %943 = vmatprep.subr.bf16.mxu0 0
    %944 = vmatpush2.bf16.msra.mxu0 0
    %945 = vmatprep.subr.bf16.mxu0 0
    %946 = vmatpush2.bf16.msra.mxu0 0
    %947 = vmatprep.subr.bf16.mxu0 0
    %948 = vmatpush2.bf16.msra.mxu0 0
    %949 = vmatprep.subr.bf16.mxu0 0
    %950 = vmatpush2.bf16.msra.mxu0 0
    %951 = vmatprep.subr.bf16.mxu0 0
    %952 = vmatpush2.bf16.msra.mxu0 0
    %953 = vmatprep.mubr.bf16.mxu0 0
    %954 = vmatmul.mubr.bf16.gmra.mxu0 %v418
    %v955 = vpop.f32.mrf.mxu0
    %v956 = vadd.f32 %v499, %v955
    %v957 = vpop.f32.mrf.mxu0
    %v958 = vadd.f32 %v503, %v957
    %v959 = vpop.f32.mrf.mxu0
    %v960 = vadd.f32 %v499, %v959
    %v961 = vpop.f32.mrf.mxu0
    %v962 = vadd.f32 %v503, %v961
    %963 = vmatprep.mubr.bf16.mxu0 0
    %964 = vmatmul.mubr.bf16.gmra.mxu0 %v419
    %v965 = vpop.f32.mrf.mxu0
    %v966 = vadd.f32 %v499, %v965
    %v967 = vpop.f32.mrf.mxu0
    %v968 = vadd.f32 %v503, %v967
    %v969 = vpop.f32.mrf.mxu0
    %v970 = vadd.f32 %v499, %v969
    %v971 = vpop.f32.mrf.mxu0
    %v972 = vadd.f32 %v503, %v971
    %973 = vmatprep.mubr.bf16.mxu0 0
    %974 = vmatmul.mubr.bf16.gmra.mxu0 %v420
    %v975 = vpop.f32.mrf.mxu0
    %v976 = vadd.f32 %v499, %v975
    %v977 = vpop.f32.mrf.mxu0
    %v978 = vadd.f32 %v503, %v977
    %v979 = vpop.f32.mrf.mxu0
    %v980 = vadd.f32 %v499, %v979
    %v981 = vpop.f32.mrf.mxu0
    %v982 = vadd.f32 %v503, %v981
    %983 = vmatprep.mubr.bf16.mxu0 0
    %984 = vmatmul.mubr.bf16.gmra.mxu0 %v421
    %v985 = vpop.f32.mrf.mxu0
    %v986 = vadd.f32 %v499, %v985
    %v987 = vpop.f32.mrf.mxu0
    %v988 = vadd.f32 %v503, %v987
    %v989 = vpop.f32.mrf.mxu0
    %v990 = vadd.f32 %v499, %v989
    %v991 = vpop.f32.mrf.mxu0
    %v992 = vadd.f32 %v503, %v991
    %993 = vdwg.mxu0
    %994 = vmatprep.subr.bf16.mxu0 %v781
    %995 = vmatpush1.bf16.msra.mxu0 %v780
    %996 = vmatprep.subr.bf16.mxu0 %v773
    %997 = vmatpush1.bf16.msra.mxu0 %v772
    %998 = vmatprep.subr.bf16.mxu0 %v765
    %999 = vmatpush1.bf16.msra.mxu0 %v764
    %1000 = vmatprep.subr.bf16.mxu0 %v757
    %1001 = vmatpush1.bf16.msra.mxu0 %v756
    %1002 = vmatprep.subr.bf16.mxu0 %v749
    %1003 = vmatpush1.bf16.msra.mxu0 %v748
    %1004 = vmatprep.subr.bf16.mxu0 %v741
    %1005 = vmatpush1.bf16.msra.mxu0 %v740
    %1006 = vmatprep.subr.bf16.mxu0 %v733
    %1007 = vmatpush1.bf16.msra.mxu0 %v732
    %1008 = vmatprep.subr.bf16.mxu0 %v725
    %1009 = vmatpush1.bf16.msra.mxu0 %v724
    %1010 = vmatprep.subr.bf16.mxu0 0
    %1011 = vmatpush2.bf16.msra.mxu0 0
    %1012 = vmatprep.subr.bf16.mxu0 0
    %1013 = vmatpush2.bf16.msra.mxu0 0
    %1014 = vmatprep.subr.bf16.mxu0 0
    %1015 = vmatpush2.bf16.msra.mxu0 0
    %1016 = vmatprep.subr.bf16.mxu0 0
    %1017 = vmatpush2.bf16.msra.mxu0 0
    %1018 = vmatprep.subr.bf16.mxu0 0
    %1019 = vmatpush2.bf16.msra.mxu0 0
    %1020 = vmatprep.subr.bf16.mxu0 0
    %1021 = vmatpush2.bf16.msra.mxu0 0
    %1022 = vmatprep.subr.bf16.mxu0 0
    %1023 = vmatpush2.bf16.msra.mxu0 0
    %1024 = vmatprep.subr.bf16.mxu0 0
    %1025 = vmatpush2.bf16.msra.mxu0 0
    %1026 = vmatprep.mubr.bf16.mxu0 0
    %1027 = vmatmul.mubr.bf16.gmra.mxu0 %v418
    %v1028 = vpop.f32.mrf.mxu0
    %v1029 = vadd.f32 %v507, %v1028
    %v1030 = vpop.f32.mrf.mxu0
    %v1031 = vadd.f32 %v511, %v1030
    %v1032 = vpop.f32.mrf.mxu0
    %v1033 = vadd.f32 %v507, %v1032
    %v1034 = vpop.f32.mrf.mxu0
    %v1035 = vadd.f32 %v511, %v1034
    %1036 = vmatprep.mubr.bf16.mxu0 0
    %1037 = vmatmul.mubr.bf16.gmra.mxu0 %v419
    %v1038 = vpop.f32.mrf.mxu0
    %v1039 = vadd.f32 %v507, %v1038
    %v1040 = vpop.f32.mrf.mxu0
    %v1041 = vadd.f32 %v511, %v1040
    %v1042 = vpop.f32.mrf.mxu0
    %v1043 = vadd.f32 %v507, %v1042
    %v1044 = vpop.f32.mrf.mxu0
    %v1045 = vadd.f32 %v511, %v1044
    %1046 = vmatprep.mubr.bf16.mxu0 0
    %1047 = vmatmul.mubr.bf16.gmra.mxu0 %v420
    %v1048 = vpop.f32.mrf.mxu0
    %v1049 = vadd.f32 %v507, %v1048
    %v1050 = vpop.f32.mrf.mxu0
    %v1051 = vadd.f32 %v511, %v1050
    %v1052 = vpop.f32.mrf.mxu0
    %v1053 = vadd.f32 %v507, %v1052
    %v1054 = vpop.f32.mrf.mxu0
    %v1055 = vadd.f32 %v511, %v1054
    %1056 = vmatprep.mubr.bf16.mxu0 0
    %1057 = vmatmul.mubr.bf16.gmra.mxu0 %v421
    %v1058 = vpop.f32.mrf.mxu0
    %v1059 = vadd.f32 %v507, %v1058
    %v1060 = vpop.f32.mrf.mxu0
    %v1061 = vadd.f32 %v511, %v1060
    %v1062 = vpop.f32.mrf.mxu0
    %v1063 = vadd.f32 %v507, %v1062
    %v1064 = vpop.f32.mrf.mxu0
    %v1065 = vadd.f32 %v511, %v1064
    %1066 = vdwg.mxu0
    %1067 = vmatprep.subr.bf16.mxu0 %v783
    %1068 = vmatpush1.bf16.msra.mxu0 %v782
    %1069 = vmatprep.subr.bf16.mxu0 %v775
    %1070 = vmatpush1.bf16.msra.mxu0 %v774
    %1071 = vmatprep.subr.bf16.mxu0 %v767
    %1072 = vmatpush1.bf16.msra.mxu0 %v766
    %1073 = vmatprep.subr.bf16.mxu0 %v759
    %1074 = vmatpush1.bf16.msra.mxu0 %v758
    %1075 = vmatprep.subr.bf16.mxu0 %v751
    %1076 = vmatpush1.bf16.msra.mxu0 %v750
    %1077 = vmatprep.subr.bf16.mxu0 %v743
    %1078 = vmatpush1.bf16.msra.mxu0 %v742
    %1079 = vmatprep.subr.bf16.mxu0 %v735
    %1080 = vmatpush1.bf16.msra.mxu0 %v734
    %1081 = vmatprep.subr.bf16.mxu0 %v727
    %1082 = vmatpush1.bf16.msra.mxu0 %v726
    %1083 = vmatprep.subr.bf16.mxu0 0
    %1084 = vmatpush2.bf16.msra.mxu0 0
    %1085 = vmatprep.subr.bf16.mxu0 0
    %1086 = vmatpush2.bf16.msra.mxu0 0
    %1087 = vmatprep.subr.bf16.mxu0 0
    %1088 = vmatpush2.bf16.msra.mxu0 0
    %1089 = vmatprep.subr.bf16.mxu0 0
    %1090 = vmatpush2.bf16.msra.mxu0 0
    %1091 = vmatprep.subr.bf16.mxu0 0
    %1092 = vmatpush2.bf16.msra.mxu0 0
    %1093 = vmatprep.subr.bf16.mxu0 0
    %1094 = vmatpush2.bf16.msra.mxu0 0
    %1095 = vmatprep.subr.bf16.mxu0 0
    %1096 = vmatpush2.bf16.msra.mxu0 0
    %1097 = vmatprep.subr.bf16.mxu0 0
    %1098 = vmatpush2.bf16.msra.mxu0 0
    %1099 = vmatprep.mubr.bf16.mxu0 0
    %1100 = vmatmul.mubr.bf16.gmra.mxu0 %v418
    %v1101 = vpop.f32.mrf.mxu0
    %v1102 = vadd.f32 %v515, %v1101
    %v1103 = vpop.f32.mrf.mxu0
    %v1104 = vadd.f32 %v519, %v1103
    %v1105 = vpop.f32.mrf.mxu0
    %v1106 = vadd.f32 %v515, %v1105
    %v1107 = vpop.f32.mrf.mxu0
    %v1108 = vadd.f32 %v519, %v1107
    %1109 = vmatprep.mubr.bf16.mxu0 0
    %1110 = vmatmul.mubr.bf16.gmra.mxu0 %v419
    %v1111 = vpop.f32.mrf.mxu0
    %v1112 = vadd.f32 %v515, %v1111
    %v1113 = vpop.f32.mrf.mxu0
    %v1114 = vadd.f32 %v519, %v1113
    %v1115 = vpop.f32.mrf.mxu0
    %v1116 = vadd.f32 %v515, %v1115
    %v1117 = vpop.f32.mrf.mxu0
    %v1118 = vadd.f32 %v519, %v1117
    %1119 = vmatprep.mubr.bf16.mxu0 0
    %1120 = vmatmul.mubr.bf16.gmra.mxu0 %v420
    %v1121 = vpop.f32.mrf.mxu0
    %v1122 = vadd.f32 %v515, %v1121
    %v1123 = vpop.f32.mrf.mxu0
    %v1124 = vadd.f32 %v519, %v1123
    %v1125 = vpop.f32.mrf.mxu0
    %v1126 = vadd.f32 %v515, %v1125
    %v1127 = vpop.f32.mrf.mxu0
    %v1128 = vadd.f32 %v519, %v1127
    %1129 = vmatprep.mubr.bf16.mxu0 0
    %1130 = vmatmul.mubr.bf16.gmra.mxu0 %v421
    %v1131 = vpop.f32.mrf.mxu0
    %v1132 = vadd.f32 %v515, %v1131
    %v1133 = vpop.f32.mrf.mxu0
    %v1134 = vadd.f32 %v519, %v1133
    %v1135 = vpop.f32.mrf.mxu0
    %v1136 = vadd.f32 %v515, %v1135
    %v1137 = vpop.f32.mrf.mxu0
    %v1138 = vadd.f32 %v519, %v1137
    %1139 = vdwg.mxu0
    %v1140 = vmax.f32 %v883, 0.0
    %v1141 = vmax.f32 %v885, 0.0
    %v1142 = vmax.f32 %v956, 0.0
    %v1143 = vmax.f32 %v958, 0.0
    %v1144 = vmax.f32 %v1029, 0.0
    %v1145 = vmax.f32 %v1031, 0.0
    %v1146 = vmax.f32 %v1102, 0.0
    %v1147 = vmax.f32 %v1104, 0.0
    %v1148 = vmax.f32 %v887, 0.0
    %v1149 = vmax.f32 %v889, 0.0
    %v1150 = vmax.f32 %v960, 0.0
    %v1151 = vmax.f32 %v962, 0.0
    %v1152 = vmax.f32 %v1033, 0.0
    %v1153 = vmax.f32 %v1035, 0.0
    %v1154 = vmax.f32 %v1106, 0.0
    %v1155 = vmax.f32 %v1108, 0.0
    %v1156 = vmax.f32 %v893, 0.0
    %v1157 = vmax.f32 %v895, 0.0
    %v1158 = vmax.f32 %v966, 0.0
    %v1159 = vmax.f32 %v968, 0.0
    %v1160 = vmax.f32 %v1039, 0.0
    %v1161 = vmax.f32 %v1041, 0.0
    %v1162 = vmax.f32 %v1112, 0.0
    %v1163 = vmax.f32 %v1114, 0.0
    %v1164 = vmax.f32 %v897, 0.0
    %v1165 = vmax.f32 %v899, 0.0
    %v1166 = vmax.f32 %v970, 0.0
    %v1167 = vmax.f32 %v972, 0.0
    %v1168 = vmax.f32 %v1043, 0.0
    %v1169 = vmax.f32 %v1045, 0.0
    %v1170 = vmax.f32 %v1116, 0.0
    %v1171 = vmax.f32 %v1118, 0.0
    %v1172 = vmax.f32 %v903, 0.0
    %v1173 = vmax.f32 %v905, 0.0
    %v1174 = vmax.f32 %v976, 0.0
    %v1175 = vmax.f32 %v978, 0.0
    %v1176 = vmax.f32 %v1049, 0.0
    %v1177 = vmax.f32 %v1051, 0.0
    %v1178 = vmax.f32 %v1122, 0.0
    %v1179 = vmax.f32 %v1124, 0.0
    %v1180 = vmax.f32 %v907, 0.0
    %v1181 = vmax.f32 %v909, 0.0
    %v1182 = vmax.f32 %v980, 0.0
    %v1183 = vmax.f32 %v982, 0.0
    %v1184 = vmax.f32 %v1053, 0.0
    %v1185 = vmax.f32 %v1055, 0.0
    %v1186 = vmax.f32 %v1126, 0.0
    %v1187 = vmax.f32 %v1128, 0.0
    %v1188 = vmax.f32 %v913, 0.0
    %v1189 = vmax.f32 %v915, 0.0
    %v1190 = vmax.f32 %v986, 0.0
    %v1191 = vmax.f32 %v988, 0.0
    %v1192 = vmax.f32 %v1059, 0.0
    %v1193 = vmax.f32 %v1061, 0.0
    %v1194 = vmax.f32 %v1132, 0.0
    %v1195 = vmax.f32 %v1134, 0.0
    %v1196 = vmax.f32 %v917, 0.0
    %v1197 = vmax.f32 %v919, 0.0
    %v1198 = vmax.f32 %v990, 0.0
    %v1199 = vmax.f32 %v992, 0.0
    %v1200 = vmax.f32 %v1063, 0.0
    %v1201 = vmax.f32 %v1065, 0.0
    %v1202 = vmax.f32 %v1136, 0.0
    %v1203 = vmax.f32 %v1138, 0.0
    %v1204 = vmax.f32 %v1140, %v1148
    %v1205 = vmax.f32 %v1204, %v1156
    %v1206 = vmax.f32 %v1205, %v1164
    %v1207 = vrot.slane %v1206, 4
    %v1208 = vmax.f32 %v1206, %v1207
    %v1209 = vrot.slane %v1208, 2
    %v1210 = vmax.f32 %v1208, %v1209
    %v1211 = vrot.slane %v1210, 1
    %v1212 = vmax.f32 %v1210, %v1211
    %v1213 = vmax.f32 %v1141, %v1149
    %v1214 = vmax.f32 %v1213, %v1157
    %v1215 = vmax.f32 %v1214, %v1165
    %v1216 = vrot.slane %v1215, 4
    %v1217 = vmax.f32 %v1215, %v1216
    %v1218 = vrot.slane %v1217, 2
    %v1219 = vmax.f32 %v1217, %v1218
    %v1220 = vrot.slane %v1219, 1
    %v1221 = vmax.f32 %v1219, %v1220
    %v1222 = vmax.f32 %v1142, %v1150
    %v1223 = vmax.f32 %v1222, %v1158
    %v1224 = vmax.f32 %v1223, %v1166
    %v1225 = vrot.slane %v1224, 4
    %v1226 = vmax.f32 %v1224, %v1225
    %v1227 = vrot.slane %v1226, 2
    %v1228 = vmax.f32 %v1226, %v1227
    %v1229 = vrot.slane %v1228, 1
    %v1230 = vmax.f32 %v1228, %v1229
    %v1231 = vmax.f32 %v1143, %v1151
    %v1232 = vmax.f32 %v1231, %v1159
    %v1233 = vmax.f32 %v1232, %v1167
    %v1234 = vrot.slane %v1233, 4
    %v1235 = vmax.f32 %v1233, %v1234
    %v1236 = vrot.slane %v1235, 2
    %v1237 = vmax.f32 %v1235, %v1236
    %v1238 = vrot.slane %v1237, 1
    %v1239 = vmax.f32 %v1237, %v1238
    %v1240 = vmax.f32 %v1144, %v1152
    %v1241 = vmax.f32 %v1240, %v1160
    %v1242 = vmax.f32 %v1241, %v1168
    %v1243 = vrot.slane %v1242, 4
    %v1244 = vmax.f32 %v1242, %v1243
    %v1245 = vrot.slane %v1244, 2
    %v1246 = vmax.f32 %v1244, %v1245
    %v1247 = vrot.slane %v1246, 1
    %v1248 = vmax.f32 %v1246, %v1247
    %v1249 = vmax.f32 %v1145, %v1153
    %v1250 = vmax.f32 %v1249, %v1161
    %v1251 = vmax.f32 %v1250, %v1169
    %v1252 = vrot.slane %v1251, 4
    %v1253 = vmax.f32 %v1251, %v1252
    %v1254 = vrot.slane %v1253, 2
    %v1255 = vmax.f32 %v1253, %v1254
    %v1256 = vrot.slane %v1255, 1
    %v1257 = vmax.f32 %v1255, %v1256
    %v1258 = vmax.f32 %v1146, %v1154
    %v1259 = vmax.f32 %v1258, %v1162
    %v1260 = vmax.f32 %v1259, %v1170
    %v1261 = vrot.slane %v1260, 4
    %v1262 = vmax.f32 %v1260, %v1261
    %v1263 = vrot.slane %v1262, 2
    %v1264 = vmax.f32 %v1262, %v1263
    %v1265 = vrot.slane %v1264, 1
    %v1266 = vmax.f32 %v1264, %v1265
    %v1267 = vmax.f32 %v1147, %v1155
    %v1268 = vmax.f32 %v1267, %v1163
    %v1269 = vmax.f32 %v1268, %v1171
    %v1270 = vrot.slane %v1269, 4
    %v1271 = vmax.f32 %v1269, %v1270
    %v1272 = vrot.slane %v1271, 2
    %v1273 = vmax.f32 %v1271, %v1272
    %v1274 = vrot.slane %v1273, 1
    %v1275 = vmax.f32 %v1273, %v1274
    %v1276 = vmax.f32 %v1172, %v1180
    %v1277 = vmax.f32 %v1276, %v1188
    %v1278 = vmax.f32 %v1277, %v1196
    %v1279 = vrot.slane %v1278, 4
    %v1280 = vmax.f32 %v1278, %v1279
    %v1281 = vrot.slane %v1280, 2
    %v1282 = vmax.f32 %v1280, %v1281
    %v1283 = vrot.slane %v1282, 1
    %v1284 = vmax.f32 %v1282, %v1283
    %v1285 = vmax.f32 %v1173, %v1181
    %v1286 = vmax.f32 %v1285, %v1189
    %v1287 = vmax.f32 %v1286, %v1197
    %v1288 = vrot.slane %v1287, 4
    %v1289 = vmax.f32 %v1287, %v1288
    %v1290 = vrot.slane %v1289, 2
    %v1291 = vmax.f32 %v1289, %v1290
    %v1292 = vrot.slane %v1291, 1
    %v1293 = vmax.f32 %v1291, %v1292
    %v1294 = vmax.f32 %v1174, %v1182
    %v1295 = vmax.f32 %v1294, %v1190
    %v1296 = vmax.f32 %v1295, %v1198
    %v1297 = vrot.slane %v1296, 4
    %v1298 = vmax.f32 %v1296, %v1297
    %v1299 = vrot.slane %v1298, 2
    %v1300 = vmax.f32 %v1298, %v1299
    %v1301 = vrot.slane %v1300, 1
    %v1302 = vmax.f32 %v1300, %v1301
    %v1303 = vmax.f32 %v1175, %v1183
    %v1304 = vmax.f32 %v1303, %v1191
    %v1305 = vmax.f32 %v1304, %v1199
    %v1306 = vrot.slane %v1305, 4
    %v1307 = vmax.f32 %v1305, %v1306
    %v1308 = vrot.slane %v1307, 2
    %v1309 = vmax.f32 %v1307, %v1308
    %v1310 = vrot.slane %v1309, 1
    %v1311 = vmax.f32 %v1309, %v1310
    %v1312 = vmax.f32 %v1176, %v1184
    %v1313 = vmax.f32 %v1312, %v1192
    %v1314 = vmax.f32 %v1313, %v1200
    %v1315 = vrot.slane %v1314, 4
    %v1316 = vmax.f32 %v1314, %v1315
    %v1317 = vrot.slane %v1316, 2
    %v1318 = vmax.f32 %v1316, %v1317
    %v1319 = vrot.slane %v1318, 1
    %v1320 = vmax.f32 %v1318, %v1319
    %v1321 = vmax.f32 %v1177, %v1185
    %v1322 = vmax.f32 %v1321, %v1193
    %v1323 = vmax.f32 %v1322, %v1201
    %v1324 = vrot.slane %v1323, 4
    %v1325 = vmax.f32 %v1323, %v1324
    %v1326 = vrot.slane %v1325, 2
    %v1327 = vmax.f32 %v1325, %v1326
    %v1328 = vrot.slane %v1327, 1
    %v1329 = vmax.f32 %v1327, %v1328
    %v1330 = vmax.f32 %v1178, %v1186
    %v1331 = vmax.f32 %v1330, %v1194
    %v1332 = vmax.f32 %v1331, %v1202
    %v1333 = vrot.slane %v1332, 4
    %v1334 = vmax.f32 %v1332, %v1333
    %v1335 = vrot.slane %v1334, 2
    %v1336 = vmax.f32 %v1334, %v1335
    %v1337 = vrot.slane %v1336, 1
    %v1338 = vmax.f32 %v1336, %v1337
    %v1339 = vmax.f32 %v1179, %v1187
    %v1340 = vmax.f32 %v1339, %v1195
    %v1341 = vmax.f32 %v1340, %v1203
    %v1342 = vrot.slane %v1341, 4
    %v1343 = vmax.f32 %v1341, %v1342
    %v1344 = vrot.slane %v1343, 2
    %v1345 = vmax.f32 %v1343, %v1344
    %v1346 = vrot.slane %v1345, 1
    %v1347 = vmax.f32 %v1345, %v1346
    %v1364 = vcombine.low %v1212, %v1221
    %v1365 = vcombine.low %v1230, %v1239
    %v1367 = vunpack.c.l.s4 1983009808
    %v1368 = vunpack.c.0.s8 %v1367
    %v1369 = vlaneseq
    %v1370 = vshrl.u32 %v1369, 7
    %v1371 = vsub.s32 %v1368, %v1370
    %v1372 = vrot.slane %v1364, %v1371
    %v1374 = vunpack.c.l.s4 1983009808
    %v1375 = vunpack.c.0.s8 %v1374
    %v1376 = vlaneseq
    %v1377 = vshrl.u32 %v1376, 7
    %v1378 = vsub.s32 %v1375, %v1377
    %v1379 = vrot.slane %v1365, %v1378
    %v1380 = vcombine.low %v1372, %v1379
    %v1381 = vcombine.low %v1248, %v1257
    %v1382 = vcombine.low %v1266, %v1275
    %v1384 = vunpack.c.l.s4 1983009808
    %v1385 = vunpack.c.0.s8 %v1384
    %v1386 = vlaneseq
    %v1387 = vshrl.u32 %v1386, 7
    %v1388 = vsub.s32 %v1385, %v1387
    %v1389 = vrot.slane %v1381, %v1388
    %v1391 = vunpack.c.l.s4 1983009808
    %v1392 = vunpack.c.0.s8 %v1391
    %v1393 = vlaneseq
    %v1394 = vshrl.u32 %v1393, 7
    %v1395 = vsub.s32 %v1392, %v1394
    %v1396 = vrot.slane %v1382, %v1395
    %v1397 = vcombine.low %v1389, %v1396
    %v1398 = vcombine.low %v1284, %v1293
    %v1399 = vcombine.low %v1302, %v1311
    %v1401 = vunpack.c.l.s4 1983009808
    %v1402 = vunpack.c.0.s8 %v1401
    %v1403 = vlaneseq
    %v1404 = vshrl.u32 %v1403, 7
    %v1405 = vsub.s32 %v1402, %v1404
    %v1406 = vrot.slane %v1398, %v1405
    %v1408 = vunpack.c.l.s4 1983009808
    %v1409 = vunpack.c.0.s8 %v1408
    %v1410 = vlaneseq
    %v1411 = vshrl.u32 %v1410, 7
    %v1412 = vsub.s32 %v1409, %v1411
    %v1413 = vrot.slane %v1399, %v1412
    %v1414 = vcombine.low %v1406, %v1413
    %v1415 = vcombine.low %v1320, %v1329
    %v1416 = vcombine.low %v1338, %v1347
    %v1418 = vunpack.c.l.s4 1983009808
    %v1419 = vunpack.c.0.s8 %v1418
    %v1420 = vlaneseq
    %v1421 = vshrl.u32 %v1420, 7
    %v1422 = vsub.s32 %v1419, %v1421
    %v1423 = vrot.slane %v1415, %v1422
    %v1425 = vunpack.c.l.s4 1983009808
    %v1426 = vunpack.c.0.s8 %v1425
    %v1427 = vlaneseq
    %v1428 = vshrl.u32 %v1427, 7
    %v1429 = vsub.s32 %v1426, %v1428
    %v1430 = vrot.slane %v1416, %v1429
    %v1431 = vcombine.low %v1423, %v1430
    %vm1432 = vcmask 1044484
    %v1433 = vsel %vm1432, %v1380, %v1380
    %vm1434 = vcmask 1046534
    %v1435 = vsel %vm1434, %v1380, %v1433
    %v1436 = vrot.slane %v1414, 7
    %vm1437 = vcmask 1041409
    %v1438 = vsel %vm1437, %v1436, %v1435
    %vm1439 = vcmask 1043459
    %v1440 = vsel %vm1439, %v1436, %v1438
    %vm1441 = vcmask 1045509
    %v1442 = vsel %vm1441, %v1436, %v1440
    %vm1443 = vcmask 1047559
    %v1444 = vsel %vm1443, %v1436, %v1442
    %v1445 = vsel %vm1432, %v1397, %v1397
    %v1446 = vsel %vm1434, %v1397, %v1445
    %v1447 = vrot.slane %v1431, 7
    %v1448 = vsel %vm1437, %v1447, %v1446
    %v1449 = vsel %vm1439, %v1447, %v1448
    %v1450 = vsel %vm1441, %v1447, %v1449
    %v1451 = vsel %vm1443, %v1447, %v1450
    %1454 = vst [vmem:[%s7] sm:$0xff] %v1444
    %1455 = vst [vmem:[%s7 + $0x8] sm:$0xff] %v1451
    // Predicated region
    $region58: #{stnkd_forward.2} parent=1 // pred_check
      _
    $region59: #{stnkd_forward.2} parent=1 // pred_check_branch
      %1457 = sbr.rel (0) target = $region61
    $region60: #{stnkd_forward.2} parent=1 // pred_region
      _
    $region61: #{stnkd_forward.2} parent=1 // pred_fallthru
      _
    // Predicated region
    $region62: #{stnkd_forward.2} parent=1 // pred_check
      _
    $region63: #{stnkd_forward.2} parent=1 // pred_check_branch
      %1459 = sbr.rel (0) target = $region65
    $region64: #{stnkd_forward.2} parent=1 // pred_region
      _
    $region65: #{stnkd_forward.2} parent=1 // pred_fallthru
      _
    %1460 = vsyncpa [#allocation3], 1
    %1461 = vsyncpa [#allocation5], 1
    %1462 = vsyncpa [#allocation8], 1
    %1463 = vsyncpa [#allocation11], 1

// kernel: stnkd_forward.3
$region0: #{stnkd_forward.3}
  #allocation0 [shape = 'u32[]', space=smem, size = 0x4, offset = 0x4, fixed_abs, tag = 'smem constant byte address 0x4 - core index']
  #allocation1 [shape = 'u32[144,128]{1,0:T(1,128)}', space=vmem, size = 0x12000, scoped, tag = 'internal scratch']
  %s0 = inlined_call_operand.vmem [shape: f32[2,1024], index: 0, kind: input, shape index: {}]
  %s1 = inlined_call_operand.hbm [shape: bf16[1024,512], index: 1, kind: input, shape index: {}]
  %s2 = inlined_call_operand.vmem [shape: f32[1,512], index: 2, kind: input, shape index: {}]
  %s3 = inlined_call_operand.vmem [shape: bf16[512,256], index: 3, kind: input, shape index: {}]
  %s4 = inlined_call_operand.vmem [shape: f32[1,256], index: 4, kind: input, shape index: {}]
  %s5 = inlined_call_operand.hbm [shape: bf16[256,256], index: 5, kind: input, shape index: {}]
  %s6 = inlined_call_operand.vmem [shape: f32[1,256], index: 6, kind: input, shape index: {}]
  %s7 = inlined_call_operand.vmem [shape: f32[2,256], index: 7, kind: output, shape index: {}]
  %s8 = sld [smem:[#allocation0]]
  $region46: #{stnkd_forward.3} parent=0
    _
  %s10 = ssub.s32 1, %s8
  %s11 = scalar_select 0, %s10, %s8
  $region1: #{stnkd_forward.3} parent=0
    #allocation2 [shape = 'u8[1048576]{0}', space=vmem, size = 0x100000, scoped, tag = 'input window, operand 1, single buffered']
    #allocation3 [shape = 's32[1]{0}', space=sflag, size = 0x4, scoped, tag = 'scoped memory for stnkd_forward.3']
    #allocation4 [shape = 'u8[131072]{0}', space=vmem, size = 0x20000, scoped, tag = 'input window, operand 5, single buffered']
    #allocation5 [shape = 's32[1]{0}', space=sflag, size = 0x4, scoped, tag = 'scoped memory for stnkd_forward.3']
    %12 = vsyncpa [#allocation3], 0
    %13 = vsyncpa [#allocation5], 0
    // Predicated region
    $region2: #{stnkd_forward.3} parent=1 // pred_check
      _
    $region3: #{stnkd_forward.3} parent=1 // pred_check_branch
      %15 = sbr.rel (0) target = $region5
    $region4: #{stnkd_forward.3} parent=1 // pred_region
      _
    $region5: #{stnkd_forward.3} parent=1 // pred_fallthru
      _
    // Predicated region
    $region6: #{stnkd_forward.3} parent=1 // pred_check
      _
    $region7: #{stnkd_forward.3} parent=1 // pred_check_branch
      %17 = sbr.rel (0) target = $region9
    $region8: #{stnkd_forward.3} parent=1 // pred_region
      %s19 = ssub.s32 32768, 32768
      %20 = vsyncadd [#allocation3], %s19
      %s21 = sshll.u32 [#allocation2], 4
      %s22 = int_to_ptr.vmem [resolvable:$true] %s21
      %27 = dma.hbm_to_vmem [thread:$0]  %s1, 32768, %s22, [#allocation3], 256, 256, 16
    $region9: #{stnkd_forward.3} parent=1 // pred_fallthru
      _
    // Predicated region
    $region10: #{stnkd_forward.3} parent=1 // pred_check
      _
    $region11: #{stnkd_forward.3} parent=1 // pred_check_branch
      %29 = sbr.rel (0) target = $region13
    $region12: #{stnkd_forward.3} parent=1 // pred_region
      _
    $region13: #{stnkd_forward.3} parent=1 // pred_fallthru
      _
    // Predicated region
    $region14: #{stnkd_forward.3} parent=1 // pred_check
      _
    $region15: #{stnkd_forward.3} parent=1 // pred_check_branch
      %31 = sbr.rel (0) target = $region17
    $region16: #{stnkd_forward.3} parent=1 // pred_region
      _
    $region17: #{stnkd_forward.3} parent=1 // pred_fallthru
      _
    // Predicated region
    $region18: #{stnkd_forward.3} parent=1 // pred_check
      _
    $region19: #{stnkd_forward.3} parent=1 // pred_check_branch
      %33 = sbr.rel (0) target = $region21
    $region20: #{stnkd_forward.3} parent=1 // pred_region
      _
    $region21: #{stnkd_forward.3} parent=1 // pred_fallthru
      _
    // Predicated region
    $region22: #{stnkd_forward.3} parent=1 // pred_check
      _
    $region23: #{stnkd_forward.3} parent=1 // pred_check_branch
      %35 = sbr.rel (0) target = $region25
    $region24: #{stnkd_forward.3} parent=1 // pred_region
      %s37 = ssub.s32 4096, 4096
      %38 = vsyncadd [#allocation5], %s37
      %s39 = sshll.u32 [#allocation4], 4
      %s40 = int_to_ptr.vmem [resolvable:$true] %s39
      %45 = dma.hbm_to_vmem [thread:$0]  %s5, 4096, %s40, [#allocation5], 128, 128, 8
    $region25: #{stnkd_forward.3} parent=1 // pred_fallthru
      _
    // Predicated region
    $region26: #{stnkd_forward.3} parent=1 // pred_check
      _
    $region27: #{stnkd_forward.3} parent=1 // pred_check_branch
      %47 = sbr.rel (0) target = $region29
    $region28: #{stnkd_forward.3} parent=1 // pred_region
      _
    $region29: #{stnkd_forward.3} parent=1 // pred_fallthru
      _
    // Predicated region
    $region30: #{stnkd_forward.3} parent=1 // pred_check
      _
    $region31: #{stnkd_forward.3} parent=1 // pred_check_branch
      %49 = sbr.rel (0) target = $region33
    $region32: #{stnkd_forward.3} parent=1 // pred_region
      %50 = dma.done [#allocation3], 32768
    $region33: #{stnkd_forward.3} parent=1 // pred_fallthru
      _
    // Predicated region
    $region34: #{stnkd_forward.3} parent=1 // pred_check
      _
    $region35: #{stnkd_forward.3} parent=1 // pred_check_branch
      %52 = sbr.rel (0) target = $region37
    $region36: #{stnkd_forward.3} parent=1 // pred_region
      %53 = dma.done [#allocation5], 4096
    $region37: #{stnkd_forward.3} parent=1 // pred_fallthru
      _
    %v54 = vld [vmem:[%s0] sm:$0xff]
    %v55 = vld [vmem:[%s0 + $0x8] sm:$0xff]
    %v58 = vcombine.high %v54, %v54
    %v60 = vunpack.c.l.s4 1983009808
    %v61 = vunpack.c.0.s8 %v60
    %v62 = vlaneseq
    %v63 = vshrl.u32 %v62, 7
    %v64 = vsub.s32 %v61, %v63
    %v65 = vrot.slane %v54, %v64
    %v67 = vunpack.c.l.s4 1983009808
    %v68 = vunpack.c.0.s8 %v67
    %v69 = vlaneseq
    %v70 = vshrl.u32 %v69, 7
    %v71 = vsub.s32 %v68, %v70
    %v72 = vrot.slane %v58, %v71
    %v73 = vcombine.high %v65, %v65
    %v74 = vcombine.high %v72, %v72
    %v75 = vcombine.high %v55, %v55
    %v77 = vunpack.c.l.s4 1983009808
    %v78 = vunpack.c.0.s8 %v77
    %v79 = vlaneseq
    %v80 = vshrl.u32 %v79, 7
    %v81 = vsub.s32 %v78, %v80
    %v82 = vrot.slane %v55, %v81
    %v84 = vunpack.c.l.s4 1983009808
    %v85 = vunpack.c.0.s8 %v84
    %v86 = vlaneseq
    %v87 = vshrl.u32 %v86, 7
    %v88 = vsub.s32 %v85, %v87
    %v89 = vrot.slane %v75, %v88
    %v90 = vcombine.high %v82, %v82
    %v91 = vcombine.high %v89, %v89
    %v100 = vpack.c.bf16 %v65, %v65
    %v101 = vpack.c.bf16 %v73, %v73
    %v102 = vpack.c.bf16 %v72, %v72
    %v103 = vpack.c.bf16 %v74, %v74
    %v104 = vpack.c.bf16 %v82, %v82
    %v105 = vpack.c.bf16 %v90, %v90
    %v106 = vpack.c.bf16 %v89, %v89
    %v107 = vpack.c.bf16 %v91, %v91
    %v108 = vld [vmem:[#allocation2] sm:$0xff]
    %v109 = vld [vmem:[#allocation2 + $0x8] sm:$0xff]
    %v110 = vld [vmem:[#allocation2 + $0x10] sm:$0xff]
    %v111 = vld [vmem:[#allocation2 + $0x18] sm:$0xff]
    %v112 = vld [vmem:[#allocation2 + $0x20] sm:$0xff]
    %v113 = vld [vmem:[#allocation2 + $0x28] sm:$0xff]
    %v114 = vld [vmem:[#allocation2 + $0x30] sm:$0xff]
    %v115 = vld [vmem:[#allocation2 + $0x38] sm:$0xff]
    %v116 = vld [vmem:[#allocation2 + $0x40] sm:$0xff]
    %v117 = vld [vmem:[#allocation2 + $0x48] sm:$0xff]
    %v118 = vld [vmem:[#allocation2 + $0x50] sm:$0xff]
    %v119 = vld [vmem:[#allocation2 + $0x58] sm:$0xff]
    %v120 = vld [vmem:[#allocation2 + $0x60] sm:$0xff]
    %v121 = vld [vmem:[#allocation2 + $0x68] sm:$0xff]
    %v122 = vld [vmem:[#allocation2 + $0x70] sm:$0xff]
    %v123 = vld [vmem:[#allocation2 + $0x78] sm:$0xff]
    %v124 = vld [vmem:[#allocation2 + $0x80] sm:$0xff]
    %v125 = vld [vmem:[#allocation2 + $0x88] sm:$0xff]
    %v126 = vld [vmem:[#allocation2 + $0x90] sm:$0xff]
    %v127 = vld [vmem:[#allocation2 + $0x98] sm:$0xff]
    %v128 = vld [vmem:[#allocation2 + $0xa0] sm:$0xff]
    %v129 = vld [vmem:[#allocation2 + $0xa8] sm:$0xff]
    %v130 = vld [vmem:[#allocation2 + $0xb0] sm:$0xff]
    %v131 = vld [vmem:[#allocation2 + $0xb8] sm:$0xff]
    %v132 = vld [vmem:[#allocation2 + $0xc0] sm:$0xff]
    %v133 = vld [vmem:[#allocation2 + $0xc8] sm:$0xff]
    %v134 = vld [vmem:[#allocation2 + $0xd0] sm:$0xff]
    %v135 = vld [vmem:[#allocation2 + $0xd8] sm:$0xff]
    %v136 = vld [vmem:[#allocation2 + $0xe0] sm:$0xff]
    %v137 = vld [vmem:[#allocation2 + $0xe8] sm:$0xff]
    %v138 = vld [vmem:[#allocation2 + $0xf0] sm:$0xff]
    %v139 = vld [vmem:[#allocation2 + $0xf8] sm:$0xff]
    %v140 = vld [vmem:[#allocation2 + $0x100] sm:$0xff]
    %v141 = vld [vmem:[#allocation2 + $0x108] sm:$0xff]
    %v142 = vld [vmem:[#allocation2 + $0x110] sm:$0xff]
    %v143 = vld [vmem:[#allocation2 + $0x118] sm:$0xff]
    %v144 = vld [vmem:[#allocation2 + $0x120] sm:$0xff]
    %v145 = vld [vmem:[#allocation2 + $0x128] sm:$0xff]
    %v146 = vld [vmem:[#allocation2 + $0x130] sm:$0xff]
    %v147 = vld [vmem:[#allocation2 + $0x138] sm:$0xff]
    %v148 = vld [vmem:[#allocation2 + $0x140] sm:$0xff]
    %v149 = vld [vmem:[#allocation2 + $0x148] sm:$0xff]
    %v150 = vld [vmem:[#allocation2 + $0x150] sm:$0xff]
    %v151 = vld [vmem:[#allocation2 + $0x158] sm:$0xff]
    %v152 = vld [vmem:[#allocation2 + $0x160] sm:$0xff]
    %v153 = vld [vmem:[#allocation2 + $0x168] sm:$0xff]
    %v154 = vld [vmem:[#allocation2 + $0x170] sm:$0xff]
    %v155 = vld [vmem:[#allocation2 + $0x178] sm:$0xff]
    %v156 = vld [vmem:[#allocation2 + $0x180] sm:$0xff]
    %v157 = vld [vmem:[#allocation2 + $0x188] sm:$0xff]
    %v158 = vld [vmem:[#allocation2 + $0x190] sm:$0xff]
    %v159 = vld [vmem:[#allocation2 + $0x198] sm:$0xff]
    %v160 = vld [vmem:[#allocation2 + $0x1a0] sm:$0xff]
    %v161 = vld [vmem:[#allocation2 + $0x1a8] sm:$0xff]
    %v162 = vld [vmem:[#allocation2 + $0x1b0] sm:$0xff]
    %v163 = vld [vmem:[#allocation2 + $0x1b8] sm:$0xff]
    %v164 = vld [vmem:[#allocation2 + $0x1c0] sm:$0xff]
    %v165 = vld [vmem:[#allocation2 + $0x1c8] sm:$0xff]
    %v166 = vld [vmem:[#allocation2 + $0x1d0] sm:$0xff]
    %v167 = vld [vmem:[#allocation2 + $0x1d8] sm:$0xff]
    %v168 = vld [vmem:[#allocation2 + $0x1e0] sm:$0xff]
    %v169 = vld [vmem:[#allocation2 + $0x1e8] sm:$0xff]
    %v170 = vld [vmem:[#allocation2 + $0x1f0] sm:$0xff]
    %v171 = vld [vmem:[#allocation2 + $0x1f8] sm:$0xff]
    %v172 = vld [vmem:[#allocation2 + $0x200] sm:$0xff]
    %v173 = vld [vmem:[#allocation2 + $0x208] sm:$0xff]
    %v174 = vld [vmem:[#allocation2 + $0x210] sm:$0xff]
    %v175 = vld [vmem:[#allocation2 + $0x218] sm:$0xff]
    %v176 = vld [vmem:[#allocation2 + $0x220] sm:$0xff]
    %v177 = vld [vmem:[#allocation2 + $0x228] sm:$0xff]
    %v178 = vld [vmem:[#allocation2 + $0x230] sm:$0xff]
    %v179 = vld [vmem:[#allocation2 + $0x238] sm:$0xff]
    %v180 = vld [vmem:[#allocation2 + $0x240] sm:$0xff]
    %v181 = vld [vmem:[#allocation2 + $0x248] sm:$0xff]
    %v182 = vld [vmem:[#allocation2 + $0x250] sm:$0xff]
    %v183 = vld [vmem:[#allocation2 + $0x258] sm:$0xff]
    %v184 = vld [vmem:[#allocation2 + $0x260] sm:$0xff]
    %v185 = vld [vmem:[#allocation2 + $0x268] sm:$0xff]
    %v186 = vld [vmem:[#allocation2 + $0x270] sm:$0xff]
    %v187 = vld [vmem:[#allocation2 + $0x278] sm:$0xff]
    %v188 = vld [vmem:[#allocation2 + $0x280] sm:$0xff]
    %v189 = vld [vmem:[#allocation2 + $0x288] sm:$0xff]
    %v190 = vld [vmem:[#allocation2 + $0x290] sm:$0xff]
    %v191 = vld [vmem:[#allocation2 + $0x298] sm:$0xff]
    %v192 = vld [vmem:[#allocation2 + $0x2a0] sm:$0xff]
    %v193 = vld [vmem:[#allocation2 + $0x2a8] sm:$0xff]
    %v194 = vld [vmem:[#allocation2 + $0x2b0] sm:$0xff]
    %v195 = vld [vmem:[#allocation2 + $0x2b8] sm:$0xff]
    %v196 = vld [vmem:[#allocation2 + $0x2c0] sm:$0xff]
    %v197 = vld [vmem:[#allocation2 + $0x2c8] sm:$0xff]
    %v198 = vld [vmem:[#allocation2 + $0x2d0] sm:$0xff]
    %v199 = vld [vmem:[#allocation2 + $0x2d8] sm:$0xff]
    %v200 = vld [vmem:[#allocation2 + $0x2e0] sm:$0xff]
    %v201 = vld [vmem:[#allocation2 + $0x2e8] sm:$0xff]
    %v202 = vld [vmem:[#allocation2 + $0x2f0] sm:$0xff]
    %v203 = vld [vmem:[#allocation2 + $0x2f8] sm:$0xff]
    %v204 = vld [vmem:[#allocation2 + $0x300] sm:$0xff]
    %v205 = vld [vmem:[#allocation2 + $0x308] sm:$0xff]
    %v206 = vld [vmem:[#allocation2 + $0x310] sm:$0xff]
    %v207 = vld [vmem:[#allocation2 + $0x318] sm:$0xff]
    %v208 = vld [vmem:[#allocation2 + $0x320] sm:$0xff]
    %v209 = vld [vmem:[#allocation2 + $0x328] sm:$0xff]
    %v210 = vld [vmem:[#allocation2 + $0x330] sm:$0xff]
    %v211 = vld [vmem:[#allocation2 + $0x338] sm:$0xff]
    %v212 = vld [vmem:[#allocation2 + $0x340] sm:$0xff]
    %v213 = vld [vmem:[#allocation2 + $0x348] sm:$0xff]
    %v214 = vld [vmem:[#allocation2 + $0x350] sm:$0xff]
    %v215 = vld [vmem:[#allocation2 + $0x358] sm:$0xff]
    %v216 = vld [vmem:[#allocation2 + $0x360] sm:$0xff]
    %v217 = vld [vmem:[#allocation2 + $0x368] sm:$0xff]
    %v218 = vld [vmem:[#allocation2 + $0x370] sm:$0xff]
    %v219 = vld [vmem:[#allocation2 + $0x378] sm:$0xff]
    %v220 = vld [vmem:[#allocation2 + $0x380] sm:$0xff]
    %v221 = vld [vmem:[#allocation2 + $0x388] sm:$0xff]
    %v222 = vld [vmem:[#allocation2 + $0x390] sm:$0xff]
    %v223 = vld [vmem:[#allocation2 + $0x398] sm:$0xff]
    %v224 = vld [vmem:[#allocation2 + $0x3a0] sm:$0xff]
    %v225 = vld [vmem:[#allocation2 + $0x3a8] sm:$0xff]
    %v226 = vld [vmem:[#allocation2 + $0x3b0] sm:$0xff]
    %v227 = vld [vmem:[#allocation2 + $0x3b8] sm:$0xff]
    %v228 = vld [vmem:[#allocation2 + $0x3c0] sm:$0xff]
    %v229 = vld [vmem:[#allocation2 + $0x3c8] sm:$0xff]
    %v230 = vld [vmem:[#allocation2 + $0x3d0] sm:$0xff]
    %v231 = vld [vmem:[#allocation2 + $0x3d8] sm:$0xff]
    %v232 = vld [vmem:[#allocation2 + $0x3e0] sm:$0xff]
    %v233 = vld [vmem:[#allocation2 + $0x3e8] sm:$0xff]
    %v234 = vld [vmem:[#allocation2 + $0x3f0] sm:$0xff]
    %v235 = vld [vmem:[#allocation2 + $0x3f8] sm:$0xff]
    %v236 = vld [vmem:[#allocation2 + $0x400] sm:$0xff]
    %v237 = vld [vmem:[#allocation2 + $0x408] sm:$0xff]
    %v238 = vld [vmem:[#allocation2 + $0x410] sm:$0xff]
    %v239 = vld [vmem:[#allocation2 + $0x418] sm:$0xff]
    %v240 = vld [vmem:[#allocation2 + $0x420] sm:$0xff]
    %v241 = vld [vmem:[#allocation2 + $0x428] sm:$0xff]
    %v242 = vld [vmem:[#allocation2 + $0x430] sm:$0xff]
    %v243 = vld [vmem:[#allocation2 + $0x438] sm:$0xff]
    %v244 = vld [vmem:[#allocation2 + $0x440] sm:$0xff]
    %v245 = vld [vmem:[#allocation2 + $0x448] sm:$0xff]
    %v246 = vld [vmem:[#allocation2 + $0x450] sm:$0xff]
    %v247 = vld [vmem:[#allocation2 + $0x458] sm:$0xff]
    %v248 = vld [vmem:[#allocation2 + $0x460] sm:$0xff]
    %v249 = vld [vmem:[#allocation2 + $0x468] sm:$0xff]
    %v250 = vld [vmem:[#allocation2 + $0x470] sm:$0xff]
    %v251 = vld [vmem:[#allocation2 + $0x478] sm:$0xff]
    %v252 = vld [vmem:[#allocation2 + $0x480] sm:$0xff]
    %v253 = vld [vmem:[#allocation2 + $0x488] sm:$0xff]
    %v254 = vld [vmem:[#allocation2 + $0x490] sm:$0xff]
    %v255 = vld [vmem:[#allocation2 + $0x498] sm:$0xff]
    %v256 = vld [vmem:[#allocation2 + $0x4a0] sm:$0xff]
    %v257 = vld [vmem:[#allocation2 + $0x4a8] sm:$0xff]
    %v258 = vld [vmem:[#allocation2 + $0x4b0] sm:$0xff]
    %v259 = vld [vmem:[#allocation2 + $0x4b8] sm:$0xff]
    %v260 = vld [vmem:[#allocation2 + $0x4c0] sm:$0xff]
    %v261 = vld [vmem:[#allocation2 + $0x4c8] sm:$0xff]
    %v262 = vld [vmem:[#allocation2 + $0x4d0] sm:$0xff]
    %v263 = vld [vmem:[#allocation2 + $0x4d8] sm:$0xff]
    %v264 = vld [vmem:[#allocation2 + $0x4e0] sm:$0xff]
    %v265 = vld [vmem:[#allocation2 + $0x4e8] sm:$0xff]
    %v266 = vld [vmem:[#allocation2 + $0x4f0] sm:$0xff]
    %v267 = vld [vmem:[#allocation2 + $0x4f8] sm:$0xff]
    %v268 = vld [vmem:[#allocation2 + $0x500] sm:$0xff]
    %v269 = vld [vmem:[#allocation2 + $0x508] sm:$0xff]
    %v270 = vld [vmem:[#allocation2 + $0x510] sm:$0xff]
    %v271 = vld [vmem:[#allocation2 + $0x518] sm:$0xff]
    %v272 = vld [vmem:[#allocation2 + $0x520] sm:$0xff]
    %v273 = vld [vmem:[#allocation2 + $0x528] sm:$0xff]
    %v274 = vld [vmem:[#allocation2 + $0x530] sm:$0xff]
    %v275 = vld [vmem:[#allocation2 + $0x538] sm:$0xff]
    %v276 = vld [vmem:[#allocation2 + $0x540] sm:$0xff]
    %v277 = vld [vmem:[#allocation2 + $0x548] sm:$0xff]
    %v278 = vld [vmem:[#allocation2 + $0x550] sm:$0xff]
    %v279 = vld [vmem:[#allocation2 + $0x558] sm:$0xff]
    %v280 = vld [vmem:[#allocation2 + $0x560] sm:$0xff]
    %v281 = vld [vmem:[#allocation2 + $0x568] sm:$0xff]
    %v282 = vld [vmem:[#allocation2 + $0x570] sm:$0xff]
    %v283 = vld [vmem:[#allocation2 + $0x578] sm:$0xff]
    %v284 = vld [vmem:[#allocation2 + $0x580] sm:$0xff]
    %v285 = vld [vmem:[#allocation2 + $0x588] sm:$0xff]
    %v286 = vld [vmem:[#allocation2 + $0x590] sm:$0xff]
    %v287 = vld [vmem:[#allocation2 + $0x598] sm:$0xff]
    %v288 = vld [vmem:[#allocation2 + $0x5a0] sm:$0xff]
    %v289 = vld [vmem:[#allocation2 + $0x5a8] sm:$0xff]
    %v290 = vld [vmem:[#allocation2 + $0x5b0] sm:$0xff]
    %v291 = vld [vmem:[#allocation2 + $0x5b8] sm:$0xff]
    %v292 = vld [vmem:[#allocation2 + $0x5c0] sm:$0xff]
    %v293 = vld [vmem:[#allocation2 + $0x5c8] sm:$0xff]
    %v294 = vld [vmem:[#allocation2 + $0x5d0] sm:$0xff]
    %v295 = vld [vmem:[#allocation2 + $0x5d8] sm:$0xff]
    %v296 = vld [vmem:[#allocation2 + $0x5e0] sm:$0xff]
    %v297 = vld [vmem:[#allocation2 + $0x5e8] sm:$0xff]
    %v298 = vld [vmem:[#allocation2 + $0x5f0] sm:$0xff]
    %v299 = vld [vmem:[#allocation2 + $0x5f8] sm:$0xff]
    %v300 = vld [vmem:[#allocation2 + $0x600] sm:$0xff]
    %v301 = vld [vmem:[#allocation2 + $0x608] sm:$0xff]
    %v302 = vld [vmem:[#allocation2 + $0x610] sm:$0xff]
    %v303 = vld [vmem:[#allocation2 + $0x618] sm:$0xff]
    %v304 = vld [vmem:[#allocation2 + $0x620] sm:$0xff]
    %v305 = vld [vmem:[#allocation2 + $0x628] sm:$0xff]
    %v306 = vld [vmem:[#allocation2 + $0x630] sm:$0xff]
    %v307 = vld [vmem:[#allocation2 + $0x638] sm:$0xff]
    %v308 = vld [vmem:[#allocation2 + $0x640] sm:$0xff]
    %v309 = vld [vmem:[#allocation2 + $0x648] sm:$0xff]
    %v310 = vld [vmem:[#allocation2 + $0x650] sm:$0xff]
    %v311 = vld [vmem:[#allocation2 + $0x658] sm:$0xff]
    %v312 = vld [vmem:[#allocation2 + $0x660] sm:$0xff]
    %v313 = vld [vmem:[#allocation2 + $0x668] sm:$0xff]
    %v314 = vld [vmem:[#allocation2 + $0x670] sm:$0xff]
    %v315 = vld [vmem:[#allocation2 + $0x678] sm:$0xff]
    %v316 = vld [vmem:[#allocation2 + $0x680] sm:$0xff]
    %v317 = vld [vmem:[#allocation2 + $0x688] sm:$0xff]
    %v318 = vld [vmem:[#allocation2 + $0x690] sm:$0xff]
    %v319 = vld [vmem:[#allocation2 + $0x698] sm:$0xff]
    %v320 = vld [vmem:[#allocation2 + $0x6a0] sm:$0xff]
    %v321 = vld [vmem:[#allocation2 + $0x6a8] sm:$0xff]
    %v322 = vld [vmem:[#allocation2 + $0x6b0] sm:$0xff]
    %v323 = vld [vmem:[#allocation2 + $0x6b8] sm:$0xff]
    %v324 = vld [vmem:[#allocation2 + $0x6c0] sm:$0xff]
    %v325 = vld [vmem:[#allocation2 + $0x6c8] sm:$0xff]
    %v326 = vld [vmem:[#allocation2 + $0x6d0] sm:$0xff]
    %v327 = vld [vmem:[#allocation2 + $0x6d8] sm:$0xff]
    %v328 = vld [vmem:[#allocation2 + $0x6e0] sm:$0xff]
    %v329 = vld [vmem:[#allocation2 + $0x6e8] sm:$0xff]
    %v330 = vld [vmem:[#allocation2 + $0x6f0] sm:$0xff]
    %v331 = vld [vmem:[#allocation2 + $0x6f8] sm:$0xff]
    %v332 = vld [vmem:[#allocation2 + $0x700] sm:$0xff]
    %v333 = vld [vmem:[#allocation2 + $0x708] sm:$0xff]
    %v334 = vld [vmem:[#allocation2 + $0x710] sm:$0xff]
    %v335 = vld [vmem:[#allocation2 + $0x718] sm:$0xff]
    %v336 = vld [vmem:[#allocation2 + $0x720] sm:$0xff]
    %v337 = vld [vmem:[#allocation2 + $0x728] sm:$0xff]
    %v338 = vld [vmem:[#allocation2 + $0x730] sm:$0xff]
    %v339 = vld [vmem:[#allocation2 + $0x738] sm:$0xff]
    %v340 = vld [vmem:[#allocation2 + $0x740] sm:$0xff]
    %v341 = vld [vmem:[#allocation2 + $0x748] sm:$0xff]
    %v342 = vld [vmem:[#allocation2 + $0x750] sm:$0xff]
    %v343 = vld [vmem:[#allocation2 + $0x758] sm:$0xff]
    %v344 = vld [vmem:[#allocation2 + $0x760] sm:$0xff]
    %v345 = vld [vmem:[#allocation2 + $0x768] sm:$0xff]
    %v346 = vld [vmem:[#allocation2 + $0x770] sm:$0xff]
    %v347 = vld [vmem:[#allocation2 + $0x778] sm:$0xff]
    %v348 = vld [vmem:[#allocation2 + $0x780] sm:$0xff]
    %v349 = vld [vmem:[#allocation2 + $0x788] sm:$0xff]
    %v350 = vld [vmem:[#allocation2 + $0x790] sm:$0xff]
    %v351 = vld [vmem:[#allocation2 + $0x798] sm:$0xff]
    %v352 = vld [vmem:[#allocation2 + $0x7a0] sm:$0xff]
    %v353 = vld [vmem:[#allocation2 + $0x7a8] sm:$0xff]
    %v354 = vld [vmem:[#allocation2 + $0x7b0] sm:$0xff]
    %v355 = vld [vmem:[#allocation2 + $0x7b8] sm:$0xff]
    %v356 = vld [vmem:[#allocation2 + $0x7c0] sm:$0xff]
    %v357 = vld [vmem:[#allocation2 + $0x7c8] sm:$0xff]
    %v358 = vld [vmem:[#allocation2 + $0x7d0] sm:$0xff]
    %v359 = vld [vmem:[#allocation2 + $0x7d8] sm:$0xff]
    %v360 = vld [vmem:[#allocation2 + $0x7e0] sm:$0xff]
    %v361 = vld [vmem:[#allocation2 + $0x7e8] sm:$0xff]
    %v362 = vld [vmem:[#allocation2 + $0x7f0] sm:$0xff]
    %v363 = vld [vmem:[#allocation2 + $0x7f8] sm:$0xff]
    %v364 = vld [vmem:[%s2] sm:$0xf]
    %v366 = vlaneseq
    %v367 = vshrl.u32 %v366, 7
    %v368 = vsub.s32 0, %v367
    %v369 = vrot.slane %v364, %v368
    %v370 = vlaneseq
    %v371 = vshrl.u32 %v370, 7
    %v372 = vsub.s32 1, %v371
    %v373 = vrot.slane %v364, %v372
    %v374 = vlaneseq
    %v375 = vshrl.u32 %v374, 7
    %v376 = vsub.s32 2, %v375
    %v377 = vrot.slane %v364, %v376
    %v378 = vlaneseq
    %v379 = vshrl.u32 %v378, 7
    %v380 = vsub.s32 3, %v379
    %v381 = vrot.slane %v364, %v380
    %v642 = vunpack.c.l.b16 %v108
    %v643 = vunpack.c.h.b16 %v108
    %v644 = vunpack.c.l.b16 %v109
    %v645 = vunpack.c.h.b16 %v109
    %v646 = vunpack.c.l.b16 %v110
    %v647 = vunpack.c.h.b16 %v110
    %v648 = vunpack.c.l.b16 %v111
    %v649 = vunpack.c.h.b16 %v111
    %v650 = vunpack.c.l.b16 %v112
    %v651 = vunpack.c.h.b16 %v112
    %v652 = vunpack.c.l.b16 %v113
    %v653 = vunpack.c.h.b16 %v113
    %v654 = vunpack.c.l.b16 %v114
    %v655 = vunpack.c.h.b16 %v114
    %v656 = vunpack.c.l.b16 %v115
    %v657 = vunpack.c.h.b16 %v115
    %v658 = vunpack.c.l.b16 %v116
    %v659 = vunpack.c.h.b16 %v116
    %v660 = vunpack.c.l.b16 %v117
    %v661 = vunpack.c.h.b16 %v117
    %v662 = vunpack.c.l.b16 %v118
    %v663 = vunpack.c.h.b16 %v118
    %v664 = vunpack.c.l.b16 %v119
    %v665 = vunpack.c.h.b16 %v119
    %v666 = vunpack.c.l.b16 %v120
    %v667 = vunpack.c.h.b16 %v120
    %v668 = vunpack.c.l.b16 %v121
    %v669 = vunpack.c.h.b16 %v121
    %v670 = vunpack.c.l.b16 %v122
    %v671 = vunpack.c.h.b16 %v122
    %v672 = vunpack.c.l.b16 %v123
    %v673 = vunpack.c.h.b16 %v123
    %v674 = vunpack.c.l.b16 %v124
    %v675 = vunpack.c.h.b16 %v124
    %v676 = vunpack.c.l.b16 %v125
    %v677 = vunpack.c.h.b16 %v125
    %v678 = vunpack.c.l.b16 %v126
    %v679 = vunpack.c.h.b16 %v126
    %v680 = vunpack.c.l.b16 %v127
    %v681 = vunpack.c.h.b16 %v127
    %v682 = vunpack.c.l.b16 %v128
    %v683 = vunpack.c.h.b16 %v128
    %v684 = vunpack.c.l.b16 %v129
    %v685 = vunpack.c.h.b16 %v129
    %v686 = vunpack.c.l.b16 %v130
    %v687 = vunpack.c.h.b16 %v130
    %v688 = vunpack.c.l.b16 %v131
    %v689 = vunpack.c.h.b16 %v131
    %v690 = vunpack.c.l.b16 %v132
    %v691 = vunpack.c.h.b16 %v132
    %v692 = vunpack.c.l.b16 %v133
    %v693 = vunpack.c.h.b16 %v133
    %v694 = vunpack.c.l.b16 %v134
    %v695 = vunpack.c.h.b16 %v134
    %v696 = vunpack.c.l.b16 %v135
    %v697 = vunpack.c.h.b16 %v135
    %v698 = vunpack.c.l.b16 %v136
    %v699 = vunpack.c.h.b16 %v136
    %v700 = vunpack.c.l.b16 %v137
    %v701 = vunpack.c.h.b16 %v137
    %v702 = vunpack.c.l.b16 %v138
    %v703 = vunpack.c.h.b16 %v138
    %v704 = vunpack.c.l.b16 %v139
    %v705 = vunpack.c.h.b16 %v139
    %v706 = vunpack.c.l.b16 %v140
    %v707 = vunpack.c.h.b16 %v140
    %v708 = vunpack.c.l.b16 %v141
    %v709 = vunpack.c.h.b16 %v141
    %v710 = vunpack.c.l.b16 %v142
    %v711 = vunpack.c.h.b16 %v142
    %v712 = vunpack.c.l.b16 %v143
    %v713 = vunpack.c.h.b16 %v143
    %v714 = vunpack.c.l.b16 %v144
    %v715 = vunpack.c.h.b16 %v144
    %v716 = vunpack.c.l.b16 %v145
    %v717 = vunpack.c.h.b16 %v145
    %v718 = vunpack.c.l.b16 %v146
    %v719 = vunpack.c.h.b16 %v146
    %v720 = vunpack.c.l.b16 %v147
    %v721 = vunpack.c.h.b16 %v147
    %v722 = vunpack.c.l.b16 %v148
    %v723 = vunpack.c.h.b16 %v148
    %v724 = vunpack.c.l.b16 %v149
    %v725 = vunpack.c.h.b16 %v149
    %v726 = vunpack.c.l.b16 %v150
    %v727 = vunpack.c.h.b16 %v150
    %v728 = vunpack.c.l.b16 %v151
    %v729 = vunpack.c.h.b16 %v151
    %v730 = vunpack.c.l.b16 %v152
    %v731 = vunpack.c.h.b16 %v152
    %v732 = vunpack.c.l.b16 %v153
    %v733 = vunpack.c.h.b16 %v153
    %v734 = vunpack.c.l.b16 %v154
    %v735 = vunpack.c.h.b16 %v154
    %v736 = vunpack.c.l.b16 %v155
    %v737 = vunpack.c.h.b16 %v155
    %v738 = vunpack.c.l.b16 %v156
    %v739 = vunpack.c.h.b16 %v156
    %v740 = vunpack.c.l.b16 %v157
    %v741 = vunpack.c.h.b16 %v157
    %v742 = vunpack.c.l.b16 %v158
    %v743 = vunpack.c.h.b16 %v158
    %v744 = vunpack.c.l.b16 %v159
    %v745 = vunpack.c.h.b16 %v159
    %v746 = vunpack.c.l.b16 %v160
    %v747 = vunpack.c.h.b16 %v160
    %v748 = vunpack.c.l.b16 %v161
    %v749 = vunpack.c.h.b16 %v161
    %v750 = vunpack.c.l.b16 %v162
    %v751 = vunpack.c.h.b16 %v162
    %v752 = vunpack.c.l.b16 %v163
    %v753 = vunpack.c.h.b16 %v163
    %v754 = vunpack.c.l.b16 %v164
    %v755 = vunpack.c.h.b16 %v164
    %v756 = vunpack.c.l.b16 %v165
    %v757 = vunpack.c.h.b16 %v165
    %v758 = vunpack.c.l.b16 %v166
    %v759 = vunpack.c.h.b16 %v166
    %v760 = vunpack.c.l.b16 %v167
    %v761 = vunpack.c.h.b16 %v167
    %v762 = vunpack.c.l.b16 %v168
    %v763 = vunpack.c.h.b16 %v168
    %v764 = vunpack.c.l.b16 %v169
    %v765 = vunpack.c.h.b16 %v169
    %v766 = vunpack.c.l.b16 %v170
    %v767 = vunpack.c.h.b16 %v170
    %v768 = vunpack.c.l.b16 %v171
    %v769 = vunpack.c.h.b16 %v171
    %v770 = vunpack.c.l.b16 %v172
    %v771 = vunpack.c.h.b16 %v172
    %v772 = vunpack.c.l.b16 %v173
    %v773 = vunpack.c.h.b16 %v173
    %v774 = vunpack.c.l.b16 %v174
    %v775 = vunpack.c.h.b16 %v174
    %v776 = vunpack.c.l.b16 %v175
    %v777 = vunpack.c.h.b16 %v175
    %v778 = vunpack.c.l.b16 %v176
    %v779 = vunpack.c.h.b16 %v176
    %v780 = vunpack.c.l.b16 %v177
    %v781 = vunpack.c.h.b16 %v177
    %v782 = vunpack.c.l.b16 %v178
    %v783 = vunpack.c.h.b16 %v178
    %v784 = vunpack.c.l.b16 %v179
    %v785 = vunpack.c.h.b16 %v179
    %v786 = vunpack.c.l.b16 %v180
    %v787 = vunpack.c.h.b16 %v180
    %v788 = vunpack.c.l.b16 %v181
    %v789 = vunpack.c.h.b16 %v181
    %v790 = vunpack.c.l.b16 %v182
    %v791 = vunpack.c.h.b16 %v182
    %v792 = vunpack.c.l.b16 %v183
    %v793 = vunpack.c.h.b16 %v183
    %v794 = vunpack.c.l.b16 %v184
    %v795 = vunpack.c.h.b16 %v184
    %v796 = vunpack.c.l.b16 %v185
    %v797 = vunpack.c.h.b16 %v185
    %v798 = vunpack.c.l.b16 %v186
    %v799 = vunpack.c.h.b16 %v186
    %v800 = vunpack.c.l.b16 %v187
    %v801 = vunpack.c.h.b16 %v187
    %v802 = vunpack.c.l.b16 %v188
    %v803 = vunpack.c.h.b16 %v188
    %v804 = vunpack.c.l.b16 %v189
    %v805 = vunpack.c.h.b16 %v189
    %v806 = vunpack.c.l.b16 %v190
    %v807 = vunpack.c.h.b16 %v190
    %v808 = vunpack.c.l.b16 %v191
    %v809 = vunpack.c.h.b16 %v191
    %v810 = vunpack.c.l.b16 %v192
    %v811 = vunpack.c.h.b16 %v192
    %v812 = vunpack.c.l.b16 %v193
    %v813 = vunpack.c.h.b16 %v193
    %v814 = vunpack.c.l.b16 %v194
    %v815 = vunpack.c.h.b16 %v194
    %v816 = vunpack.c.l.b16 %v195
    %v817 = vunpack.c.h.b16 %v195
    %v818 = vunpack.c.l.b16 %v196
    %v819 = vunpack.c.h.b16 %v196
    %v820 = vunpack.c.l.b16 %v197
    %v821 = vunpack.c.h.b16 %v197
    %v822 = vunpack.c.l.b16 %v198
    %v823 = vunpack.c.h.b16 %v198
    %v824 = vunpack.c.l.b16 %v199
    %v825 = vunpack.c.h.b16 %v199
    %v826 = vunpack.c.l.b16 %v200
    %v827 = vunpack.c.h.b16 %v200
    %v828 = vunpack.c.l.b16 %v201
    %v829 = vunpack.c.h.b16 %v201
    %v830 = vunpack.c.l.b16 %v202
    %v831 = vunpack.c.h.b16 %v202
    %v832 = vunpack.c.l.b16 %v203
    %v833 = vunpack.c.h.b16 %v203
    %v834 = vunpack.c.l.b16 %v204
    %v835 = vunpack.c.h.b16 %v204
    %v836 = vunpack.c.l.b16 %v205
    %v837 = vunpack.c.h.b16 %v205
    %v838 = vunpack.c.l.b16 %v206
    %v839 = vunpack.c.h.b16 %v206
    %v840 = vunpack.c.l.b16 %v207
    %v841 = vunpack.c.h.b16 %v207
    %v842 = vunpack.c.l.b16 %v208
    %v843 = vunpack.c.h.b16 %v208
    %v844 = vunpack.c.l.b16 %v209
    %v845 = vunpack.c.h.b16 %v209
    %v846 = vunpack.c.l.b16 %v210
    %v847 = vunpack.c.h.b16 %v210
    %v848 = vunpack.c.l.b16 %v211
    %v849 = vunpack.c.h.b16 %v211
    %v850 = vunpack.c.l.b16 %v212
    %v851 = vunpack.c.h.b16 %v212
    %v852 = vunpack.c.l.b16 %v213
    %v853 = vunpack.c.h.b16 %v213
    %v854 = vunpack.c.l.b16 %v214
    %v855 = vunpack.c.h.b16 %v214
    %v856 = vunpack.c.l.b16 %v215
    %v857 = vunpack.c.h.b16 %v215
    %v858 = vunpack.c.l.b16 %v216
    %v859 = vunpack.c.h.b16 %v216
    %v860 = vunpack.c.l.b16 %v217
    %v861 = vunpack.c.h.b16 %v217
    %v862 = vunpack.c.l.b16 %v218
    %v863 = vunpack.c.h.b16 %v218
    %v864 = vunpack.c.l.b16 %v219
    %v865 = vunpack.c.h.b16 %v219
    %v866 = vunpack.c.l.b16 %v220
    %v867 = vunpack.c.h.b16 %v220
    %v868 = vunpack.c.l.b16 %v221
    %v869 = vunpack.c.h.b16 %v221
    %v870 = vunpack.c.l.b16 %v222
    %v871 = vunpack.c.h.b16 %v222
    %v872 = vunpack.c.l.b16 %v223
    %v873 = vunpack.c.h.b16 %v223
    %v874 = vunpack.c.l.b16 %v224
    %v875 = vunpack.c.h.b16 %v224
    %v876 = vunpack.c.l.b16 %v225
    %v877 = vunpack.c.h.b16 %v225
    %v878 = vunpack.c.l.b16 %v226
    %v879 = vunpack.c.h.b16 %v226
    %v880 = vunpack.c.l.b16 %v227
    %v881 = vunpack.c.h.b16 %v227
    %v882 = vunpack.c.l.b16 %v228
    %v883 = vunpack.c.h.b16 %v228
    %v884 = vunpack.c.l.b16 %v229
    %v885 = vunpack.c.h.b16 %v229
    %v886 = vunpack.c.l.b16 %v230
    %v887 = vunpack.c.h.b16 %v230
    %v888 = vunpack.c.l.b16 %v231
    %v889 = vunpack.c.h.b16 %v231
    %v890 = vunpack.c.l.b16 %v232
    %v891 = vunpack.c.h.b16 %v232
    %v892 = vunpack.c.l.b16 %v233
    %v893 = vunpack.c.h.b16 %v233
    %v894 = vunpack.c.l.b16 %v234
    %v895 = vunpack.c.h.b16 %v234
    %v896 = vunpack.c.l.b16 %v235
    %v897 = vunpack.c.h.b16 %v235
    %v898 = vunpack.c.l.b16 %v236
    %v899 = vunpack.c.h.b16 %v236
    %v900 = vunpack.c.l.b16 %v237
    %v901 = vunpack.c.h.b16 %v237
    %v902 = vunpack.c.l.b16 %v238
    %v903 = vunpack.c.h.b16 %v238
    %v904 = vunpack.c.l.b16 %v239
    %v905 = vunpack.c.h.b16 %v239
    %v906 = vunpack.c.l.b16 %v240
    %v907 = vunpack.c.h.b16 %v240
    %v908 = vunpack.c.l.b16 %v241
    %v909 = vunpack.c.h.b16 %v241
    %v910 = vunpack.c.l.b16 %v242
    %v911 = vunpack.c.h.b16 %v242
    %v912 = vunpack.c.l.b16 %v243
    %v913 = vunpack.c.h.b16 %v243
    %v914 = vunpack.c.l.b16 %v244
    %v915 = vunpack.c.h.b16 %v244
    %v916 = vunpack.c.l.b16 %v245
    %v917 = vunpack.c.h.b16 %v245
    %v918 = vunpack.c.l.b16 %v246
    %v919 = vunpack.c.h.b16 %v246
    %v920 = vunpack.c.l.b16 %v247
    %v921 = vunpack.c.h.b16 %v247
    %v922 = vunpack.c.l.b16 %v248
    %v923 = vunpack.c.h.b16 %v248
    %v924 = vunpack.c.l.b16 %v249
    %v925 = vunpack.c.h.b16 %v249
    %v926 = vunpack.c.l.b16 %v250
    %v927 = vunpack.c.h.b16 %v250
    %v928 = vunpack.c.l.b16 %v251
    %v929 = vunpack.c.h.b16 %v251
    %v930 = vunpack.c.l.b16 %v252
    %v931 = vunpack.c.h.b16 %v252
    %v932 = vunpack.c.l.b16 %v253
    %v933 = vunpack.c.h.b16 %v253
    %v934 = vunpack.c.l.b16 %v254
    %v935 = vunpack.c.h.b16 %v254
    %v936 = vunpack.c.l.b16 %v255
    %v937 = vunpack.c.h.b16 %v255
    %v938 = vunpack.c.l.b16 %v256
    %v939 = vunpack.c.h.b16 %v256
    %v940 = vunpack.c.l.b16 %v257
    %v941 = vunpack.c.h.b16 %v257
    %v942 = vunpack.c.l.b16 %v258
    %v943 = vunpack.c.h.b16 %v258
    %v944 = vunpack.c.l.b16 %v259
    %v945 = vunpack.c.h.b16 %v259
    %v946 = vunpack.c.l.b16 %v260
    %v947 = vunpack.c.h.b16 %v260
    %v948 = vunpack.c.l.b16 %v261
    %v949 = vunpack.c.h.b16 %v261
    %v950 = vunpack.c.l.b16 %v262
    %v951 = vunpack.c.h.b16 %v262
    %v952 = vunpack.c.l.b16 %v263
    %v953 = vunpack.c.h.b16 %v263
    %v954 = vunpack.c.l.b16 %v264
    %v955 = vunpack.c.h.b16 %v264
    %v956 = vunpack.c.l.b16 %v265
    %v957 = vunpack.c.h.b16 %v265
    %v958 = vunpack.c.l.b16 %v266
    %v959 = vunpack.c.h.b16 %v266
    %v960 = vunpack.c.l.b16 %v267
    %v961 = vunpack.c.h.b16 %v267
    %v962 = vunpack.c.l.b16 %v268
    %v963 = vunpack.c.h.b16 %v268
    %v964 = vunpack.c.l.b16 %v269
    %v965 = vunpack.c.h.b16 %v269
    %v966 = vunpack.c.l.b16 %v270
    %v967 = vunpack.c.h.b16 %v270
    %v968 = vunpack.c.l.b16 %v271
    %v969 = vunpack.c.h.b16 %v271
    %v970 = vunpack.c.l.b16 %v272
    %v971 = vunpack.c.h.b16 %v272
    %v972 = vunpack.c.l.b16 %v273
    %v973 = vunpack.c.h.b16 %v273
    %v974 = vunpack.c.l.b16 %v274
    %v975 = vunpack.c.h.b16 %v274
    %v976 = vunpack.c.l.b16 %v275
    %v977 = vunpack.c.h.b16 %v275
    %v978 = vunpack.c.l.b16 %v276
    %v979 = vunpack.c.h.b16 %v276
    %v980 = vunpack.c.l.b16 %v277
    %v981 = vunpack.c.h.b16 %v277
    %v982 = vunpack.c.l.b16 %v278
    %v983 = vunpack.c.h.b16 %v278
    %v984 = vunpack.c.l.b16 %v279
    %v985 = vunpack.c.h.b16 %v279
    %v986 = vunpack.c.l.b16 %v280
    %v987 = vunpack.c.h.b16 %v280
    %v988 = vunpack.c.l.b16 %v281
    %v989 = vunpack.c.h.b16 %v281
    %v990 = vunpack.c.l.b16 %v282
    %v991 = vunpack.c.h.b16 %v282
    %v992 = vunpack.c.l.b16 %v283
    %v993 = vunpack.c.h.b16 %v283
    %v994 = vunpack.c.l.b16 %v284
    %v995 = vunpack.c.h.b16 %v284
    %v996 = vunpack.c.l.b16 %v285
    %v997 = vunpack.c.h.b16 %v285
    %v998 = vunpack.c.l.b16 %v286
    %v999 = vunpack.c.h.b16 %v286
    %v1000 = vunpack.c.l.b16 %v287
    %v1001 = vunpack.c.h.b16 %v287
    %v1002 = vunpack.c.l.b16 %v288
    %v1003 = vunpack.c.h.b16 %v288
    %v1004 = vunpack.c.l.b16 %v289
    %v1005 = vunpack.c.h.b16 %v289
    %v1006 = vunpack.c.l.b16 %v290
    %v1007 = vunpack.c.h.b16 %v290
    %v1008 = vunpack.c.l.b16 %v291
    %v1009 = vunpack.c.h.b16 %v291
    %v1010 = vunpack.c.l.b16 %v292
    %v1011 = vunpack.c.h.b16 %v292
    %v1012 = vunpack.c.l.b16 %v293
    %v1013 = vunpack.c.h.b16 %v293
    %v1014 = vunpack.c.l.b16 %v294
    %v1015 = vunpack.c.h.b16 %v294
    %v1016 = vunpack.c.l.b16 %v295
    %v1017 = vunpack.c.h.b16 %v295
    %v1018 = vunpack.c.l.b16 %v296
    %v1019 = vunpack.c.h.b16 %v296
    %v1020 = vunpack.c.l.b16 %v297
    %v1021 = vunpack.c.h.b16 %v297
    %v1022 = vunpack.c.l.b16 %v298
    %v1023 = vunpack.c.h.b16 %v298
    %v1024 = vunpack.c.l.b16 %v299
    %v1025 = vunpack.c.h.b16 %v299
    %v1026 = vunpack.c.l.b16 %v300
    %v1027 = vunpack.c.h.b16 %v300
    %v1028 = vunpack.c.l.b16 %v301
    %v1029 = vunpack.c.h.b16 %v301
    %v1030 = vunpack.c.l.b16 %v302
    %v1031 = vunpack.c.h.b16 %v302
    %v1032 = vunpack.c.l.b16 %v303
    %v1033 = vunpack.c.h.b16 %v303
    %v1034 = vunpack.c.l.b16 %v304
    %v1035 = vunpack.c.h.b16 %v304
    %v1036 = vunpack.c.l.b16 %v305
    %v1037 = vunpack.c.h.b16 %v305
    %v1038 = vunpack.c.l.b16 %v306
    %v1039 = vunpack.c.h.b16 %v306
    %v1040 = vunpack.c.l.b16 %v307
    %v1041 = vunpack.c.h.b16 %v307
    %v1042 = vunpack.c.l.b16 %v308
    %v1043 = vunpack.c.h.b16 %v308
    %v1044 = vunpack.c.l.b16 %v309
    %v1045 = vunpack.c.h.b16 %v309
    %v1046 = vunpack.c.l.b16 %v310
    %v1047 = vunpack.c.h.b16 %v310
    %v1048 = vunpack.c.l.b16 %v311
    %v1049 = vunpack.c.h.b16 %v311
    %v1050 = vunpack.c.l.b16 %v312
    %v1051 = vunpack.c.h.b16 %v312
    %v1052 = vunpack.c.l.b16 %v313
    %v1053 = vunpack.c.h.b16 %v313
    %v1054 = vunpack.c.l.b16 %v314
    %v1055 = vunpack.c.h.b16 %v314
    %v1056 = vunpack.c.l.b16 %v315
    %v1057 = vunpack.c.h.b16 %v315
    %v1058 = vunpack.c.l.b16 %v316
    %v1059 = vunpack.c.h.b16 %v316
    %v1060 = vunpack.c.l.b16 %v317
    %v1061 = vunpack.c.h.b16 %v317
    %v1062 = vunpack.c.l.b16 %v318
    %v1063 = vunpack.c.h.b16 %v318
    %v1064 = vunpack.c.l.b16 %v319
    %v1065 = vunpack.c.h.b16 %v319
    %v1066 = vunpack.c.l.b16 %v320
    %v1067 = vunpack.c.h.b16 %v320
    %v1068 = vunpack.c.l.b16 %v321
    %v1069 = vunpack.c.h.b16 %v321
    %v1070 = vunpack.c.l.b16 %v322
    %v1071 = vunpack.c.h.b16 %v322
    %v1072 = vunpack.c.l.b16 %v323
    %v1073 = vunpack.c.h.b16 %v323
    %v1074 = vunpack.c.l.b16 %v324
    %v1075 = vunpack.c.h.b16 %v324
    %v1076 = vunpack.c.l.b16 %v325
    %v1077 = vunpack.c.h.b16 %v325
    %v1078 = vunpack.c.l.b16 %v326
    %v1079 = vunpack.c.h.b16 %v326
    %v1080 = vunpack.c.l.b16 %v327
    %v1081 = vunpack.c.h.b16 %v327
    %v1082 = vunpack.c.l.b16 %v328
    %v1083 = vunpack.c.h.b16 %v328
    %v1084 = vunpack.c.l.b16 %v329
    %v1085 = vunpack.c.h.b16 %v329
    %v1086 = vunpack.c.l.b16 %v330
    %v1087 = vunpack.c.h.b16 %v330
    %v1088 = vunpack.c.l.b16 %v331
    %v1089 = vunpack.c.h.b16 %v331
    %v1090 = vunpack.c.l.b16 %v332
    %v1091 = vunpack.c.h.b16 %v332
    %v1092 = vunpack.c.l.b16 %v333
    %v1093 = vunpack.c.h.b16 %v333
    %v1094 = vunpack.c.l.b16 %v334
    %v1095 = vunpack.c.h.b16 %v334
    %v1096 = vunpack.c.l.b16 %v335
    %v1097 = vunpack.c.h.b16 %v335
    %v1098 = vunpack.c.l.b16 %v336
    %v1099 = vunpack.c.h.b16 %v336
    %v1100 = vunpack.c.l.b16 %v337
    %v1101 = vunpack.c.h.b16 %v337
    %v1102 = vunpack.c.l.b16 %v338
    %v1103 = vunpack.c.h.b16 %v338
    %v1104 = vunpack.c.l.b16 %v339
    %v1105 = vunpack.c.h.b16 %v339
    %v1106 = vunpack.c.l.b16 %v340
    %v1107 = vunpack.c.h.b16 %v340
    %v1108 = vunpack.c.l.b16 %v341
    %v1109 = vunpack.c.h.b16 %v341
    %v1110 = vunpack.c.l.b16 %v342
    %v1111 = vunpack.c.h.b16 %v342
    %v1112 = vunpack.c.l.b16 %v343
    %v1113 = vunpack.c.h.b16 %v343
    %v1114 = vunpack.c.l.b16 %v344
    %v1115 = vunpack.c.h.b16 %v344
    %v1116 = vunpack.c.l.b16 %v345
    %v1117 = vunpack.c.h.b16 %v345
    %v1118 = vunpack.c.l.b16 %v346
    %v1119 = vunpack.c.h.b16 %v346
    %v1120 = vunpack.c.l.b16 %v347
    %v1121 = vunpack.c.h.b16 %v347
    %v1122 = vunpack.c.l.b16 %v348
    %v1123 = vunpack.c.h.b16 %v348
    %v1124 = vunpack.c.l.b16 %v349
    %v1125 = vunpack.c.h.b16 %v349
    %v1126 = vunpack.c.l.b16 %v350
    %v1127 = vunpack.c.h.b16 %v350
    %v1128 = vunpack.c.l.b16 %v351
    %v1129 = vunpack.c.h.b16 %v351
    %v1130 = vunpack.c.l.b16 %v352
    %v1131 = vunpack.c.h.b16 %v352
    %v1132 = vunpack.c.l.b16 %v353
    %v1133 = vunpack.c.h.b16 %v353
    %v1134 = vunpack.c.l.b16 %v354
    %v1135 = vunpack.c.h.b16 %v354
    %v1136 = vunpack.c.l.b16 %v355
    %v1137 = vunpack.c.h.b16 %v355
    %v1138 = vunpack.c.l.b16 %v356
    %v1139 = vunpack.c.h.b16 %v356
    %v1140 = vunpack.c.l.b16 %v357
    %v1141 = vunpack.c.h.b16 %v357
    %v1142 = vunpack.c.l.b16 %v358
    %v1143 = vunpack.c.h.b16 %v358
    %v1144 = vunpack.c.l.b16 %v359
    %v1145 = vunpack.c.h.b16 %v359
    %v1146 = vunpack.c.l.b16 %v360
    %v1147 = vunpack.c.h.b16 %v360
    %v1148 = vunpack.c.l.b16 %v361
    %v1149 = vunpack.c.h.b16 %v361
    %v1150 = vunpack.c.l.b16 %v362
    %v1151 = vunpack.c.h.b16 %v362
    %v1152 = vunpack.c.l.b16 %v363
    %v1153 = vunpack.c.h.b16 %v363
    %v1154 = vpack.c.b16 %v646, %v642
    %v1155 = vpack.c.b16 %v647, %v643
    %v1156 = vpack.c.b16 %v648, %v644
    %v1157 = vpack.c.b16 %v649, %v645
    %v1158 = vpack.c.b16 %v654, %v650
    %v1159 = vpack.c.b16 %v655, %v651
    %v1160 = vpack.c.b16 %v656, %v652
    %v1161 = vpack.c.b16 %v657, %v653
    %v1162 = vpack.c.b16 %v662, %v658
    %v1163 = vpack.c.b16 %v663, %v659
    %v1164 = vpack.c.b16 %v664, %v660
    %v1165 = vpack.c.b16 %v665, %v661
    %v1166 = vpack.c.b16 %v670, %v666
    %v1167 = vpack.c.b16 %v671, %v667
    %v1168 = vpack.c.b16 %v672, %v668
    %v1169 = vpack.c.b16 %v673, %v669
    %v1170 = vpack.c.b16 %v678, %v674
    %v1171 = vpack.c.b16 %v679, %v675
    %v1172 = vpack.c.b16 %v680, %v676
    %v1173 = vpack.c.b16 %v681, %v677
    %v1174 = vpack.c.b16 %v686, %v682
    %v1175 = vpack.c.b16 %v687, %v683
    %v1176 = vpack.c.b16 %v688, %v684
    %v1177 = vpack.c.b16 %v689, %v685
    %v1178 = vpack.c.b16 %v694, %v690
    %v1179 = vpack.c.b16 %v695, %v691
    %v1180 = vpack.c.b16 %v696, %v692
    %v1181 = vpack.c.b16 %v697, %v693
    %v1182 = vpack.c.b16 %v702, %v698
    %v1183 = vpack.c.b16 %v703, %v699
    %v1184 = vpack.c.b16 %v704, %v700
    %v1185 = vpack.c.b16 %v705, %v701
    %v1186 = vpack.c.b16 %v710, %v706
    %v1187 = vpack.c.b16 %v711, %v707
    %v1188 = vpack.c.b16 %v712, %v708
    %v1189 = vpack.c.b16 %v713, %v709
    %v1190 = vpack.c.b16 %v718, %v714
    %v1191 = vpack.c.b16 %v719, %v715
    %v1192 = vpack.c.b16 %v720, %v716
    %v1193 = vpack.c.b16 %v721, %v717
    %v1194 = vpack.c.b16 %v726, %v722
    %v1195 = vpack.c.b16 %v727, %v723
    %v1196 = vpack.c.b16 %v728, %v724
    %v1197 = vpack.c.b16 %v729, %v725
    %v1198 = vpack.c.b16 %v734, %v730
    %v1199 = vpack.c.b16 %v735, %v731
    %v1200 = vpack.c.b16 %v736, %v732
    %v1201 = vpack.c.b16 %v737, %v733
    %v1202 = vpack.c.b16 %v742, %v738
    %v1203 = vpack.c.b16 %v743, %v739
    %v1204 = vpack.c.b16 %v744, %v740
    %v1205 = vpack.c.b16 %v745, %v741
    %v1206 = vpack.c.b16 %v750, %v746
    %v1207 = vpack.c.b16 %v751, %v747
    %v1208 = vpack.c.b16 %v752, %v748
    %v1209 = vpack.c.b16 %v753, %v749
    %v1210 = vpack.c.b16 %v758, %v754
    %v1211 = vpack.c.b16 %v759, %v755
    %v1212 = vpack.c.b16 %v760, %v756
    %v1213 = vpack.c.b16 %v761, %v757
    %v1214 = vpack.c.b16 %v766, %v762
    %v1215 = vpack.c.b16 %v767, %v763
    %v1216 = vpack.c.b16 %v768, %v764
    %v1217 = vpack.c.b16 %v769, %v765
    %v1218 = vpack.c.b16 %v774, %v770
    %v1219 = vpack.c.b16 %v775, %v771
    %v1220 = vpack.c.b16 %v776, %v772
    %v1221 = vpack.c.b16 %v777, %v773
    %v1222 = vpack.c.b16 %v782, %v778
    %v1223 = vpack.c.b16 %v783, %v779
    %v1224 = vpack.c.b16 %v784, %v780
    %v1225 = vpack.c.b16 %v785, %v781
    %v1226 = vpack.c.b16 %v790, %v786
    %v1227 = vpack.c.b16 %v791, %v787
    %v1228 = vpack.c.b16 %v792, %v788
    %v1229 = vpack.c.b16 %v793, %v789
    %v1230 = vpack.c.b16 %v798, %v794
    %v1231 = vpack.c.b16 %v799, %v795
    %v1232 = vpack.c.b16 %v800, %v796
    %v1233 = vpack.c.b16 %v801, %v797
    %v1234 = vpack.c.b16 %v806, %v802
    %v1235 = vpack.c.b16 %v807, %v803
    %v1236 = vpack.c.b16 %v808, %v804
    %v1237 = vpack.c.b16 %v809, %v805
    %v1238 = vpack.c.b16 %v814, %v810
    %v1239 = vpack.c.b16 %v815, %v811
    %v1240 = vpack.c.b16 %v816, %v812
    %v1241 = vpack.c.b16 %v817, %v813
    %v1242 = vpack.c.b16 %v822, %v818
    %v1243 = vpack.c.b16 %v823, %v819
    %v1244 = vpack.c.b16 %v824, %v820
    %v1245 = vpack.c.b16 %v825, %v821
    %v1246 = vpack.c.b16 %v830, %v826
    %v1247 = vpack.c.b16 %v831, %v827
    %v1248 = vpack.c.b16 %v832, %v828
    %v1249 = vpack.c.b16 %v833, %v829
    %v1250 = vpack.c.b16 %v838, %v834
    %v1251 = vpack.c.b16 %v839, %v835
    %v1252 = vpack.c.b16 %v840, %v836
    %v1253 = vpack.c.b16 %v841, %v837
    %v1254 = vpack.c.b16 %v846, %v842
    %v1255 = vpack.c.b16 %v847, %v843
    %v1256 = vpack.c.b16 %v848, %v844
    %v1257 = vpack.c.b16 %v849, %v845
    %v1258 = vpack.c.b16 %v854, %v850
    %v1259 = vpack.c.b16 %v855, %v851
    %v1260 = vpack.c.b16 %v856, %v852
    %v1261 = vpack.c.b16 %v857, %v853
    %v1262 = vpack.c.b16 %v862, %v858
    %v1263 = vpack.c.b16 %v863, %v859
    %v1264 = vpack.c.b16 %v864, %v860
    %v1265 = vpack.c.b16 %v865, %v861
    %v1266 = vpack.c.b16 %v870, %v866
    %v1267 = vpack.c.b16 %v871, %v867
    %v1268 = vpack.c.b16 %v872, %v868
    %v1269 = vpack.c.b16 %v873, %v869
    %v1270 = vpack.c.b16 %v878, %v874
    %v1271 = vpack.c.b16 %v879, %v875
    %v1272 = vpack.c.b16 %v880, %v876
    %v1273 = vpack.c.b16 %v881, %v877
    %v1274 = vpack.c.b16 %v886, %v882
    %v1275 = vpack.c.b16 %v887, %v883
    %v1276 = vpack.c.b16 %v888, %v884
    %v1277 = vpack.c.b16 %v889, %v885
    %v1278 = vpack.c.b16 %v894, %v890
    %v1279 = vpack.c.b16 %v895, %v891
    %v1280 = vpack.c.b16 %v896, %v892
    %v1281 = vpack.c.b16 %v897, %v893
    %v1282 = vpack.c.b16 %v902, %v898
    %v1283 = vpack.c.b16 %v903, %v899
    %v1284 = vpack.c.b16 %v904, %v900
    %v1285 = vpack.c.b16 %v905, %v901
    %v1286 = vpack.c.b16 %v910, %v906
    %v1287 = vpack.c.b16 %v911, %v907
    %v1288 = vpack.c.b16 %v912, %v908
    %v1289 = vpack.c.b16 %v913, %v909
    %v1290 = vpack.c.b16 %v918, %v914
    %v1291 = vpack.c.b16 %v919, %v915
    %v1292 = vpack.c.b16 %v920, %v916
    %v1293 = vpack.c.b16 %v921, %v917
    %v1294 = vpack.c.b16 %v926, %v922
    %v1295 = vpack.c.b16 %v927, %v923
    %v1296 = vpack.c.b16 %v928, %v924
    %v1297 = vpack.c.b16 %v929, %v925
    %v1298 = vpack.c.b16 %v934, %v930
    %v1299 = vpack.c.b16 %v935, %v931
    %v1300 = vpack.c.b16 %v936, %v932
    %v1301 = vpack.c.b16 %v937, %v933
    %v1302 = vpack.c.b16 %v942, %v938
    %v1303 = vpack.c.b16 %v943, %v939
    %v1304 = vpack.c.b16 %v944, %v940
    %v1305 = vpack.c.b16 %v945, %v941
    %v1306 = vpack.c.b16 %v950, %v946
    %v1307 = vpack.c.b16 %v951, %v947
    %v1308 = vpack.c.b16 %v952, %v948
    %v1309 = vpack.c.b16 %v953, %v949
    %v1310 = vpack.c.b16 %v958, %v954
    %v1311 = vpack.c.b16 %v959, %v955
    %v1312 = vpack.c.b16 %v960, %v956
    %v1313 = vpack.c.b16 %v961, %v957
    %v1314 = vpack.c.b16 %v966, %v962
    %v1315 = vpack.c.b16 %v967, %v963
    %v1316 = vpack.c.b16 %v968, %v964
    %v1317 = vpack.c.b16 %v969, %v965
    %v1318 = vpack.c.b16 %v974, %v970
    %v1319 = vpack.c.b16 %v975, %v971
    %v1320 = vpack.c.b16 %v976, %v972
    %v1321 = vpack.c.b16 %v977, %v973
    %v1322 = vpack.c.b16 %v982, %v978
    %v1323 = vpack.c.b16 %v983, %v979
    %v1324 = vpack.c.b16 %v984, %v980
    %v1325 = vpack.c.b16 %v985, %v981
    %v1326 = vpack.c.b16 %v990, %v986
    %v1327 = vpack.c.b16 %v991, %v987
    %v1328 = vpack.c.b16 %v992, %v988
    %v1329 = vpack.c.b16 %v993, %v989
    %v1330 = vpack.c.b16 %v998, %v994
    %v1331 = vpack.c.b16 %v999, %v995
    %v1332 = vpack.c.b16 %v1000, %v996
    %v1333 = vpack.c.b16 %v1001, %v997
    %v1334 = vpack.c.b16 %v1006, %v1002
    %v1335 = vpack.c.b16 %v1007, %v1003
    %v1336 = vpack.c.b16 %v1008, %v1004
    %v1337 = vpack.c.b16 %v1009, %v1005
    %v1338 = vpack.c.b16 %v1014, %v1010
    %v1339 = vpack.c.b16 %v1015, %v1011
    %v1340 = vpack.c.b16 %v1016, %v1012
    %v1341 = vpack.c.b16 %v1017, %v1013
    %v1342 = vpack.c.b16 %v1022, %v1018
    %v1343 = vpack.c.b16 %v1023, %v1019
    %v1344 = vpack.c.b16 %v1024, %v1020
    %v1345 = vpack.c.b16 %v1025, %v1021
    %v1346 = vpack.c.b16 %v1030, %v1026
    %v1347 = vpack.c.b16 %v1031, %v1027
    %v1348 = vpack.c.b16 %v1032, %v1028
    %v1349 = vpack.c.b16 %v1033, %v1029
    %v1350 = vpack.c.b16 %v1038, %v1034
    %v1351 = vpack.c.b16 %v1039, %v1035
    %v1352 = vpack.c.b16 %v1040, %v1036
    %v1353 = vpack.c.b16 %v1041, %v1037
    %v1354 = vpack.c.b16 %v1046, %v1042
    %v1355 = vpack.c.b16 %v1047, %v1043
    %v1356 = vpack.c.b16 %v1048, %v1044
    %v1357 = vpack.c.b16 %v1049, %v1045
    %v1358 = vpack.c.b16 %v1054, %v1050
    %v1359 = vpack.c.b16 %v1055, %v1051
    %v1360 = vpack.c.b16 %v1056, %v1052
    %v1361 = vpack.c.b16 %v1057, %v1053
    %v1362 = vpack.c.b16 %v1062, %v1058
    %v1363 = vpack.c.b16 %v1063, %v1059
    %v1364 = vpack.c.b16 %v1064, %v1060
    %v1365 = vpack.c.b16 %v1065, %v1061
    %v1366 = vpack.c.b16 %v1070, %v1066
    %v1367 = vpack.c.b16 %v1071, %v1067
    %v1368 = vpack.c.b16 %v1072, %v1068
    %v1369 = vpack.c.b16 %v1073, %v1069
    %v1370 = vpack.c.b16 %v1078, %v1074
    %v1371 = vpack.c.b16 %v1079, %v1075
    %v1372 = vpack.c.b16 %v1080, %v1076
    %v1373 = vpack.c.b16 %v1081, %v1077
    %v1374 = vpack.c.b16 %v1086, %v1082
    %v1375 = vpack.c.b16 %v1087, %v1083
    %v1376 = vpack.c.b16 %v1088, %v1084
    %v1377 = vpack.c.b16 %v1089, %v1085
    %v1378 = vpack.c.b16 %v1094, %v1090
    %v1379 = vpack.c.b16 %v1095, %v1091
    %v1380 = vpack.c.b16 %v1096, %v1092
    %v1381 = vpack.c.b16 %v1097, %v1093
    %v1382 = vpack.c.b16 %v1102, %v1098
    %v1383 = vpack.c.b16 %v1103, %v1099
    %v1384 = vpack.c.b16 %v1104, %v1100
    %v1385 = vpack.c.b16 %v1105, %v1101
    %v1386 = vpack.c.b16 %v1110, %v1106
    %v1387 = vpack.c.b16 %v1111, %v1107
    %v1388 = vpack.c.b16 %v1112, %v1108
    %v1389 = vpack.c.b16 %v1113, %v1109
    %v1390 = vpack.c.b16 %v1118, %v1114
    %v1391 = vpack.c.b16 %v1119, %v1115
    %v1392 = vpack.c.b16 %v1120, %v1116
    %v1393 = vpack.c.b16 %v1121, %v1117
    %v1394 = vpack.c.b16 %v1126, %v1122
    %v1395 = vpack.c.b16 %v1127, %v1123
    %v1396 = vpack.c.b16 %v1128, %v1124
    %v1397 = vpack.c.b16 %v1129, %v1125
    %v1398 = vpack.c.b16 %v1134, %v1130
    %v1399 = vpack.c.b16 %v1135, %v1131
    %v1400 = vpack.c.b16 %v1136, %v1132
    %v1401 = vpack.c.b16 %v1137, %v1133
    %v1402 = vpack.c.b16 %v1142, %v1138
    %v1403 = vpack.c.b16 %v1143, %v1139
    %v1404 = vpack.c.b16 %v1144, %v1140
    %v1405 = vpack.c.b16 %v1145, %v1141
    %v1406 = vpack.c.b16 %v1150, %v1146
    %v1407 = vpack.c.b16 %v1151, %v1147
    %v1408 = vpack.c.b16 %v1152, %v1148
    %v1409 = vpack.c.b16 %v1153, %v1149
    %1666 = vmatprep.subr.bf16.mxu0 %v1183
    %1667 = vmatpush1.bf16.msra.mxu0 %v1182
    %1668 = vmatprep.subr.bf16.mxu0 %v1179
    %1669 = vmatpush1.bf16.msra.mxu0 %v1178
    %1670 = vmatprep.subr.bf16.mxu0 %v1175
    %1671 = vmatpush1.bf16.msra.mxu0 %v1174
    %1672 = vmatprep.subr.bf16.mxu0 %v1171
    %1673 = vmatpush1.bf16.msra.mxu0 %v1170
    %1674 = vmatprep.subr.bf16.mxu0 %v1167
    %1675 = vmatpush1.bf16.msra.mxu0 %v1166
    %1676 = vmatprep.subr.bf16.mxu0 %v1163
    %1677 = vmatpush1.bf16.msra.mxu0 %v1162
    %1678 = vmatprep.subr.bf16.mxu0 %v1159
    %1679 = vmatpush1.bf16.msra.mxu0 %v1158
    %1680 = vmatprep.subr.bf16.mxu0 %v1155
    %1681 = vmatpush1.bf16.msra.mxu0 %v1154
    %1682 = vmatprep.subr.bf16.mxu0 %v1215
    %1683 = vmatpush2.bf16.msra.mxu0 %v1214
    %1684 = vmatprep.subr.bf16.mxu0 %v1211
    %1685 = vmatpush2.bf16.msra.mxu0 %v1210
    %1686 = vmatprep.subr.bf16.mxu0 %v1207
    %1687 = vmatpush2.bf16.msra.mxu0 %v1206
    %1688 = vmatprep.subr.bf16.mxu0 %v1203
    %1689 = vmatpush2.bf16.msra.mxu0 %v1202
    %1690 = vmatprep.subr.bf16.mxu0 %v1199
    %1691 = vmatpush2.bf16.msra.mxu0 %v1198
    %1692 = vmatprep.subr.bf16.mxu0 %v1195
    %1693 = vmatpush2.bf16.msra.mxu0 %v1194
    %1694 = vmatprep.subr.bf16.mxu0 %v1191
    %1695 = vmatpush2.bf16.msra.mxu0 %v1190
    %1696 = vmatprep.subr.bf16.mxu0 %v1187
    %1697 = vmatpush2.bf16.msra.mxu0 %v1186
    %1698 = vmatprep.mubr.bf16.mxu0 %v101
    %1699 = vmatmul.mubr.bf16.gmra.mxu0 %v100
    %v1700 = vpop.f32.mrf.mxu0
    %v1701 = vadd.f32 %v369, %v1700
    %v1702 = vpop.f32.mrf.mxu0
    %v1703 = vadd.f32 %v373, %v1702
    %v1704 = vpop.f32.mrf.mxu0
    %v1705 = vpop.f32.mrf.mxu0
    %1706 = vdwg.mxu0
    %1707 = vmatprep.subr.bf16.mxu0 %v1247
    %1708 = vmatpush1.bf16.msra.mxu0 %v1246
    %1709 = vmatprep.subr.bf16.mxu0 %v1243
    %1710 = vmatpush1.bf16.msra.mxu0 %v1242
    %1711 = vmatprep.subr.bf16.mxu0 %v1239
    %1712 = vmatpush1.bf16.msra.mxu0 %v1238
    %1713 = vmatprep.subr.bf16.mxu0 %v1235
    %1714 = vmatpush1.bf16.msra.mxu0 %v1234
    %1715 = vmatprep.subr.bf16.mxu0 %v1231
    %1716 = vmatpush1.bf16.msra.mxu0 %v1230
    %1717 = vmatprep.subr.bf16.mxu0 %v1227
    %1718 = vmatpush1.bf16.msra.mxu0 %v1226
    %1719 = vmatprep.subr.bf16.mxu0 %v1223
    %1720 = vmatpush1.bf16.msra.mxu0 %v1222
    %1721 = vmatprep.subr.bf16.mxu0 %v1219
    %1722 = vmatpush1.bf16.msra.mxu0 %v1218
    %1723 = vmatprep.subr.bf16.mxu0 %v1279
    %1724 = vmatpush2.bf16.msra.mxu0 %v1278
    %1725 = vmatprep.subr.bf16.mxu0 %v1275
    %1726 = vmatpush2.bf16.msra.mxu0 %v1274
    %1727 = vmatprep.subr.bf16.mxu0 %v1271
    %1728 = vmatpush2.bf16.msra.mxu0 %v1270
    %1729 = vmatprep.subr.bf16.mxu0 %v1267
    %1730 = vmatpush2.bf16.msra.mxu0 %v1266
    %1731 = vmatprep.subr.bf16.mxu0 %v1263
    %1732 = vmatpush2.bf16.msra.mxu0 %v1262
    %1733 = vmatprep.subr.bf16.mxu0 %v1259
    %1734 = vmatpush2.bf16.msra.mxu0 %v1258
    %1735 = vmatprep.subr.bf16.mxu0 %v1255
    %1736 = vmatpush2.bf16.msra.mxu0 %v1254
    %1737 = vmatprep.subr.bf16.mxu0 %v1251
    %1738 = vmatpush2.bf16.msra.mxu0 %v1250
    %1739 = vmatprep.mubr.bf16.mxu0 %v103
    %1740 = vmatmul.mubr.bf16.gmra.mxu0 %v102
    %v1741 = vpop.f32.mrf.mxu0
    %v1742 = vadd.f32 %v1701, %v1741
    %v1743 = vpop.f32.mrf.mxu0
    %v1744 = vadd.f32 %v1703, %v1743
    %v1745 = vpop.f32.mrf.mxu0
    %v1746 = vpop.f32.mrf.mxu0
    %1747 = vdwg.mxu0
    %1748 = vmatprep.subr.bf16.mxu0 %v1311
    %1749 = vmatpush1.bf16.msra.mxu0 %v1310
    %1750 = vmatprep.subr.bf16.mxu0 %v1307
    %1751 = vmatpush1.bf16.msra.mxu0 %v1306
    %1752 = vmatprep.subr.bf16.mxu0 %v1303
    %1753 = vmatpush1.bf16.msra.mxu0 %v1302
    %1754 = vmatprep.subr.bf16.mxu0 %v1299
    %1755 = vmatpush1.bf16.msra.mxu0 %v1298
    %1756 = vmatprep.subr.bf16.mxu0 %v1295
    %1757 = vmatpush1.bf16.msra.mxu0 %v1294
    %1758 = vmatprep.subr.bf16.mxu0 %v1291
    %1759 = vmatpush1.bf16.msra.mxu0 %v1290
    %1760 = vmatprep.subr.bf16.mxu0 %v1287
    %1761 = vmatpush1.bf16.msra.mxu0 %v1286
    %1762 = vmatprep.subr.bf16.mxu0 %v1283
    %1763 = vmatpush1.bf16.msra.mxu0 %v1282
    %1764 = vmatprep.subr.bf16.mxu0 %v1343
    %1765 = vmatpush2.bf16.msra.mxu0 %v1342
    %1766 = vmatprep.subr.bf16.mxu0 %v1339
    %1767 = vmatpush2.bf16.msra.mxu0 %v1338
    %1768 = vmatprep.subr.bf16.mxu0 %v1335
    %1769 = vmatpush2.bf16.msra.mxu0 %v1334
    %1770 = vmatprep.subr.bf16.mxu0 %v1331
    %1771 = vmatpush2.bf16.msra.mxu0 %v1330
    %1772 = vmatprep.subr.bf16.mxu0 %v1327
    %1773 = vmatpush2.bf16.msra.mxu0 %v1326
    %1774 = vmatprep.subr.bf16.mxu0 %v1323
    %1775 = vmatpush2.bf16.msra.mxu0 %v1322
    %1776 = vmatprep.subr.bf16.mxu0 %v1319
    %1777 = vmatpush2.bf16.msra.mxu0 %v1318
    %1778 = vmatprep.subr.bf16.mxu0 %v1315
    %1779 = vmatpush2.bf16.msra.mxu0 %v1314
    %1780 = vmatprep.mubr.bf16.mxu0 %v105
    %1781 = vmatmul.mubr.bf16.gmra.mxu0 %v104
    %v1782 = vpop.f32.mrf.mxu0
    %v1783 = vadd.f32 %v1742, %v1782
    %v1784 = vpop.f32.mrf.mxu0
    %v1785 = vadd.f32 %v1744, %v1784
    %v1786 = vpop.f32.mrf.mxu0
    %v1787 = vpop.f32.mrf.mxu0
    %1788 = vdwg.mxu0
    %1789 = vmatprep.subr.bf16.mxu0 %v1375
    %1790 = vmatpush1.bf16.msra.mxu0 %v1374
    %1791 = vmatprep.subr.bf16.mxu0 %v1371
    %1792 = vmatpush1.bf16.msra.mxu0 %v1370
    %1793 = vmatprep.subr.bf16.mxu0 %v1367
    %1794 = vmatpush1.bf16.msra.mxu0 %v1366
    %1795 = vmatprep.subr.bf16.mxu0 %v1363
    %1796 = vmatpush1.bf16.msra.mxu0 %v1362
    %1797 = vmatprep.subr.bf16.mxu0 %v1359
    %1798 = vmatpush1.bf16.msra.mxu0 %v1358
    %1799 = vmatprep.subr.bf16.mxu0 %v1355
    %1800 = vmatpush1.bf16.msra.mxu0 %v1354
    %1801 = vmatprep.subr.bf16.mxu0 %v1351
    %1802 = vmatpush1.bf16.msra.mxu0 %v1350
    %1803 = vmatprep.subr.bf16.mxu0 %v1347
    %1804 = vmatpush1.bf16.msra.mxu0 %v1346
    %1805 = vmatprep.subr.bf16.mxu0 %v1407
    %1806 = vmatpush2.bf16.msra.mxu0 %v1406
    %1807 = vmatprep.subr.bf16.mxu0 %v1403
    %1808 = vmatpush2.bf16.msra.mxu0 %v1402
    %1809 = vmatprep.subr.bf16.mxu0 %v1399
    %1810 = vmatpush2.bf16.msra.mxu0 %v1398
    %1811 = vmatprep.subr.bf16.mxu0 %v1395
    %1812 = vmatpush2.bf16.msra.mxu0 %v1394
    %1813 = vmatprep.subr.bf16.mxu0 %v1391
    %1814 = vmatpush2.bf16.msra.mxu0 %v1390
    %1815 = vmatprep.subr.bf16.mxu0 %v1387
    %1816 = vmatpush2.bf16.msra.mxu0 %v1386
    %1817 = vmatprep.subr.bf16.mxu0 %v1383
    %1818 = vmatpush2.bf16.msra.mxu0 %v1382
    %1819 = vmatprep.subr.bf16.mxu0 %v1379
    %1820 = vmatpush2.bf16.msra.mxu0 %v1378
    %1821 = vmatprep.mubr.bf16.mxu0 %v107
    %1822 = vmatmul.mubr.bf16.gmra.mxu0 %v106
    %v1823 = vpop.f32.mrf.mxu0
    %v1824 = vadd.f32 %v1783, %v1823
    %v1825 = vpop.f32.mrf.mxu0
    %v1826 = vadd.f32 %v1785, %v1825
    %v1827 = vpop.f32.mrf.mxu0
    %v1828 = vpop.f32.mrf.mxu0
    %1829 = vdwg.mxu0
    %1830 = vmatprep.subr.bf16.mxu0 %v1185
    %1831 = vmatpush1.bf16.msra.mxu0 %v1184
    %1832 = vmatprep.subr.bf16.mxu0 %v1181
    %1833 = vmatpush1.bf16.msra.mxu0 %v1180
    %1834 = vmatprep.subr.bf16.mxu0 %v1177
    %1835 = vmatpush1.bf16.msra.mxu0 %v1176
    %1836 = vmatprep.subr.bf16.mxu0 %v1173
    %1837 = vmatpush1.bf16.msra.mxu0 %v1172
    %1838 = vmatprep.subr.bf16.mxu0 %v1169
    %1839 = vmatpush1.bf16.msra.mxu0 %v1168
    %1840 = vmatprep.subr.bf16.mxu0 %v1165
    %1841 = vmatpush1.bf16.msra.mxu0 %v1164
    %1842 = vmatprep.subr.bf16.mxu0 %v1161
    %1843 = vmatpush1.bf16.msra.mxu0 %v1160
    %1844 = vmatprep.subr.bf16.mxu0 %v1157
    %1845 = vmatpush1.bf16.msra.mxu0 %v1156
    %1846 = vmatprep.subr.bf16.mxu0 %v1217
    %1847 = vmatpush2.bf16.msra.mxu0 %v1216
    %1848 = vmatprep.subr.bf16.mxu0 %v1213
    %1849 = vmatpush2.bf16.msra.mxu0 %v1212
    %1850 = vmatprep.subr.bf16.mxu0 %v1209
    %1851 = vmatpush2.bf16.msra.mxu0 %v1208
    %1852 = vmatprep.subr.bf16.mxu0 %v1205
    %1853 = vmatpush2.bf16.msra.mxu0 %v1204
    %1854 = vmatprep.subr.bf16.mxu0 %v1201
    %1855 = vmatpush2.bf16.msra.mxu0 %v1200
    %1856 = vmatprep.subr.bf16.mxu0 %v1197
    %1857 = vmatpush2.bf16.msra.mxu0 %v1196
    %1858 = vmatprep.subr.bf16.mxu0 %v1193
    %1859 = vmatpush2.bf16.msra.mxu0 %v1192
    %1860 = vmatprep.subr.bf16.mxu0 %v1189
    %1861 = vmatpush2.bf16.msra.mxu0 %v1188
    %1862 = vmatprep.mubr.bf16.mxu0 %v101
    %1863 = vmatmul.mubr.bf16.gmra.mxu0 %v100
    %v1864 = vpop.f32.mrf.mxu0
    %v1865 = vadd.f32 %v377, %v1864
    %v1866 = vpop.f32.mrf.mxu0
    %v1867 = vadd.f32 %v381, %v1866
    %v1868 = vpop.f32.mrf.mxu0
    %v1869 = vpop.f32.mrf.mxu0
    %1870 = vdwg.mxu0
    %1871 = vmatprep.subr.bf16.mxu0 %v1249
    %1872 = vmatpush1.bf16.msra.mxu0 %v1248
    %1873 = vmatprep.subr.bf16.mxu0 %v1245
    %1874 = vmatpush1.bf16.msra.mxu0 %v1244
    %1875 = vmatprep.subr.bf16.mxu0 %v1241
    %1876 = vmatpush1.bf16.msra.mxu0 %v1240
    %1877 = vmatprep.subr.bf16.mxu0 %v1237
    %1878 = vmatpush1.bf16.msra.mxu0 %v1236
    %1879 = vmatprep.subr.bf16.mxu0 %v1233
    %1880 = vmatpush1.bf16.msra.mxu0 %v1232
    %1881 = vmatprep.subr.bf16.mxu0 %v1229
    %1882 = vmatpush1.bf16.msra.mxu0 %v1228
    %1883 = vmatprep.subr.bf16.mxu0 %v1225
    %1884 = vmatpush1.bf16.msra.mxu0 %v1224
    %1885 = vmatprep.subr.bf16.mxu0 %v1221
    %1886 = vmatpush1.bf16.msra.mxu0 %v1220
    %1887 = vmatprep.subr.bf16.mxu0 %v1281
    %1888 = vmatpush2.bf16.msra.mxu0 %v1280
    %1889 = vmatprep.subr.bf16.mxu0 %v1277
    %1890 = vmatpush2.bf16.msra.mxu0 %v1276
    %1891 = vmatprep.subr.bf16.mxu0 %v1273
    %1892 = vmatpush2.bf16.msra.mxu0 %v1272
    %1893 = vmatprep.subr.bf16.mxu0 %v1269
    %1894 = vmatpush2.bf16.msra.mxu0 %v1268
    %1895 = vmatprep.subr.bf16.mxu0 %v1265
    %1896 = vmatpush2.bf16.msra.mxu0 %v1264
    %1897 = vmatprep.subr.bf16.mxu0 %v1261
    %1898 = vmatpush2.bf16.msra.mxu0 %v1260
    %1899 = vmatprep.subr.bf16.mxu0 %v1257
    %1900 = vmatpush2.bf16.msra.mxu0 %v1256
    %1901 = vmatprep.subr.bf16.mxu0 %v1253
    %1902 = vmatpush2.bf16.msra.mxu0 %v1252
    %1903 = vmatprep.mubr.bf16.mxu0 %v103
    %1904 = vmatmul.mubr.bf16.gmra.mxu0 %v102
    %v1905 = vpop.f32.mrf.mxu0
    %v1906 = vadd.f32 %v1865, %v1905
    %v1907 = vpop.f32.mrf.mxu0
    %v1908 = vadd.f32 %v1867, %v1907
    %v1909 = vpop.f32.mrf.mxu0
    %v1910 = vpop.f32.mrf.mxu0
    %1911 = vdwg.mxu0
    %1912 = vmatprep.subr.bf16.mxu0 %v1313
    %1913 = vmatpush1.bf16.msra.mxu0 %v1312
    %1914 = vmatprep.subr.bf16.mxu0 %v1309
    %1915 = vmatpush1.bf16.msra.mxu0 %v1308
    %1916 = vmatprep.subr.bf16.mxu0 %v1305
    %1917 = vmatpush1.bf16.msra.mxu0 %v1304
    %1918 = vmatprep.subr.bf16.mxu0 %v1301
    %1919 = vmatpush1.bf16.msra.mxu0 %v1300
    %1920 = vmatprep.subr.bf16.mxu0 %v1297
    %1921 = vmatpush1.bf16.msra.mxu0 %v1296
    %1922 = vmatprep.subr.bf16.mxu0 %v1293
    %1923 = vmatpush1.bf16.msra.mxu0 %v1292
    %1924 = vmatprep.subr.bf16.mxu0 %v1289
    %1925 = vmatpush1.bf16.msra.mxu0 %v1288
    %1926 = vmatprep.subr.bf16.mxu0 %v1285
    %1927 = vmatpush1.bf16.msra.mxu0 %v1284
    %1928 = vmatprep.subr.bf16.mxu0 %v1345
    %1929 = vmatpush2.bf16.msra.mxu0 %v1344
    %1930 = vmatprep.subr.bf16.mxu0 %v1341
    %1931 = vmatpush2.bf16.msra.mxu0 %v1340
    %1932 = vmatprep.subr.bf16.mxu0 %v1337
    %1933 = vmatpush2.bf16.msra.mxu0 %v1336
    %1934 = vmatprep.subr.bf16.mxu0 %v1333
    %1935 = vmatpush2.bf16.msra.mxu0 %v1332
    %1936 = vmatprep.subr.bf16.mxu0 %v1329
    %1937 = vmatpush2.bf16.msra.mxu0 %v1328
    %1938 = vmatprep.subr.bf16.mxu0 %v1325
    %1939 = vmatpush2.bf16.msra.mxu0 %v1324
    %1940 = vmatprep.subr.bf16.mxu0 %v1321
    %1941 = vmatpush2.bf16.msra.mxu0 %v1320
    %1942 = vmatprep.subr.bf16.mxu0 %v1317
    %1943 = vmatpush2.bf16.msra.mxu0 %v1316
    %1944 = vmatprep.mubr.bf16.mxu0 %v105
    %1945 = vmatmul.mubr.bf16.gmra.mxu0 %v104
    %v1946 = vpop.f32.mrf.mxu0
    %v1947 = vadd.f32 %v1906, %v1946
    %v1948 = vpop.f32.mrf.mxu0
    %v1949 = vadd.f32 %v1908, %v1948
    %v1950 = vpop.f32.mrf.mxu0
    %v1951 = vpop.f32.mrf.mxu0
    %1952 = vdwg.mxu0
    %1953 = vmatprep.subr.bf16.mxu0 %v1377
    %1954 = vmatpush1.bf16.msra.mxu0 %v1376
    %1955 = vmatprep.subr.bf16.mxu0 %v1373
    %1956 = vmatpush1.bf16.msra.mxu0 %v1372
    %1957 = vmatprep.subr.bf16.mxu0 %v1369
    %1958 = vmatpush1.bf16.msra.mxu0 %v1368
    %1959 = vmatprep.subr.bf16.mxu0 %v1365
    %1960 = vmatpush1.bf16.msra.mxu0 %v1364
    %1961 = vmatprep.subr.bf16.mxu0 %v1361
    %1962 = vmatpush1.bf16.msra.mxu0 %v1360
    %1963 = vmatprep.subr.bf16.mxu0 %v1357
    %1964 = vmatpush1.bf16.msra.mxu0 %v1356
    %1965 = vmatprep.subr.bf16.mxu0 %v1353
    %1966 = vmatpush1.bf16.msra.mxu0 %v1352
    %1967 = vmatprep.subr.bf16.mxu0 %v1349
    %1968 = vmatpush1.bf16.msra.mxu0 %v1348
    %1969 = vmatprep.subr.bf16.mxu0 %v1409
    %1970 = vmatpush2.bf16.msra.mxu0 %v1408
    %1971 = vmatprep.subr.bf16.mxu0 %v1405
    %1972 = vmatpush2.bf16.msra.mxu0 %v1404
    %1973 = vmatprep.subr.bf16.mxu0 %v1401
    %1974 = vmatpush2.bf16.msra.mxu0 %v1400
    %1975 = vmatprep.subr.bf16.mxu0 %v1397
    %1976 = vmatpush2.bf16.msra.mxu0 %v1396
    %1977 = vmatprep.subr.bf16.mxu0 %v1393
    %1978 = vmatpush2.bf16.msra.mxu0 %v1392
    %1979 = vmatprep.subr.bf16.mxu0 %v1389
    %1980 = vmatpush2.bf16.msra.mxu0 %v1388
    %1981 = vmatprep.subr.bf16.mxu0 %v1385
    %1982 = vmatpush2.bf16.msra.mxu0 %v1384
    %1983 = vmatprep.subr.bf16.mxu0 %v1381
    %1984 = vmatpush2.bf16.msra.mxu0 %v1380
    %1985 = vmatprep.mubr.bf16.mxu0 %v107
    %1986 = vmatmul.mubr.bf16.gmra.mxu0 %v106
    %v1987 = vpop.f32.mrf.mxu0
    %v1988 = vadd.f32 %v1947, %v1987
    %v1989 = vpop.f32.mrf.mxu0
    %v1990 = vadd.f32 %v1949, %v1989
    %v1991 = vpop.f32.mrf.mxu0
    %v1992 = vpop.f32.mrf.mxu0
    %1993 = vdwg.mxu0
    %v1994 = vmax.f32 %v1824, 0.0
    %v1995 = vmax.f32 %v1826, 0.0
    %v1996 = vmax.f32 %v1988, 0.0
    %v1997 = vmax.f32 %v1990, 0.0
    %v1998 = vpack.c.bf16 %v1994, %v1994
    %v1999 = vpack.c.bf16 %v1995, %v1995
    %v2000 = vpack.c.bf16 %v1996, %v1996
    %v2001 = vpack.c.bf16 %v1997, %v1997
    %v2002 = vld [vmem:[%s3] sm:$0xff]
    %v2003 = vld [vmem:[%s3 + $0x8] sm:$0xff]
    %v2004 = vld [vmem:[%s3 + $0x10] sm:$0xff]
    %v2005 = vld [vmem:[%s3 + $0x18] sm:$0xff]
    %v2006 = vld [vmem:[%s3 + $0x20] sm:$0xff]
    %v2007 = vld [vmem:[%s3 + $0x28] sm:$0xff]
    %v2008 = vld [vmem:[%s3 + $0x30] sm:$0xff]
    %v2009 = vld [vmem:[%s3 + $0x38] sm:$0xff]
    %v2010 = vld [vmem:[%s3 + $0x40] sm:$0xff]
    %v2011 = vld [vmem:[%s3 + $0x48] sm:$0xff]
    %v2012 = vld [vmem:[%s3 + $0x50] sm:$0xff]
    %v2013 = vld [vmem:[%s3 + $0x58] sm:$0xff]
    %v2014 = vld [vmem:[%s3 + $0x60] sm:$0xff]
    %v2015 = vld [vmem:[%s3 + $0x68] sm:$0xff]
    %v2016 = vld [vmem:[%s3 + $0x70] sm:$0xff]
    %v2017 = vld [vmem:[%s3 + $0x78] sm:$0xff]
    %v2018 = vld [vmem:[%s3 + $0x80] sm:$0xff]
    %v2019 = vld [vmem:[%s3 + $0x88] sm:$0xff]
    %v2020 = vld [vmem:[%s3 + $0x90] sm:$0xff]
    %v2021 = vld [vmem:[%s3 + $0x98] sm:$0xff]
    %v2022 = vld [vmem:[%s3 + $0xa0] sm:$0xff]
    %v2023 = vld [vmem:[%s3 + $0xa8] sm:$0xff]
    %v2024 = vld [vmem:[%s3 + $0xb0] sm:$0xff]
    %v2025 = vld [vmem:[%s3 + $0xb8] sm:$0xff]
    %v2026 = vld [vmem:[%s3 + $0xc0] sm:$0xff]
    %v2027 = vld [vmem:[%s3 + $0xc8] sm:$0xff]
    %v2028 = vld [vmem:[%s3 + $0xd0] sm:$0xff]
    %v2029 = vld [vmem:[%s3 + $0xd8] sm:$0xff]
    %v2030 = vld [vmem:[%s3 + $0xe0] sm:$0xff]
    %v2031 = vld [vmem:[%s3 + $0xe8] sm:$0xff]
    %v2032 = vld [vmem:[%s3 + $0xf0] sm:$0xff]
    %v2033 = vld [vmem:[%s3 + $0xf8] sm:$0xff]
    %v2034 = vld [vmem:[%s3 + $0x100] sm:$0xff]
    %v2035 = vld [vmem:[%s3 + $0x108] sm:$0xff]
    %v2036 = vld [vmem:[%s3 + $0x110] sm:$0xff]
    %v2037 = vld [vmem:[%s3 + $0x118] sm:$0xff]
    %v2038 = vld [vmem:[%s3 + $0x120] sm:$0xff]
    %v2039 = vld [vmem:[%s3 + $0x128] sm:$0xff]
    %v2040 = vld [vmem:[%s3 + $0x130] sm:$0xff]
    %v2041 = vld [vmem:[%s3 + $0x138] sm:$0xff]
    %v2042 = vld [vmem:[%s3 + $0x140] sm:$0xff]
    %v2043 = vld [vmem:[%s3 + $0x148] sm:$0xff]
    %v2044 = vld [vmem:[%s3 + $0x150] sm:$0xff]
    %v2045 = vld [vmem:[%s3 + $0x158] sm:$0xff]
    %v2046 = vld [vmem:[%s3 + $0x160] sm:$0xff]
    %v2047 = vld [vmem:[%s3 + $0x168] sm:$0xff]
    %v2048 = vld [vmem:[%s3 + $0x170] sm:$0xff]
    %v2049 = vld [vmem:[%s3 + $0x178] sm:$0xff]
    %v2050 = vld [vmem:[%s3 + $0x180] sm:$0xff]
    %v2051 = vld [vmem:[%s3 + $0x188] sm:$0xff]
    %v2052 = vld [vmem:[%s3 + $0x190] sm:$0xff]
    %v2053 = vld [vmem:[%s3 + $0x198] sm:$0xff]
    %v2054 = vld [vmem:[%s3 + $0x1a0] sm:$0xff]
    %v2055 = vld [vmem:[%s3 + $0x1a8] sm:$0xff]
    %v2056 = vld [vmem:[%s3 + $0x1b0] sm:$0xff]
    %v2057 = vld [vmem:[%s3 + $0x1b8] sm:$0xff]
    %v2058 = vld [vmem:[%s3 + $0x1c0] sm:$0xff]
    %v2059 = vld [vmem:[%s3 + $0x1c8] sm:$0xff]
    %v2060 = vld [vmem:[%s3 + $0x1d0] sm:$0xff]
    %v2061 = vld [vmem:[%s3 + $0x1d8] sm:$0xff]
    %v2062 = vld [vmem:[%s3 + $0x1e0] sm:$0xff]
    %v2063 = vld [vmem:[%s3 + $0x1e8] sm:$0xff]
    %v2064 = vld [vmem:[%s3 + $0x1f0] sm:$0xff]
    %v2065 = vld [vmem:[%s3 + $0x1f8] sm:$0xff]
    %v2066 = vld [vmem:[%s4] sm:$0x3]
    %v2068 = vlaneseq
    %v2069 = vshrl.u32 %v2068, 7
    %v2070 = vsub.s32 0, %v2069
    %v2071 = vrot.slane %v2066, %v2070
    %v2072 = vlaneseq
    %v2073 = vshrl.u32 %v2072, 7
    %v2074 = vsub.s32 1, %v2073
    %v2075 = vrot.slane %v2066, %v2074
    %v2142 = vunpack.c.l.b16 %v2002
    %v2143 = vunpack.c.h.b16 %v2002
    %v2144 = vunpack.c.l.b16 %v2003
    %v2145 = vunpack.c.h.b16 %v2003
    %v2146 = vunpack.c.l.b16 %v2004
    %v2147 = vunpack.c.h.b16 %v2004
    %v2148 = vunpack.c.l.b16 %v2005
    %v2149 = vunpack.c.h.b16 %v2005
    %v2150 = vunpack.c.l.b16 %v2006
    %v2151 = vunpack.c.h.b16 %v2006
    %v2152 = vunpack.c.l.b16 %v2007
    %v2153 = vunpack.c.h.b16 %v2007
    %v2154 = vunpack.c.l.b16 %v2008
    %v2155 = vunpack.c.h.b16 %v2008
    %v2156 = vunpack.c.l.b16 %v2009
    %v2157 = vunpack.c.h.b16 %v2009
    %v2158 = vunpack.c.l.b16 %v2010
    %v2159 = vunpack.c.h.b16 %v2010
    %v2160 = vunpack.c.l.b16 %v2011
    %v2161 = vunpack.c.h.b16 %v2011
    %v2162 = vunpack.c.l.b16 %v2012
    %v2163 = vunpack.c.h.b16 %v2012
    %v2164 = vunpack.c.l.b16 %v2013
    %v2165 = vunpack.c.h.b16 %v2013
    %v2166 = vunpack.c.l.b16 %v2014
    %v2167 = vunpack.c.h.b16 %v2014
    %v2168 = vunpack.c.l.b16 %v2015
    %v2169 = vunpack.c.h.b16 %v2015
    %v2170 = vunpack.c.l.b16 %v2016
    %v2171 = vunpack.c.h.b16 %v2016
    %v2172 = vunpack.c.l.b16 %v2017
    %v2173 = vunpack.c.h.b16 %v2017
    %v2174 = vunpack.c.l.b16 %v2018
    %v2175 = vunpack.c.h.b16 %v2018
    %v2176 = vunpack.c.l.b16 %v2019
    %v2177 = vunpack.c.h.b16 %v2019
    %v2178 = vunpack.c.l.b16 %v2020
    %v2179 = vunpack.c.h.b16 %v2020
    %v2180 = vunpack.c.l.b16 %v2021
    %v2181 = vunpack.c.h.b16 %v2021
    %v2182 = vunpack.c.l.b16 %v2022
    %v2183 = vunpack.c.h.b16 %v2022
    %v2184 = vunpack.c.l.b16 %v2023
    %v2185 = vunpack.c.h.b16 %v2023
    %v2186 = vunpack.c.l.b16 %v2024
    %v2187 = vunpack.c.h.b16 %v2024
    %v2188 = vunpack.c.l.b16 %v2025
    %v2189 = vunpack.c.h.b16 %v2025
    %v2190 = vunpack.c.l.b16 %v2026
    %v2191 = vunpack.c.h.b16 %v2026
    %v2192 = vunpack.c.l.b16 %v2027
    %v2193 = vunpack.c.h.b16 %v2027
    %v2194 = vunpack.c.l.b16 %v2028
    %v2195 = vunpack.c.h.b16 %v2028
    %v2196 = vunpack.c.l.b16 %v2029
    %v2197 = vunpack.c.h.b16 %v2029
    %v2198 = vunpack.c.l.b16 %v2030
    %v2199 = vunpack.c.h.b16 %v2030
    %v2200 = vunpack.c.l.b16 %v2031
    %v2201 = vunpack.c.h.b16 %v2031
    %v2202 = vunpack.c.l.b16 %v2032
    %v2203 = vunpack.c.h.b16 %v2032
    %v2204 = vunpack.c.l.b16 %v2033
    %v2205 = vunpack.c.h.b16 %v2033
    %v2206 = vunpack.c.l.b16 %v2034
    %v2207 = vunpack.c.h.b16 %v2034
    %v2208 = vunpack.c.l.b16 %v2035
    %v2209 = vunpack.c.h.b16 %v2035
    %v2210 = vunpack.c.l.b16 %v2036
    %v2211 = vunpack.c.h.b16 %v2036
    %v2212 = vunpack.c.l.b16 %v2037
    %v2213 = vunpack.c.h.b16 %v2037
    %v2214 = vunpack.c.l.b16 %v2038
    %v2215 = vunpack.c.h.b16 %v2038
    %v2216 = vunpack.c.l.b16 %v2039
    %v2217 = vunpack.c.h.b16 %v2039
    %v2218 = vunpack.c.l.b16 %v2040
    %v2219 = vunpack.c.h.b16 %v2040
    %v2220 = vunpack.c.l.b16 %v2041
    %v2221 = vunpack.c.h.b16 %v2041
    %v2222 = vunpack.c.l.b16 %v2042
    %v2223 = vunpack.c.h.b16 %v2042
    %v2224 = vunpack.c.l.b16 %v2043
    %v2225 = vunpack.c.h.b16 %v2043
    %v2226 = vunpack.c.l.b16 %v2044
    %v2227 = vunpack.c.h.b16 %v2044
    %v2228 = vunpack.c.l.b16 %v2045
    %v2229 = vunpack.c.h.b16 %v2045
    %v2230 = vunpack.c.l.b16 %v2046
    %v2231 = vunpack.c.h.b16 %v2046
    %v2232 = vunpack.c.l.b16 %v2047
    %v2233 = vunpack.c.h.b16 %v2047
    %v2234 = vunpack.c.l.b16 %v2048
    %v2235 = vunpack.c.h.b16 %v2048
    %v2236 = vunpack.c.l.b16 %v2049
    %v2237 = vunpack.c.h.b16 %v2049
    %v2238 = vunpack.c.l.b16 %v2050
    %v2239 = vunpack.c.h.b16 %v2050
    %v2240 = vunpack.c.l.b16 %v2051
    %v2241 = vunpack.c.h.b16 %v2051
    %v2242 = vunpack.c.l.b16 %v2052
    %v2243 = vunpack.c.h.b16 %v2052
    %v2244 = vunpack.c.l.b16 %v2053
    %v2245 = vunpack.c.h.b16 %v2053
    %v2246 = vunpack.c.l.b16 %v2054
    %v2247 = vunpack.c.h.b16 %v2054
    %v2248 = vunpack.c.l.b16 %v2055
    %v2249 = vunpack.c.h.b16 %v2055
    %v2250 = vunpack.c.l.b16 %v2056
    %v2251 = vunpack.c.h.b16 %v2056
    %v2252 = vunpack.c.l.b16 %v2057
    %v2253 = vunpack.c.h.b16 %v2057
    %v2254 = vunpack.c.l.b16 %v2058
    %v2255 = vunpack.c.h.b16 %v2058
    %v2256 = vunpack.c.l.b16 %v2059
    %v2257 = vunpack.c.h.b16 %v2059
    %v2258 = vunpack.c.l.b16 %v2060
    %v2259 = vunpack.c.h.b16 %v2060
    %v2260 = vunpack.c.l.b16 %v2061
    %v2261 = vunpack.c.h.b16 %v2061
    %v2262 = vunpack.c.l.b16 %v2062
    %v2263 = vunpack.c.h.b16 %v2062
    %v2264 = vunpack.c.l.b16 %v2063
    %v2265 = vunpack.c.h.b16 %v2063
    %v2266 = vunpack.c.l.b16 %v2064
    %v2267 = vunpack.c.h.b16 %v2064
    %v2268 = vunpack.c.l.b16 %v2065
    %v2269 = vunpack.c.h.b16 %v2065
    %v2270 = vpack.c.b16 %v2144, %v2142
    %v2271 = vpack.c.b16 %v2145, %v2143
    %v2272 = vpack.c.b16 %v2148, %v2146
    %v2273 = vpack.c.b16 %v2149, %v2147
    %v2274 = vpack.c.b16 %v2152, %v2150
    %v2275 = vpack.c.b16 %v2153, %v2151
    %v2276 = vpack.c.b16 %v2156, %v2154
    %v2277 = vpack.c.b16 %v2157, %v2155
    %v2278 = vpack.c.b16 %v2160, %v2158
    %v2279 = vpack.c.b16 %v2161, %v2159
    %v2280 = vpack.c.b16 %v2164, %v2162
    %v2281 = vpack.c.b16 %v2165, %v2163
    %v2282 = vpack.c.b16 %v2168, %v2166
    %v2283 = vpack.c.b16 %v2169, %v2167
    %v2284 = vpack.c.b16 %v2172, %v2170
    %v2285 = vpack.c.b16 %v2173, %v2171
    %v2286 = vpack.c.b16 %v2176, %v2174
    %v2287 = vpack.c.b16 %v2177, %v2175
    %v2288 = vpack.c.b16 %v2180, %v2178
    %v2289 = vpack.c.b16 %v2181, %v2179
    %v2290 = vpack.c.b16 %v2184, %v2182
    %v2291 = vpack.c.b16 %v2185, %v2183
    %v2292 = vpack.c.b16 %v2188, %v2186
    %v2293 = vpack.c.b16 %v2189, %v2187
    %v2294 = vpack.c.b16 %v2192, %v2190
    %v2295 = vpack.c.b16 %v2193, %v2191
    %v2296 = vpack.c.b16 %v2196, %v2194
    %v2297 = vpack.c.b16 %v2197, %v2195
    %v2298 = vpack.c.b16 %v2200, %v2198
    %v2299 = vpack.c.b16 %v2201, %v2199
    %v2300 = vpack.c.b16 %v2204, %v2202
    %v2301 = vpack.c.b16 %v2205, %v2203
    %v2302 = vpack.c.b16 %v2208, %v2206
    %v2303 = vpack.c.b16 %v2209, %v2207
    %v2304 = vpack.c.b16 %v2212, %v2210
    %v2305 = vpack.c.b16 %v2213, %v2211
    %v2306 = vpack.c.b16 %v2216, %v2214
    %v2307 = vpack.c.b16 %v2217, %v2215
    %v2308 = vpack.c.b16 %v2220, %v2218
    %v2309 = vpack.c.b16 %v2221, %v2219
    %v2310 = vpack.c.b16 %v2224, %v2222
    %v2311 = vpack.c.b16 %v2225, %v2223
    %v2312 = vpack.c.b16 %v2228, %v2226
    %v2313 = vpack.c.b16 %v2229, %v2227
    %v2314 = vpack.c.b16 %v2232, %v2230
    %v2315 = vpack.c.b16 %v2233, %v2231
    %v2316 = vpack.c.b16 %v2236, %v2234
    %v2317 = vpack.c.b16 %v2237, %v2235
    %v2318 = vpack.c.b16 %v2240, %v2238
    %v2319 = vpack.c.b16 %v2241, %v2239
    %v2320 = vpack.c.b16 %v2244, %v2242
    %v2321 = vpack.c.b16 %v2245, %v2243
    %v2322 = vpack.c.b16 %v2248, %v2246
    %v2323 = vpack.c.b16 %v2249, %v2247
    %v2324 = vpack.c.b16 %v2252, %v2250
    %v2325 = vpack.c.b16 %v2253, %v2251
    %v2326 = vpack.c.b16 %v2256, %v2254
    %v2327 = vpack.c.b16 %v2257, %v2255
    %v2328 = vpack.c.b16 %v2260, %v2258
    %v2329 = vpack.c.b16 %v2261, %v2259
    %v2330 = vpack.c.b16 %v2264, %v2262
    %v2331 = vpack.c.b16 %v2265, %v2263
    %v2332 = vpack.c.b16 %v2268, %v2266
    %v2333 = vpack.c.b16 %v2269, %v2267
    %2398 = vmatprep.subr.bf16.mxu0 %v2285
    %2399 = vmatpush1.bf16.msra.mxu0 %v2284
    %2400 = vmatprep.subr.bf16.mxu0 %v2283
    %2401 = vmatpush1.bf16.msra.mxu0 %v2282
    %2402 = vmatprep.subr.bf16.mxu0 %v2281
    %2403 = vmatpush1.bf16.msra.mxu0 %v2280
    %2404 = vmatprep.subr.bf16.mxu0 %v2279
    %2405 = vmatpush1.bf16.msra.mxu0 %v2278
    %2406 = vmatprep.subr.bf16.mxu0 %v2277
    %2407 = vmatpush1.bf16.msra.mxu0 %v2276
    %2408 = vmatprep.subr.bf16.mxu0 %v2275
    %2409 = vmatpush1.bf16.msra.mxu0 %v2274
    %2410 = vmatprep.subr.bf16.mxu0 %v2273
    %2411 = vmatpush1.bf16.msra.mxu0 %v2272
    %2412 = vmatprep.subr.bf16.mxu0 %v2271
    %2413 = vmatpush1.bf16.msra.mxu0 %v2270
    %2414 = vmatprep.subr.bf16.mxu0 %v2301
    %2415 = vmatpush2.bf16.msra.mxu0 %v2300
    %2416 = vmatprep.subr.bf16.mxu0 %v2299
    %2417 = vmatpush2.bf16.msra.mxu0 %v2298
    %2418 = vmatprep.subr.bf16.mxu0 %v2297
    %2419 = vmatpush2.bf16.msra.mxu0 %v2296
    %2420 = vmatprep.subr.bf16.mxu0 %v2295
    %2421 = vmatpush2.bf16.msra.mxu0 %v2294
    %2422 = vmatprep.subr.bf16.mxu0 %v2293
    %2423 = vmatpush2.bf16.msra.mxu0 %v2292
    %2424 = vmatprep.subr.bf16.mxu0 %v2291
    %2425 = vmatpush2.bf16.msra.mxu0 %v2290
    %2426 = vmatprep.subr.bf16.mxu0 %v2289
    %2427 = vmatpush2.bf16.msra.mxu0 %v2288
    %2428 = vmatprep.subr.bf16.mxu0 %v2287
    %2429 = vmatpush2.bf16.msra.mxu0 %v2286
    %2430 = vmatprep.mubr.bf16.mxu0 %v1999
    %2431 = vmatmul.mubr.bf16.gmra.mxu0 %v1998
    %v2432 = vpop.f32.mrf.mxu0
    %v2433 = vadd.f32 %v2071, %v2432
    %v2434 = vpop.f32.mrf.mxu0
    %v2435 = vadd.f32 %v2075, %v2434
    %v2436 = vpop.f32.mrf.mxu0
    %v2437 = vpop.f32.mrf.mxu0
    %2438 = vdwg.mxu0
    %2439 = vmatprep.subr.bf16.mxu0 %v2317
    %2440 = vmatpush1.bf16.msra.mxu0 %v2316
    %2441 = vmatprep.subr.bf16.mxu0 %v2315
    %2442 = vmatpush1.bf16.msra.mxu0 %v2314
    %2443 = vmatprep.subr.bf16.mxu0 %v2313
    %2444 = vmatpush1.bf16.msra.mxu0 %v2312
    %2445 = vmatprep.subr.bf16.mxu0 %v2311
    %2446 = vmatpush1.bf16.msra.mxu0 %v2310
    %2447 = vmatprep.subr.bf16.mxu0 %v2309
    %2448 = vmatpush1.bf16.msra.mxu0 %v2308
    %2449 = vmatprep.subr.bf16.mxu0 %v2307
    %2450 = vmatpush1.bf16.msra.mxu0 %v2306
    %2451 = vmatprep.subr.bf16.mxu0 %v2305
    %2452 = vmatpush1.bf16.msra.mxu0 %v2304
    %2453 = vmatprep.subr.bf16.mxu0 %v2303
    %2454 = vmatpush1.bf16.msra.mxu0 %v2302
    %2455 = vmatprep.subr.bf16.mxu0 %v2333
    %2456 = vmatpush2.bf16.msra.mxu0 %v2332
    %2457 = vmatprep.subr.bf16.mxu0 %v2331
    %2458 = vmatpush2.bf16.msra.mxu0 %v2330
    %2459 = vmatprep.subr.bf16.mxu0 %v2329
    %2460 = vmatpush2.bf16.msra.mxu0 %v2328
    %2461 = vmatprep.subr.bf16.mxu0 %v2327
    %2462 = vmatpush2.bf16.msra.mxu0 %v2326
    %2463 = vmatprep.subr.bf16.mxu0 %v2325
    %2464 = vmatpush2.bf16.msra.mxu0 %v2324
    %2465 = vmatprep.subr.bf16.mxu0 %v2323
    %2466 = vmatpush2.bf16.msra.mxu0 %v2322
    %2467 = vmatprep.subr.bf16.mxu0 %v2321
    %2468 = vmatpush2.bf16.msra.mxu0 %v2320
    %2469 = vmatprep.subr.bf16.mxu0 %v2319
    %2470 = vmatpush2.bf16.msra.mxu0 %v2318
    %2471 = vmatprep.mubr.bf16.mxu0 %v2001
    %2472 = vmatmul.mubr.bf16.gmra.mxu0 %v2000
    %v2473 = vpop.f32.mrf.mxu0
    %v2474 = vadd.f32 %v2433, %v2473
    %v2475 = vpop.f32.mrf.mxu0
    %v2476 = vadd.f32 %v2435, %v2475
    %v2477 = vpop.f32.mrf.mxu0
    %v2478 = vpop.f32.mrf.mxu0
    %2479 = vdwg.mxu0
    %v2480 = vmax.f32 %v2474, 0.0
    %v2481 = vmax.f32 %v2476, 0.0
    %v2482 = vpack.c.bf16 %v2480, %v2480
    %v2483 = vpack.c.bf16 %v2481, %v2481
    %v2484 = vld [vmem:[#allocation4] sm:$0xff]
    %v2485 = vld [vmem:[#allocation4 + $0x8] sm:$0xff]
    %v2486 = vld [vmem:[#allocation4 + $0x10] sm:$0xff]
    %v2487 = vld [vmem:[#allocation4 + $0x18] sm:$0xff]
    %v2488 = vld [vmem:[#allocation4 + $0x20] sm:$0xff]
    %v2489 = vld [vmem:[#allocation4 + $0x28] sm:$0xff]
    %v2490 = vld [vmem:[#allocation4 + $0x30] sm:$0xff]
    %v2491 = vld [vmem:[#allocation4 + $0x38] sm:$0xff]
    %v2492 = vld [vmem:[#allocation4 + $0x40] sm:$0xff]
    %v2493 = vld [vmem:[#allocation4 + $0x48] sm:$0xff]
    %v2494 = vld [vmem:[#allocation4 + $0x50] sm:$0xff]
    %v2495 = vld [vmem:[#allocation4 + $0x58] sm:$0xff]
    %v2496 = vld [vmem:[#allocation4 + $0x60] sm:$0xff]
    %v2497 = vld [vmem:[#allocation4 + $0x68] sm:$0xff]
    %v2498 = vld [vmem:[#allocation4 + $0x70] sm:$0xff]
    %v2499 = vld [vmem:[#allocation4 + $0x78] sm:$0xff]
    %v2500 = vld [vmem:[#allocation4 + $0x80] sm:$0xff]
    %v2501 = vld [vmem:[#allocation4 + $0x88] sm:$0xff]
    %v2502 = vld [vmem:[#allocation4 + $0x90] sm:$0xff]
    %v2503 = vld [vmem:[#allocation4 + $0x98] sm:$0xff]
    %v2504 = vld [vmem:[#allocation4 + $0xa0] sm:$0xff]
    %v2505 = vld [vmem:[#allocation4 + $0xa8] sm:$0xff]
    %v2506 = vld [vmem:[#allocation4 + $0xb0] sm:$0xff]
    %v2507 = vld [vmem:[#allocation4 + $0xb8] sm:$0xff]
    %v2508 = vld [vmem:[#allocation4 + $0xc0] sm:$0xff]
    %v2509 = vld [vmem:[#allocation4 + $0xc8] sm:$0xff]
    %v2510 = vld [vmem:[#allocation4 + $0xd0] sm:$0xff]
    %v2511 = vld [vmem:[#allocation4 + $0xd8] sm:$0xff]
    %v2512 = vld [vmem:[#allocation4 + $0xe0] sm:$0xff]
    %v2513 = vld [vmem:[#allocation4 + $0xe8] sm:$0xff]
    %v2514 = vld [vmem:[#allocation4 + $0xf0] sm:$0xff]
    %v2515 = vld [vmem:[#allocation4 + $0xf8] sm:$0xff]
    %v2516 = vld [vmem:[%s6] sm:$0x3]
    %v2518 = vlaneseq
    %v2519 = vshrl.u32 %v2518, 7
    %v2520 = vsub.s32 0, %v2519
    %v2521 = vrot.slane %v2516, %v2520
    %v2522 = vlaneseq
    %v2523 = vshrl.u32 %v2522, 7
    %v2524 = vsub.s32 1, %v2523
    %v2525 = vrot.slane %v2516, %v2524
    %v2560 = vunpack.c.l.b16 %v2484
    %v2561 = vunpack.c.h.b16 %v2484
    %v2562 = vunpack.c.l.b16 %v2485
    %v2563 = vunpack.c.h.b16 %v2485
    %v2564 = vunpack.c.l.b16 %v2486
    %v2565 = vunpack.c.h.b16 %v2486
    %v2566 = vunpack.c.l.b16 %v2487
    %v2567 = vunpack.c.h.b16 %v2487
    %v2568 = vunpack.c.l.b16 %v2488
    %v2569 = vunpack.c.h.b16 %v2488
    %v2570 = vunpack.c.l.b16 %v2489
    %v2571 = vunpack.c.h.b16 %v2489
    %v2572 = vunpack.c.l.b16 %v2490
    %v2573 = vunpack.c.h.b16 %v2490
    %v2574 = vunpack.c.l.b16 %v2491
    %v2575 = vunpack.c.h.b16 %v2491
    %v2576 = vunpack.c.l.b16 %v2492
    %v2577 = vunpack.c.h.b16 %v2492
    %v2578 = vunpack.c.l.b16 %v2493
    %v2579 = vunpack.c.h.b16 %v2493
    %v2580 = vunpack.c.l.b16 %v2494
    %v2581 = vunpack.c.h.b16 %v2494
    %v2582 = vunpack.c.l.b16 %v2495
    %v2583 = vunpack.c.h.b16 %v2495
    %v2584 = vunpack.c.l.b16 %v2496
    %v2585 = vunpack.c.h.b16 %v2496
    %v2586 = vunpack.c.l.b16 %v2497
    %v2587 = vunpack.c.h.b16 %v2497
    %v2588 = vunpack.c.l.b16 %v2498
    %v2589 = vunpack.c.h.b16 %v2498
    %v2590 = vunpack.c.l.b16 %v2499
    %v2591 = vunpack.c.h.b16 %v2499
    %v2592 = vunpack.c.l.b16 %v2500
    %v2593 = vunpack.c.h.b16 %v2500
    %v2594 = vunpack.c.l.b16 %v2501
    %v2595 = vunpack.c.h.b16 %v2501
    %v2596 = vunpack.c.l.b16 %v2502
    %v2597 = vunpack.c.h.b16 %v2502
    %v2598 = vunpack.c.l.b16 %v2503
    %v2599 = vunpack.c.h.b16 %v2503
    %v2600 = vunpack.c.l.b16 %v2504
    %v2601 = vunpack.c.h.b16 %v2504
    %v2602 = vunpack.c.l.b16 %v2505
    %v2603 = vunpack.c.h.b16 %v2505
    %v2604 = vunpack.c.l.b16 %v2506
    %v2605 = vunpack.c.h.b16 %v2506
    %v2606 = vunpack.c.l.b16 %v2507
    %v2607 = vunpack.c.h.b16 %v2507
    %v2608 = vunpack.c.l.b16 %v2508
    %v2609 = vunpack.c.h.b16 %v2508
    %v2610 = vunpack.c.l.b16 %v2509
    %v2611 = vunpack.c.h.b16 %v2509
    %v2612 = vunpack.c.l.b16 %v2510
    %v2613 = vunpack.c.h.b16 %v2510
    %v2614 = vunpack.c.l.b16 %v2511
    %v2615 = vunpack.c.h.b16 %v2511
    %v2616 = vunpack.c.l.b16 %v2512
    %v2617 = vunpack.c.h.b16 %v2512
    %v2618 = vunpack.c.l.b16 %v2513
    %v2619 = vunpack.c.h.b16 %v2513
    %v2620 = vunpack.c.l.b16 %v2514
    %v2621 = vunpack.c.h.b16 %v2514
    %v2622 = vunpack.c.l.b16 %v2515
    %v2623 = vunpack.c.h.b16 %v2515
    %v2624 = vpack.c.b16 %v2562, %v2560
    %v2625 = vpack.c.b16 %v2563, %v2561
    %v2626 = vpack.c.b16 %v2566, %v2564
    %v2627 = vpack.c.b16 %v2567, %v2565
    %v2628 = vpack.c.b16 %v2570, %v2568
    %v2629 = vpack.c.b16 %v2571, %v2569
    %v2630 = vpack.c.b16 %v2574, %v2572
    %v2631 = vpack.c.b16 %v2575, %v2573
    %v2632 = vpack.c.b16 %v2578, %v2576
    %v2633 = vpack.c.b16 %v2579, %v2577
    %v2634 = vpack.c.b16 %v2582, %v2580
    %v2635 = vpack.c.b16 %v2583, %v2581
    %v2636 = vpack.c.b16 %v2586, %v2584
    %v2637 = vpack.c.b16 %v2587, %v2585
    %v2638 = vpack.c.b16 %v2590, %v2588
    %v2639 = vpack.c.b16 %v2591, %v2589
    %v2640 = vpack.c.b16 %v2594, %v2592
    %v2641 = vpack.c.b16 %v2595, %v2593
    %v2642 = vpack.c.b16 %v2598, %v2596
    %v2643 = vpack.c.b16 %v2599, %v2597
    %v2644 = vpack.c.b16 %v2602, %v2600
    %v2645 = vpack.c.b16 %v2603, %v2601
    %v2646 = vpack.c.b16 %v2606, %v2604
    %v2647 = vpack.c.b16 %v2607, %v2605
    %v2648 = vpack.c.b16 %v2610, %v2608
    %v2649 = vpack.c.b16 %v2611, %v2609
    %v2650 = vpack.c.b16 %v2614, %v2612
    %v2651 = vpack.c.b16 %v2615, %v2613
    %v2652 = vpack.c.b16 %v2618, %v2616
    %v2653 = vpack.c.b16 %v2619, %v2617
    %v2654 = vpack.c.b16 %v2622, %v2620
    %v2655 = vpack.c.b16 %v2623, %v2621
    %2688 = vmatprep.subr.bf16.mxu0 %v2639
    %2689 = vmatpush1.bf16.msra.mxu0 %v2638
    %2690 = vmatprep.subr.bf16.mxu0 %v2637
    %2691 = vmatpush1.bf16.msra.mxu0 %v2636
    %2692 = vmatprep.subr.bf16.mxu0 %v2635
    %2693 = vmatpush1.bf16.msra.mxu0 %v2634
    %2694 = vmatprep.subr.bf16.mxu0 %v2633
    %2695 = vmatpush1.bf16.msra.mxu0 %v2632
    %2696 = vmatprep.subr.bf16.mxu0 %v2631
    %2697 = vmatpush1.bf16.msra.mxu0 %v2630
    %2698 = vmatprep.subr.bf16.mxu0 %v2629
    %2699 = vmatpush1.bf16.msra.mxu0 %v2628
    %2700 = vmatprep.subr.bf16.mxu0 %v2627
    %2701 = vmatpush1.bf16.msra.mxu0 %v2626
    %2702 = vmatprep.subr.bf16.mxu0 %v2625
    %2703 = vmatpush1.bf16.msra.mxu0 %v2624
    %2704 = vmatprep.subr.bf16.mxu0 %v2655
    %2705 = vmatpush2.bf16.msra.mxu0 %v2654
    %2706 = vmatprep.subr.bf16.mxu0 %v2653
    %2707 = vmatpush2.bf16.msra.mxu0 %v2652
    %2708 = vmatprep.subr.bf16.mxu0 %v2651
    %2709 = vmatpush2.bf16.msra.mxu0 %v2650
    %2710 = vmatprep.subr.bf16.mxu0 %v2649
    %2711 = vmatpush2.bf16.msra.mxu0 %v2648
    %2712 = vmatprep.subr.bf16.mxu0 %v2647
    %2713 = vmatpush2.bf16.msra.mxu0 %v2646
    %2714 = vmatprep.subr.bf16.mxu0 %v2645
    %2715 = vmatpush2.bf16.msra.mxu0 %v2644
    %2716 = vmatprep.subr.bf16.mxu0 %v2643
    %2717 = vmatpush2.bf16.msra.mxu0 %v2642
    %2718 = vmatprep.subr.bf16.mxu0 %v2641
    %2719 = vmatpush2.bf16.msra.mxu0 %v2640
    %2720 = vmatprep.mubr.bf16.mxu0 %v2483
    %2721 = vmatmul.mubr.bf16.gmra.mxu0 %v2482
    %v2722 = vpop.f32.mrf.mxu0
    %v2723 = vadd.f32 %v2521, %v2722
    %v2724 = vpop.f32.mrf.mxu0
    %v2725 = vadd.f32 %v2525, %v2724
    %v2726 = vpop.f32.mrf.mxu0
    %v2727 = vpop.f32.mrf.mxu0
    %2728 = vdwg.mxu0
    %v2731 = vcombine.low %v2723, %v2725
    %v2733 = vunpack.c.l.s4 1983009808
    %v2734 = vunpack.c.0.s8 %v2733
    %v2735 = vlaneseq
    %v2736 = vshrl.u32 %v2735, 7
    %v2737 = vsub.s32 %v2734, %v2736
    %v2738 = vrot.slane %v2731, %v2737
    %2740 = vst [vmem:[%s7] sm:$0xf] %v2738
    // Predicated region
    $region38: #{stnkd_forward.3} parent=1 // pred_check
      _
    $region39: #{stnkd_forward.3} parent=1 // pred_check_branch
      %2742 = sbr.rel (0) target = $region41
    $region40: #{stnkd_forward.3} parent=1 // pred_region
      _
    $region41: #{stnkd_forward.3} parent=1 // pred_fallthru
      _
    // Predicated region
    $region42: #{stnkd_forward.3} parent=1 // pred_check
      _
    $region43: #{stnkd_forward.3} parent=1 // pred_check_branch
      %2744 = sbr.rel (0) target = $region45
    $region44: #{stnkd_forward.3} parent=1 // pred_region
      _
    $region45: #{stnkd_forward.3} parent=1 // pred_fallthru
      _
    %2745 = vsyncpa [#allocation3], 1
    %2746 = vsyncpa [#allocation5], 1

</llo_original>
